<compile_context>
chip_gen: v7x
topology: tpu7x:2x2x1
jax: 0.10.0
libtpu: 0.0.40
codegen_flags: <defaults>
</compile_context>

<pallas_src>
import math
import functools

import jax
import jax.numpy as jnp
from jax.experimental import pallas as pl
from jax.experimental.pallas import tpu as pltpu

D_TRUE = 200   # true feature / per-head width in the PyTorch module
D_PAD = 256    # lane-padded width (multiple of 128)


def _masked_layernorm(x, gamma, beta, valid, eps=1e-5):
    """LayerNorm over the first D_TRUE lanes of x (padded lanes of x are 0)."""
    inv_n = 1.0 / float(D_TRUE)
    mu = jnp.sum(x, axis=-1, keepdims=True) * inv_n
    diff = (x - mu) * valid                       # zero out padded lanes
    var = jnp.sum(diff * diff, axis=-1, keepdims=True) * inv_n
    return diff * jax.lax.rsqrt(var + eps) * gamma + beta


def decode_layer_kernel(head, batch, seq,
                        y_ref, mask_ref,
                        wproj_ref, bproj_ref, wfuse_ref, wffn_ref, vec_ref,
                        o_ref, att_ref):
    """Full DecodeLayer forward; whole batch processed in one invocation.

    y_ref   : (B*S, 256) f32, lanes 200..255 are zero.
    att_ref : VMEM scratch (B*S, 256) f32 for the fused attention output.
    """
    y = y_ref[...]                          # (B*S, 256)
    mask_add = mask_ref[...]                # (S, S) additive mask (0 / -1e30)

    # Fused q/k/v projection for all heads, batch folded into M:
    # (B*S, 256) @ (256, 3*head*256), bf16 operands, f32 accumulation.
    proj = (jnp.dot(y.astype(jnp.bfloat16), wproj_ref[...],
                    preferred_element_type=jnp.float32) + bproj_ref[0])

    scale = 1.0 / math.sqrt(float(D_TRUE))

    # Attention + fuse projection, accumulated per head (no concatenate).
    for b in range(batch):
        r0 = b * seq
        acc = jnp.zeros((seq, D_PAD), jnp.float32)
        for h in range(head):
            q_off = (0 * head + h) * D_PAD
            k_off = (1 * head + h) * D_PAD
            v_off = (2 * head + h) * D_PAD
            qh = proj[r0:r0 + seq, q_off:q_off + D_PAD].astype(jnp.bfloat16)
            kh = proj[r0:r0 + seq, k_off:k_off + D_PAD].astype(jnp.bfloat16)
            vh = proj[r0:r0 + seq, v_off:v_off + D_PAD].astype(jnp.bfloat16)

            # scores: contract last dims (no explicit kh.T materialization)
            d = jax.lax.dot_general(
                qh, kh,
                dimension_numbers=(((1,), (1,)), ((), ())),
                preferred_element_type=jnp.float32) * scale
            d = d + mask_add
            d = d - jnp.max(d, axis=-1, keepdims=True)
            e = jnp.exp(d)
            p = e * pl.reciprocal(jnp.sum(e, axis=-1, keepdims=True),
                                  approx=True)          # softmax over keys
            ctx = jnp.dot(p.astype(jnp.bfloat16), vh,
                          preferred_element_type=jnp.float32)
            # fuse projection for this head's row block of w_fuse
            acc = acc + jnp.dot(ctx.astype(jnp.bfloat16),
                                wfuse_ref[h * D_PAD:(h + 1) * D_PAD, :],
                                preferred_element_type=jnp.float32)
        att_ref[r0:r0 + seq, :] = acc

    att = att_ref[...] + vec_ref[0]                      # + fuse bias

    # lane-validity mask for masked LayerNorm (true 200 features)
    lane = jax.lax.broadcasted_iota(jnp.int32, (1, D_PAD), 1)
    valid = (lane < D_TRUE).astype(jnp.float32)

    # residual + LayerNorm 0
    x = _masked_layernorm(att + y, vec_ref[3], vec_ref[4], valid)

    # feed-forward: Linear(200,200) -> ReLU -> Linear(200,200)
    h1 = jnp.maximum(
        jnp.dot(x.astype(jnp.bfloat16), wffn_ref[0],
                preferred_element_type=jnp.float32) + vec_ref[1], 0.0)
    h2 = (jnp.dot(h1.astype(jnp.bfloat16), wffn_ref[1],
                  preferred_element_type=jnp.float32) + vec_ref[2])

    # residual + LayerNorm 1
    o_ref[...] = _masked_layernorm(h2 + x, vec_ref[5], vec_ref[6], valid)


def pack_params(params, head):
    """Pack the 16 PyTorch-style parameters into 5 lane-padded arrays.

    Weight matrices are stored in bf16 (halves HBM weight traffic, native MXU
    rate); biases / LN vectors stay f32.  Zero padding stays exactly zero
    under the bf16 cast, which the masked LayerNorm relies on.
    """
    (wq, bq, wk, bk, wv, bv, wf, bf, w1, b1, w2, b2, g0, be0, g1, be1) = params

    def pad_w(w):  # [200, 200] -> [256, 256]
        return jnp.pad(w, ((0, D_PAD - w.shape[0]), (0, D_PAD - w.shape[1])))

    def per_head_cols(w):  # [200, 200*head] -> [[256,256]] * head
        return [pad_w(w[:, h * D_TRUE:(h + 1) * D_TRUE]) for h in range(head)]

    # q/k/v weights fused into one [256, 3*head*256] matrix (bf16)
    w_proj = jnp.concatenate(
        per_head_cols(wq) + per_head_cols(wk) + per_head_cols(wv),
        axis=1).astype(jnp.bfloat16)

    def per_head_bias(b):  # [200*head] -> [1, head*256]
        b = b.reshape(head, D_TRUE)
        return jnp.pad(b, ((0, 0), (0, D_PAD - D_TRUE))).reshape(1, head * D_PAD)

    b_proj = jnp.concatenate(
        [per_head_bias(bq), per_head_bias(bk), per_head_bias(bv)], axis=1)

    # fuse weight: [200*head, 200] -> [head*256, 256], per-head row blocks (bf16)
    w_fuse = jnp.concatenate(
        [pad_w(wf[h * D_TRUE:(h + 1) * D_TRUE, :]) for h in range(head)],
        axis=0).astype(jnp.bfloat16)

    # FFN weights stacked (bf16)
    w_ffn = jnp.stack([pad_w(w1), pad_w(w2)], axis=0).astype(jnp.bfloat16)

    # small vectors packed (f32): rows = bf, b1, b2, g0, be0, g1, be1, (pad)
    def pad_vec(v):
        return jnp.pad(v.reshape(-1), (0, D_PAD - D_TRUE))

    vec_pack = jnp.stack(
        [pad_vec(v) for v in (bf, b1, b2, g0, be0, g1, be1)]
        + [jnp.zeros((D_PAD,), jnp.float32)], axis=0)          # [8, 256]

    return w_proj, b_proj, w_fuse, w_ffn, vec_pack


@functools.partial(jax.jit, static_argnames=("head",))
def decode_layer_padded(y, mask_bool, packed, head):
    """Returns the lane-padded (B, S, 256) output (lanes 200..255 are zero).

    Keeping the padded layout lets a following layer consume the result
    directly without an extra slice + re-pad HBM round trip.
    """
    B, S, D_in = y.shape
    w_proj, b_proj, w_fuse, w_ffn, vec_pack = packed

    y_pad = jnp.pad(y, ((0, 0), (0, 0), (0, D_PAD - D_in)))
    y2d = y_pad.reshape(B * S, D_PAD)            # free row-major reshape
    mask_add = jnp.where(mask_bool, jnp.float32(-1e30), jnp.float32(0.0))

    kernel = functools.partial(decode_layer_kernel, head, B, S)
    out2d = pl.pallas_call(
        kernel,
        out_shape=jax.ShapeDtypeStruct((B * S, D_PAD), jnp.float32),
        grid=(1,),
        in_specs=[
            pl.BlockSpec((B * S, D_PAD), lambda i: (0, 0)),
            pl.BlockSpec(mask_add.shape, lambda i: (0, 0)),
            pl.BlockSpec(w_proj.shape, lambda i: (0, 0)),
            pl.BlockSpec(b_proj.shape, lambda i: (0, 0)),
            pl.BlockSpec(w_fuse.shape, lambda i: (0, 0)),
            pl.BlockSpec(w_ffn.shape, lambda i: (0, 0, 0)),
            pl.BlockSpec(vec_pack.shape, lambda i: (0, 0)),
        ],
        out_specs=pl.BlockSpec((B * S, D_PAD), lambda i: (0, 0)),
        scratch_shapes=[pltpu.VMEM((B * S, D_PAD), jnp.float32)],
        compiler_params=pltpu.CompilerParams(
            dimension_semantics=("arbitrary",)),
    )(y2d, mask_add, w_proj, b_proj, w_fuse, w_ffn, vec_pack)
    return out2d.reshape(B, S, D_PAD)


def decode_layer(y, mask_bool, packed, head):
    """Module-parity wrapper: slices back to the true embed width (200)."""
    return decode_layer_padded(y, mask_bool, packed, head)[:, :, :D_TRUE]


def init_layer_params(key, embed_len, head):
    """Deterministic init mimicking nn.Linear U(-1/sqrt(fan_in), ...) and
    nn.LayerNorm (weight=1, bias=0)."""
    ks = jax.random.split(key, 6)

    def lin(k, fan_in, fan_out):
        bound = 1.0 / math.sqrt(fan_in)
        kw, kb = jax.random.split(k)
        w = jax.random.uniform(kw, (fan_in, fan_out), jnp.float32, -bound, bound)
        b = jax.random.uniform(kb, (fan_out,), jnp.float32, -bound, bound)
        return w, b

    wq, bq = lin(ks[0], embed_len, D_TRUE * head)
    wk, bk = lin(ks[1], embed_len, D_TRUE * head)
    wv, bv = lin(ks[2], embed_len, D_TRUE * head)
    wf, bf = lin(ks[3], D_TRUE * head, D_TRUE)
    w1, b1 = lin(ks[4], D_TRUE, D_TRUE)
    w2, b2 = lin(ks[5], D_TRUE, D_TRUE)
    g0 = jnp.ones((D_TRUE,), jnp.float32)
    be0 = jnp.zeros((D_TRUE,), jnp.float32)
    g1 = jnp.ones((D_TRUE,), jnp.float32)
    be1 = jnp.zeros((D_TRUE,), jnp.float32)
    return (wq, bq, wk, bk, wv, bv, wf, bf, w1, b1, w2, b2, g0, be0, g1, be1)


def decode_layer_ref(y, mask_bool, params, head):
    """Pure-JAX reference matching the PyTorch forward."""
    (wq, bq, wk, bk, wv, bv, wf, bf, w1, b1, w2, b2, g0, be0, g1, be1) = params
    B, S, _ = y.shape
    hp = jax.lax.Precision.HIGHEST

    def lin(x, w, b):
        return jnp.dot(x, w, precision=hp) + b

    q = lin(y, wq, bq).reshape(B, S, head, D_TRUE).transpose(0, 2, 1, 3)
    k = lin(y, wk, bk).reshape(B, S, head, D_TRUE).transpose(0, 2, 1, 3)
    v = lin(y, wv, bv).reshape(B, S, head, D_TRUE).transpose(0, 2, 1, 3)
    d = jnp.einsum("bhqd,bhkd->bhqk", q, k, precision=hp) / math.sqrt(D_TRUE)
    d = jnp.where(mask_bool[None, None], -jnp.inf, d)
    a = jax.nn.softmax(d, axis=-1)
    c = jnp.einsum("bhqk,bhkd->bhqd", a, v, precision=hp)
    c = c.transpose(0, 2, 1, 3).reshape(B, S, head * D_TRUE)
    att = lin(c, wf, bf)

    def ln(x, g, be):
        mu = jnp.mean(x, -1, keepdims=True)
        var = jnp.mean((x - mu) ** 2, -1, keepdims=True)
        return (x - mu) / jnp.sqrt(var + 1e-5) * g + be

    x = ln(att + y, g0, be0)
    h1 = jnp.maximum(lin(x, w1, b1), 0.0)
    h2 = lin(h1, w2, b2)
    return ln(h2 + x, g1, be1)


if __name__ == "__main__":
    key = jax.random.PRNGKey(0)
    embed_len, head = 200, 2
    B, S = 2, 8

    k_y, k_layer = jax.random.split(key, 2)
    y = jax.random.normal(k_y, (B, S, embed_len), jnp.float32)
    mask_bool = jnp.triu(jnp.ones((S, S), dtype=jnp.bool_), k=1)  # causal mask

    params = init_layer_params(k_layer, embed_len, head)
    packed = pack_params(params, head)

    out = decode_layer(y, mask_bool, packed, head)
    jax.block_until_ready(out)

    assert out.shape == (B, S, embed_len)
    assert bool(jnp.all(jnp.isfinite(out)))

    ref = decode_layer_ref(y, mask_bool, params, head)
    err = float(jnp.max(jnp.abs(out - ref)))
    assert err < 1e-1, f"max abs diff vs reference too large: {err}"

    print("KERNEL_OK")
</pallas_src>

<mosaic_0001>
module attributes {stable_mosaic.version = 11 : i64} {
  func.func @decode_layer_kernel(%arg0: i32, %arg1: memref<16x256xf32, #tpu.memory_space<vmem>>, %arg2: memref<8x8xf32, #tpu.memory_space<vmem>>, %arg3: memref<256x1536xbf16, #tpu.memory_space<vmem>>, %arg4: memref<1x1536xf32, #tpu.memory_space<vmem>>, %arg5: memref<512x256xbf16, #tpu.memory_space<vmem>>, %arg6: memref<2x256x256xbf16, #tpu.memory_space<vmem>>, %arg7: memref<8x256xf32, #tpu.memory_space<vmem>>, %arg8: memref<16x256xf32, #tpu.memory_space<vmem>>, %arg9: memref<16x256xf32, #tpu.memory_space<vmem>>) attributes {dimension_semantics = [#tpu.dimension_semantics<arbitrary>], iteration_bounds = array<i64: 1>, scalar_prefetch = 0 : i64, scratch_operands = 1 : i64, tpu.core_type = #tpu.core_type<tc>, window_params = [{pipeline_mode = #tpu.pipeline_mode<synchronous>, transform_indices = @transform_0, window_bounds = array<i64: 16, 256>}, {pipeline_mode = #tpu.pipeline_mode<synchronous>, transform_indices = @transform_1, window_bounds = array<i64: 8, 8>}, {pipeline_mode = #tpu.pipeline_mode<synchronous>, transform_indices = @transform_2, window_bounds = array<i64: 256, 1536>}, {pipeline_mode = #tpu.pipeline_mode<synchronous>, transform_indices = @transform_3, window_bounds = array<i64: 1, 1536>}, {pipeline_mode = #tpu.pipeline_mode<synchronous>, transform_indices = @transform_4, window_bounds = array<i64: 512, 256>}, {pipeline_mode = #tpu.pipeline_mode<synchronous>, transform_indices = @transform_5, window_bounds = array<i64: 2, 256, 256>}, {pipeline_mode = #tpu.pipeline_mode<synchronous>, transform_indices = @transform_6, window_bounds = array<i64: 8, 256>}, {pipeline_mode = #tpu.pipeline_mode<synchronous>, transform_indices = @transform_7, window_bounds = array<i64: 16, 256>}]} {
    %c0 = arith.constant 0 : index
    %c0_0 = arith.constant 0 : index
    %0 = vector.load %arg1[%c0, %c0_0] : memref<16x256xf32, #tpu.memory_space<vmem>>, vector<16x256xf32>
    %c0_1 = arith.constant 0 : index
    %c0_2 = arith.constant 0 : index
    %1 = vector.load %arg2[%c0_1, %c0_2] : memref<8x8xf32, #tpu.memory_space<vmem>>, vector<8x8xf32>
    %2 = arith.truncf %0 : vector<16x256xf32> to vector<16x256xbf16>
    %c0_3 = arith.constant 0 : index
    %c0_4 = arith.constant 0 : index
    %3 = vector.load %arg3[%c0_3, %c0_4] : memref<256x1536xbf16, #tpu.memory_space<vmem>>, vector<256x1536xbf16>
    %cst = arith.constant dense<0.000000e+00> : vector<16x1536xf32>
    %4 = tpu.matmul %2, %3, %cst {dimension_numbers = #tpu.dot_dimension_numbers<[1], [0], [0], [1], [0, 0, 1, 1], [], []>} : vector<16x256xbf16>, vector<256x1536xbf16>, vector<16x1536xf32> -> vector<16x1536xf32>
    %c0_5 = arith.constant 0 : index
    %c0_6 = arith.constant 0 : index
    %5 = vector.load %arg4[%c0_5, %c0_6] : memref<1x1536xf32, #tpu.memory_space<vmem>>, vector<1x1536xf32>
    %6 = vector.shape_cast %5 : vector<1x1536xf32> to vector<1536xf32>
    %7 = vector.shape_cast %6 : vector<1536xf32> to vector<1x1536xf32>
    %8 = vector.broadcast %7 : vector<1x1536xf32> to vector<16x1536xf32>
    %9 = arith.addf %4, %8 : vector<16x1536xf32>
    %cst_7 = arith.constant 0.000000e+00 : f32
    %10 = vector.broadcast %cst_7 : f32 to vector<8x256xf32>
    %11 = vector.extract_strided_slice %9 {offsets = [0, 0], sizes = [8, 256], strides = [1, 1]} : vector<16x1536xf32> to vector<8x256xf32>
    %12 = arith.truncf %11 : vector<8x256xf32> to vector<8x256xbf16>
    %13 = vector.extract_strided_slice %9 {offsets = [0, 512], sizes = [8, 256], strides = [1, 1]} : vector<16x1536xf32> to vector<8x256xf32>
    %14 = arith.truncf %13 : vector<8x256xf32> to vector<8x256xbf16>
    %15 = vector.extract_strided_slice %9 {offsets = [0, 1024], sizes = [8, 256], strides = [1, 1]} : vector<16x1536xf32> to vector<8x256xf32>
    %16 = arith.truncf %15 : vector<8x256xf32> to vector<8x256xbf16>
    %cst_8 = arith.constant dense<0.000000e+00> : vector<8x8xf32>
    %17 = tpu.matmul %12, %14, %cst_8 {dimension_numbers = #tpu.dot_dimension_numbers<[1], [1], [0], [0], [0, 0, 1, 0], [], []>} : vector<8x256xbf16>, vector<8x256xbf16>, vector<8x8xf32> -> vector<8x8xf32>
    %cst_9 = arith.constant 0.0707106814 : f32
    %18 = vector.broadcast %cst_9 : f32 to vector<8x8xf32>
    %19 = arith.mulf %17, %18 : vector<8x8xf32>
    %20 = arith.addf %19, %1 : vector<8x8xf32>
    %cst_10 = arith.constant dense<0xFF800000> : vector<8xf32>
    %21 = vector.multi_reduction <maximumf>, %20, %cst_10 [1] : vector<8x8xf32> to vector<8xf32>
    %22 = vector.shape_cast %21 : vector<8xf32> to vector<8x1xf32>
    %23 = vector.broadcast %22 : vector<8x1xf32> to vector<8x8xf32>
    %24 = arith.subf %20, %23 : vector<8x8xf32>
    %25 = math.exp %24 : vector<8x8xf32>
    %cst_11 = arith.constant dense<0.000000e+00> : vector<8xf32>
    %26 = vector.multi_reduction <add>, %25, %cst_11 [1] : vector<8x8xf32> to vector<8xf32>
    %27 = vector.shape_cast %26 : vector<8xf32> to vector<8x1xf32>
    %28 = tpu.reciprocal %27 {approx = true} : vector<8x1xf32> -> vector<8x1xf32>
    %29 = vector.broadcast %28 : vector<8x1xf32> to vector<8x8xf32>
    %30 = arith.mulf %25, %29 : vector<8x8xf32>
    %31 = arith.truncf %30 : vector<8x8xf32> to vector<8x8xbf16>
    %cst_12 = arith.constant dense<0.000000e+00> : vector<8x256xf32>
    %32 = tpu.matmul %31, %16, %cst_12 {dimension_numbers = #tpu.dot_dimension_numbers<[1], [0], [0], [1], [0, 0, 1, 1], [], []>} : vector<8x8xbf16>, vector<8x256xbf16>, vector<8x256xf32> -> vector<8x256xf32>
    %33 = arith.truncf %32 : vector<8x256xf32> to vector<8x256xbf16>
    %c0_13 = arith.constant 0 : index
    %c0_14 = arith.constant 0 : index
    %34 = vector.load %arg5[%c0_13, %c0_14] : memref<512x256xbf16, #tpu.memory_space<vmem>>, vector<256x256xbf16>
    %cst_15 = arith.constant dense<0.000000e+00> : vector<8x256xf32>
    %35 = tpu.matmul %33, %34, %cst_15 {dimension_numbers = #tpu.dot_dimension_numbers<[1], [0], [0], [1], [0, 0, 1, 1], [], []>} : vector<8x256xbf16>, vector<256x256xbf16>, vector<8x256xf32> -> vector<8x256xf32>
    %36 = arith.addf %10, %35 : vector<8x256xf32>
    %37 = vector.extract_strided_slice %9 {offsets = [0, 256], sizes = [8, 256], strides = [1, 1]} : vector<16x1536xf32> to vector<8x256xf32>
    %38 = arith.truncf %37 : vector<8x256xf32> to vector<8x256xbf16>
    %39 = vector.extract_strided_slice %9 {offsets = [0, 768], sizes = [8, 256], strides = [1, 1]} : vector<16x1536xf32> to vector<8x256xf32>
    %40 = arith.truncf %39 : vector<8x256xf32> to vector<8x256xbf16>
    %41 = vector.extract_strided_slice %9 {offsets = [0, 1280], sizes = [8, 256], strides = [1, 1]} : vector<16x1536xf32> to vector<8x256xf32>
    %42 = arith.truncf %41 : vector<8x256xf32> to vector<8x256xbf16>
    %cst_16 = arith.constant dense<0.000000e+00> : vector<8x8xf32>
    %43 = tpu.matmul %38, %40, %cst_16 {dimension_numbers = #tpu.dot_dimension_numbers<[1], [1], [0], [0], [0, 0, 1, 0], [], []>} : vector<8x256xbf16>, vector<8x256xbf16>, vector<8x8xf32> -> vector<8x8xf32>
    %cst_17 = arith.constant 0.0707106814 : f32
    %44 = vector.broadcast %cst_17 : f32 to vector<8x8xf32>
    %45 = arith.mulf %43, %44 : vector<8x8xf32>
    %46 = arith.addf %45, %1 : vector<8x8xf32>
    %cst_18 = arith.constant dense<0xFF800000> : vector<8xf32>
    %47 = vector.multi_reduction <maximumf>, %46, %cst_18 [1] : vector<8x8xf32> to vector<8xf32>
    %48 = vector.shape_cast %47 : vector<8xf32> to vector<8x1xf32>
    %49 = vector.broadcast %48 : vector<8x1xf32> to vector<8x8xf32>
    %50 = arith.subf %46, %49 : vector<8x8xf32>
    %51 = math.exp %50 : vector<8x8xf32>
    %cst_19 = arith.constant dense<0.000000e+00> : vector<8xf32>
    %52 = vector.multi_reduction <add>, %51, %cst_19 [1] : vector<8x8xf32> to vector<8xf32>
    %53 = vector.shape_cast %52 : vector<8xf32> to vector<8x1xf32>
    %54 = tpu.reciprocal %53 {approx = true} : vector<8x1xf32> -> vector<8x1xf32>
    %55 = vector.broadcast %54 : vector<8x1xf32> to vector<8x8xf32>
    %56 = arith.mulf %51, %55 : vector<8x8xf32>
    %57 = arith.truncf %56 : vector<8x8xf32> to vector<8x8xbf16>
    %cst_20 = arith.constant dense<0.000000e+00> : vector<8x256xf32>
    %58 = tpu.matmul %57, %42, %cst_20 {dimension_numbers = #tpu.dot_dimension_numbers<[1], [0], [0], [1], [0, 0, 1, 1], [], []>} : vector<8x8xbf16>, vector<8x256xbf16>, vector<8x256xf32> -> vector<8x256xf32>
    %59 = arith.truncf %58 : vector<8x256xf32> to vector<8x256xbf16>
    %c256 = arith.constant 256 : index
    %c0_21 = arith.constant 0 : index
    %60 = vector.load %arg5[%c256, %c0_21] : memref<512x256xbf16, #tpu.memory_space<vmem>>, vector<256x256xbf16>
    %cst_22 = arith.constant dense<0.000000e+00> : vector<8x256xf32>
    %61 = tpu.matmul %59, %60, %cst_22 {dimension_numbers = #tpu.dot_dimension_numbers<[1], [0], [0], [1], [0, 0, 1, 1], [], []>} : vector<8x256xbf16>, vector<256x256xbf16>, vector<8x256xf32> -> vector<8x256xf32>
    %62 = arith.addf %36, %61 : vector<8x256xf32>
    %c0_23 = arith.constant 0 : index
    %c0_24 = arith.constant 0 : index
    %63 = vector.load %arg9[%c0_23, %c0_24] : memref<16x256xf32, #tpu.memory_space<vmem>>, vector<8x256xf32>
    tpu.vector_store %arg9[%c0_23, %c0_24], %62 {strides = array<i32>} : memref<16x256xf32, #tpu.memory_space<vmem>>, vector<8x256xf32>,
    %cst_25 = arith.constant 0.000000e+00 : f32
    %64 = vector.broadcast %cst_25 : f32 to vector<8x256xf32>
    %65 = vector.extract_strided_slice %9 {offsets = [8, 0], sizes = [8, 256], strides = [1, 1]} : vector<16x1536xf32> to vector<8x256xf32>
    %66 = arith.truncf %65 : vector<8x256xf32> to vector<8x256xbf16>
    %67 = vector.extract_strided_slice %9 {offsets = [8, 512], sizes = [8, 256], strides = [1, 1]} : vector<16x1536xf32> to vector<8x256xf32>
    %68 = arith.truncf %67 : vector<8x256xf32> to vector<8x256xbf16>
    %69 = vector.extract_strided_slice %9 {offsets = [8, 1024], sizes = [8, 256], strides = [1, 1]} : vector<16x1536xf32> to vector<8x256xf32>
    %70 = arith.truncf %69 : vector<8x256xf32> to vector<8x256xbf16>
    %cst_26 = arith.constant dense<0.000000e+00> : vector<8x8xf32>
    %71 = tpu.matmul %66, %68, %cst_26 {dimension_numbers = #tpu.dot_dimension_numbers<[1], [1], [0], [0], [0, 0, 1, 0], [], []>} : vector<8x256xbf16>, vector<8x256xbf16>, vector<8x8xf32> -> vector<8x8xf32>
    %cst_27 = arith.constant 0.0707106814 : f32
    %72 = vector.broadcast %cst_27 : f32 to vector<8x8xf32>
    %73 = arith.mulf %71, %72 : vector<8x8xf32>
    %74 = arith.addf %73, %1 : vector<8x8xf32>
    %cst_28 = arith.constant dense<0xFF800000> : vector<8xf32>
    %75 = vector.multi_reduction <maximumf>, %74, %cst_28 [1] : vector<8x8xf32> to vector<8xf32>
    %76 = vector.shape_cast %75 : vector<8xf32> to vector<8x1xf32>
    %77 = vector.broadcast %76 : vector<8x1xf32> to vector<8x8xf32>
    %78 = arith.subf %74, %77 : vector<8x8xf32>
    %79 = math.exp %78 : vector<8x8xf32>
    %cst_29 = arith.constant dense<0.000000e+00> : vector<8xf32>
    %80 = vector.multi_reduction <add>, %79, %cst_29 [1] : vector<8x8xf32> to vector<8xf32>
    %81 = vector.shape_cast %80 : vector<8xf32> to vector<8x1xf32>
    %82 = tpu.reciprocal %81 {approx = true} : vector<8x1xf32> -> vector<8x1xf32>
    %83 = vector.broadcast %82 : vector<8x1xf32> to vector<8x8xf32>
    %84 = arith.mulf %79, %83 : vector<8x8xf32>
    %85 = arith.truncf %84 : vector<8x8xf32> to vector<8x8xbf16>
    %cst_30 = arith.constant dense<0.000000e+00> : vector<8x256xf32>
    %86 = tpu.matmul %85, %70, %cst_30 {dimension_numbers = #tpu.dot_dimension_numbers<[1], [0], [0], [1], [0, 0, 1, 1], [], []>} : vector<8x8xbf16>, vector<8x256xbf16>, vector<8x256xf32> -> vector<8x256xf32>
    %87 = arith.truncf %86 : vector<8x256xf32> to vector<8x256xbf16>
    %c0_31 = arith.constant 0 : index
    %c0_32 = arith.constant 0 : index
    %88 = vector.load %arg5[%c0_31, %c0_32] : memref<512x256xbf16, #tpu.memory_space<vmem>>, vector<256x256xbf16>
    %cst_33 = arith.constant dense<0.000000e+00> : vector<8x256xf32>
    %89 = tpu.matmul %87, %88, %cst_33 {dimension_numbers = #tpu.dot_dimension_numbers<[1], [0], [0], [1], [0, 0, 1, 1], [], []>} : vector<8x256xbf16>, vector<256x256xbf16>, vector<8x256xf32> -> vector<8x256xf32>
    %90 = arith.addf %64, %89 : vector<8x256xf32>
    %91 = vector.extract_strided_slice %9 {offsets = [8, 256], sizes = [8, 256], strides = [1, 1]} : vector<16x1536xf32> to vector<8x256xf32>
    %92 = arith.truncf %91 : vector<8x256xf32> to vector<8x256xbf16>
    %93 = vector.extract_strided_slice %9 {offsets = [8, 768], sizes = [8, 256], strides = [1, 1]} : vector<16x1536xf32> to vector<8x256xf32>
    %94 = arith.truncf %93 : vector<8x256xf32> to vector<8x256xbf16>
    %95 = vector.extract_strided_slice %9 {offsets = [8, 1280], sizes = [8, 256], strides = [1, 1]} : vector<16x1536xf32> to vector<8x256xf32>
    %96 = arith.truncf %95 : vector<8x256xf32> to vector<8x256xbf16>
    %cst_34 = arith.constant dense<0.000000e+00> : vector<8x8xf32>
    %97 = tpu.matmul %92, %94, %cst_34 {dimension_numbers = #tpu.dot_dimension_numbers<[1], [1], [0], [0], [0, 0, 1, 0], [], []>} : vector<8x256xbf16>, vector<8x256xbf16>, vector<8x8xf32> -> vector<8x8xf32>
    %cst_35 = arith.constant 0.0707106814 : f32
    %98 = vector.broadcast %cst_35 : f32 to vector<8x8xf32>
    %99 = arith.mulf %97, %98 : vector<8x8xf32>
    %100 = arith.addf %99, %1 : vector<8x8xf32>
    %cst_36 = arith.constant dense<0xFF800000> : vector<8xf32>
    %101 = vector.multi_reduction <maximumf>, %100, %cst_36 [1] : vector<8x8xf32> to vector<8xf32>
    %102 = vector.shape_cast %101 : vector<8xf32> to vector<8x1xf32>
    %103 = vector.broadcast %102 : vector<8x1xf32> to vector<8x8xf32>
    %104 = arith.subf %100, %103 : vector<8x8xf32>
    %105 = math.exp %104 : vector<8x8xf32>
    %cst_37 = arith.constant dense<0.000000e+00> : vector<8xf32>
    %106 = vector.multi_reduction <add>, %105, %cst_37 [1] : vector<8x8xf32> to vector<8xf32>
    %107 = vector.shape_cast %106 : vector<8xf32> to vector<8x1xf32>
    %108 = tpu.reciprocal %107 {approx = true} : vector<8x1xf32> -> vector<8x1xf32>
    %109 = vector.broadcast %108 : vector<8x1xf32> to vector<8x8xf32>
    %110 = arith.mulf %105, %109 : vector<8x8xf32>
    %111 = arith.truncf %110 : vector<8x8xf32> to vector<8x8xbf16>
    %cst_38 = arith.constant dense<0.000000e+00> : vector<8x256xf32>
    %112 = tpu.matmul %111, %96, %cst_38 {dimension_numbers = #tpu.dot_dimension_numbers<[1], [0], [0], [1], [0, 0, 1, 1], [], []>} : vector<8x8xbf16>, vector<8x256xbf16>, vector<8x256xf32> -> vector<8x256xf32>
    %113 = arith.truncf %112 : vector<8x256xf32> to vector<8x256xbf16>
    %c256_39 = arith.constant 256 : index
    %c0_40 = arith.constant 0 : index
    %114 = vector.load %arg5[%c256_39, %c0_40] : memref<512x256xbf16, #tpu.memory_space<vmem>>, vector<256x256xbf16>
    %cst_41 = arith.constant dense<0.000000e+00> : vector<8x256xf32>
    %115 = tpu.matmul %113, %114, %cst_41 {dimension_numbers = #tpu.dot_dimension_numbers<[1], [0], [0], [1], [0, 0, 1, 1], [], []>} : vector<8x256xbf16>, vector<256x256xbf16>, vector<8x256xf32> -> vector<8x256xf32>
    %116 = arith.addf %90, %115 : vector<8x256xf32>
    %c8 = arith.constant 8 : index
    %c0_42 = arith.constant 0 : index
    %117 = vector.load %arg9[%c8, %c0_42] : memref<16x256xf32, #tpu.memory_space<vmem>>, vector<8x256xf32>
    tpu.vector_store %arg9[%c8, %c0_42], %116 {strides = array<i32>} : memref<16x256xf32, #tpu.memory_space<vmem>>, vector<8x256xf32>,
    %c0_43 = arith.constant 0 : index
    %c0_44 = arith.constant 0 : index
    %118 = vector.load %arg9[%c0_43, %c0_44] : memref<16x256xf32, #tpu.memory_space<vmem>>, vector<16x256xf32>
    %c0_45 = arith.constant 0 : index
    %c0_46 = arith.constant 0 : index
    %119 = vector.load %arg7[%c0_45, %c0_46] : memref<8x256xf32, #tpu.memory_space<vmem>>, vector<1x256xf32>
    %120 = vector.shape_cast %119 : vector<1x256xf32> to vector<256xf32>
    %121 = vector.shape_cast %120 : vector<256xf32> to vector<1x256xf32>
    %122 = vector.broadcast %121 : vector<1x256xf32> to vector<16x256xf32>
    %123 = arith.addf %118, %122 : vector<16x256xf32>
    %124 = tpu.iota {dimensions = array<i32: 1>} : vector<1x256xi32>
    %c200_i32 = arith.constant 200 : i32
    %125 = vector.broadcast %c200_i32 : i32 to vector<1x256xi32>
    %126 = arith.cmpi slt, %124, %125 : vector<1x256xi32>
    %127 = arith.extui %126 : vector<1x256xi1> to vector<1x256xi32>
    %128 = arith.sitofp %127 : vector<1x256xi32> to vector<1x256xf32>
    %129 = arith.addf %123, %0 : vector<16x256xf32>
    %c3 = arith.constant 3 : index
    %c0_47 = arith.constant 0 : index
    %130 = vector.load %arg7[%c3, %c0_47] : memref<8x256xf32, #tpu.memory_space<vmem>>, vector<1x256xf32>
    %131 = vector.shape_cast %130 : vector<1x256xf32> to vector<256xf32>
    %c4 = arith.constant 4 : index
    %c0_48 = arith.constant 0 : index
    %132 = vector.load %arg7[%c4, %c0_48] : memref<8x256xf32, #tpu.memory_space<vmem>>, vector<1x256xf32>
    %133 = vector.shape_cast %132 : vector<1x256xf32> to vector<256xf32>
    %cst_49 = arith.constant dense<0.000000e+00> : vector<16xf32>
    %134 = vector.multi_reduction <add>, %129, %cst_49 [1] : vector<16x256xf32> to vector<16xf32>
    %135 = vector.shape_cast %134 : vector<16xf32> to vector<16x1xf32>
    %cst_50 = arith.constant 5.000000e-03 : f32
    %136 = vector.broadcast %cst_50 : f32 to vector<16x1xf32>
    %137 = arith.mulf %135, %136 : vector<16x1xf32>
    %138 = vector.broadcast %137 : vector<16x1xf32> to vector<16x256xf32>
    %139 = arith.subf %129, %138 : vector<16x256xf32>
    %140 = vector.broadcast %128 : vector<1x256xf32> to vector<16x256xf32>
    %141 = arith.mulf %139, %140 : vector<16x256xf32>
    %142 = arith.mulf %141, %141 : vector<16x256xf32>
    %cst_51 = arith.constant dense<0.000000e+00> : vector<16xf32>
    %143 = vector.multi_reduction <add>, %142, %cst_51 [1] : vector<16x256xf32> to vector<16xf32>
    %144 = vector.shape_cast %143 : vector<16xf32> to vector<16x1xf32>
    %cst_52 = arith.constant 5.000000e-03 : f32
    %145 = vector.broadcast %cst_52 : f32 to vector<16x1xf32>
    %146 = arith.mulf %144, %145 : vector<16x1xf32>
    %cst_53 = arith.constant 9.99999974E-6 : f32
    %147 = vector.broadcast %cst_53 : f32 to vector<16x1xf32>
    %148 = arith.addf %146, %147 : vector<16x1xf32>
    %149 = math.rsqrt %148 : vector<16x1xf32>
    %150 = vector.broadcast %149 : vector<16x1xf32> to vector<16x256xf32>
    %151 = arith.mulf %141, %150 : vector<16x256xf32>
    %152 = vector.shape_cast %131 : vector<256xf32> to vector<1x256xf32>
    %153 = vector.broadcast %152 : vector<1x256xf32> to vector<16x256xf32>
    %154 = arith.mulf %151, %153 : vector<16x256xf32>
    %155 = vector.shape_cast %133 : vector<256xf32> to vector<1x256xf32>
    %156 = vector.broadcast %155 : vector<1x256xf32> to vector<16x256xf32>
    %157 = arith.addf %154, %156 : vector<16x256xf32>
    %158 = arith.truncf %157 : vector<16x256xf32> to vector<16x256xbf16>
    %c0_54 = arith.constant 0 : index
    %c0_55 = arith.constant 0 : index
    %c0_56 = arith.constant 0 : index
    %159 = vector.load %arg6[%c0_54, %c0_55, %c0_56] : memref<2x256x256xbf16, #tpu.memory_space<vmem>>, vector<1x256x256xbf16>
    %160 = vector.shape_cast %159 : vector<1x256x256xbf16> to vector<256x256xbf16>
    %cst_57 = arith.constant dense<0.000000e+00> : vector<16x256xf32>
    %161 = tpu.matmul %158, %160, %cst_57 {dimension_numbers = #tpu.dot_dimension_numbers<[1], [0], [0], [1], [0, 0, 1, 1], [], []>} : vector<16x256xbf16>, vector<256x256xbf16>, vector<16x256xf32> -> vector<16x256xf32>
    %c1 = arith.constant 1 : index
    %c0_58 = arith.constant 0 : index
    %162 = vector.load %arg7[%c1, %c0_58] : memref<8x256xf32, #tpu.memory_space<vmem>>, vector<1x256xf32>
    %163 = vector.shape_cast %162 : vector<1x256xf32> to vector<256xf32>
    %164 = vector.shape_cast %163 : vector<256xf32> to vector<1x256xf32>
    %165 = vector.broadcast %164 : vector<1x256xf32> to vector<16x256xf32>
    %166 = arith.addf %161, %165 : vector<16x256xf32>
    %cst_59 = arith.constant 0.000000e+00 : f32
    %167 = vector.broadcast %cst_59 : f32 to vector<16x256xf32>
    %168 = arith.maximumf %166, %167 : vector<16x256xf32>
    %169 = arith.truncf %168 : vector<16x256xf32> to vector<16x256xbf16>
    %c1_60 = arith.constant 1 : index
    %c0_61 = arith.constant 0 : index
    %c0_62 = arith.constant 0 : index
    %170 = vector.load %arg6[%c1_60, %c0_61, %c0_62] : memref<2x256x256xbf16, #tpu.memory_space<vmem>>, vector<1x256x256xbf16>
    %171 = vector.shape_cast %170 : vector<1x256x256xbf16> to vector<256x256xbf16>
    %cst_63 = arith.constant dense<0.000000e+00> : vector<16x256xf32>
    %172 = tpu.matmul %169, %171, %cst_63 {dimension_numbers = #tpu.dot_dimension_numbers<[1], [0], [0], [1], [0, 0, 1, 1], [], []>} : vector<16x256xbf16>, vector<256x256xbf16>, vector<16x256xf32> -> vector<16x256xf32>
    %c2 = arith.constant 2 : index
    %c0_64 = arith.constant 0 : index
    %173 = vector.load %arg7[%c2, %c0_64] : memref<8x256xf32, #tpu.memory_space<vmem>>, vector<1x256xf32>
    %174 = vector.shape_cast %173 : vector<1x256xf32> to vector<256xf32>
    %175 = vector.shape_cast %174 : vector<256xf32> to vector<1x256xf32>
    %176 = vector.broadcast %175 : vector<1x256xf32> to vector<16x256xf32>
    %177 = arith.addf %172, %176 : vector<16x256xf32>
    %178 = arith.addf %177, %157 : vector<16x256xf32>
    %c5 = arith.constant 5 : index
    %c0_65 = arith.constant 0 : index
    %179 = vector.load %arg7[%c5, %c0_65] : memref<8x256xf32, #tpu.memory_space<vmem>>, vector<1x256xf32>
    %180 = vector.shape_cast %179 : vector<1x256xf32> to vector<256xf32>
    %c6 = arith.constant 6 : index
    %c0_66 = arith.constant 0 : index
    %181 = vector.load %arg7[%c6, %c0_66] : memref<8x256xf32, #tpu.memory_space<vmem>>, vector<1x256xf32>
    %182 = vector.shape_cast %181 : vector<1x256xf32> to vector<256xf32>
    %cst_67 = arith.constant dense<0.000000e+00> : vector<16xf32>
    %183 = vector.multi_reduction <add>, %178, %cst_67 [1] : vector<16x256xf32> to vector<16xf32>
    %184 = vector.shape_cast %183 : vector<16xf32> to vector<16x1xf32>
    %cst_68 = arith.constant 5.000000e-03 : f32
    %185 = vector.broadcast %cst_68 : f32 to vector<16x1xf32>
    %186 = arith.mulf %184, %185 : vector<16x1xf32>
    %187 = vector.broadcast %186 : vector<16x1xf32> to vector<16x256xf32>
    %188 = arith.subf %178, %187 : vector<16x256xf32>
    %189 = vector.broadcast %128 : vector<1x256xf32> to vector<16x256xf32>
    %190 = arith.mulf %188, %189 : vector<16x256xf32>
    %191 = arith.mulf %190, %190 : vector<16x256xf32>
    %cst_69 = arith.constant dense<0.000000e+00> : vector<16xf32>
    %192 = vector.multi_reduction <add>, %191, %cst_69 [1] : vector<16x256xf32> to vector<16xf32>
    %193 = vector.shape_cast %192 : vector<16xf32> to vector<16x1xf32>
    %cst_70 = arith.constant 5.000000e-03 : f32
    %194 = vector.broadcast %cst_70 : f32 to vector<16x1xf32>
    %195 = arith.mulf %193, %194 : vector<16x1xf32>
    %cst_71 = arith.constant 9.99999974E-6 : f32
    %196 = vector.broadcast %cst_71 : f32 to vector<16x1xf32>
    %197 = arith.addf %195, %196 : vector<16x1xf32>
    %198 = math.rsqrt %197 : vector<16x1xf32>
    %199 = vector.broadcast %198 : vector<16x1xf32> to vector<16x256xf32>
    %200 = arith.mulf %190, %199 : vector<16x256xf32>
    %201 = vector.shape_cast %180 : vector<256xf32> to vector<1x256xf32>
    %202 = vector.broadcast %201 : vector<1x256xf32> to vector<16x256xf32>
    %203 = arith.mulf %200, %202 : vector<16x256xf32>
    %204 = vector.shape_cast %182 : vector<256xf32> to vector<1x256xf32>
    %205 = vector.broadcast %204 : vector<1x256xf32> to vector<16x256xf32>
    %206 = arith.addf %203, %205 : vector<16x256xf32>
    %c0_72 = arith.constant 0 : index
    %c0_73 = arith.constant 0 : index
    %207 = vector.load %arg8[%c0_72, %c0_73] : memref<16x256xf32, #tpu.memory_space<vmem>>, vector<16x256xf32>
    tpu.vector_store %arg8[%c0_72, %c0_73], %206 {strides = array<i32>} : memref<16x256xf32, #tpu.memory_space<vmem>>, vector<16x256xf32>,
    return
  }
  func.func @transform_0(%arg0: i32) -> (i32, i32) {
    %c0_i32 = arith.constant 0 : i32
    %c0_i32_0 = arith.constant 0 : i32
    %c0_i32_1 = arith.constant 0 : i32
    return %c0_i32, %c0_i32_0 : i32, i32
  }
  func.func @transform_1(%arg0: i32) -> (i32, i32) {
    %c0_i32 = arith.constant 0 : i32
    %c0_i32_0 = arith.constant 0 : i32
    %c0_i32_1 = arith.constant 0 : i32
    return %c0_i32, %c0_i32_0 : i32, i32
  }
  func.func @transform_2(%arg0: i32) -> (i32, i32) {
    %c0_i32 = arith.constant 0 : i32
    %c0_i32_0 = arith.constant 0 : i32
    %c0_i32_1 = arith.constant 0 : i32
    return %c0_i32, %c0_i32_0 : i32, i32
  }
  func.func @transform_3(%arg0: i32) -> (i32, i32) {
    %c0_i32 = arith.constant 0 : i32
    %c0_i32_0 = arith.constant 0 : i32
    %c0_i32_1 = arith.constant 0 : i32
    return %c0_i32, %c0_i32_0 : i32, i32
  }
  func.func @transform_4(%arg0: i32) -> (i32, i32) {
    %c0_i32 = arith.constant 0 : i32
    %c0_i32_0 = arith.constant 0 : i32
    %c0_i32_1 = arith.constant 0 : i32
    return %c0_i32, %c0_i32_0 : i32, i32
  }
  func.func @transform_5(%arg0: i32) -> (i32, i32, i32) {
    %c0_i32 = arith.constant 0 : i32
    %c0_i32_0 = arith.constant 0 : i32
    %c0_i32_1 = arith.constant 0 : i32
    %c0_i32_2 = arith.constant 0 : i32
    return %c0_i32, %c0_i32_0, %c0_i32_1 : i32, i32, i32
  }
  func.func @transform_6(%arg0: i32) -> (i32, i32) {
    %c0_i32 = arith.constant 0 : i32
    %c0_i32_0 = arith.constant 0 : i32
    %c0_i32_1 = arith.constant 0 : i32
    return %c0_i32, %c0_i32_0 : i32, i32
  }
  func.func @transform_7(%arg0: i32) -> (i32, i32) {
    %c0_i32 = arith.constant 0 : i32
    %c0_i32_0 = arith.constant 0 : i32
    %c0_i32_1 = arith.constant 0 : i32
    return %c0_i32, %c0_i32_0 : i32, i32
  }
}

</mosaic_0001>

<llo_original>
// kernel: decode_layer_padded.1
$region0: #{decode_layer_padded.1}
  #allocation0 [shape = 'u32[]', space=smem, size = 0x4, offset = 0x4, fixed_abs, tag = 'smem constant byte address 0x4 - core index']
  #allocation1 [shape = 'u32[144,128]{1,0:T(1,128)}', space=vmem, size = 0x12000, scoped, tag = 'internal scratch']
  #allocation2 [shape = 'f32[16,256]{1,0:T(8,128)}', space=vmem, size = 0x4000, scoped, tag = 'scratch operand']
  %s0 = inlined_call_operand.vmem [shape: f32[16,256], index: 0, kind: input, shape index: {}]
  %s1 = inlined_call_operand.vmem [shape: f32[8,8], index: 1, kind: input, shape index: {}]
  %s2 = inlined_call_operand.hbm [shape: bf16[256,1536], index: 2, kind: input, shape index: {}]
  %s3 = inlined_call_operand.vmem [shape: f32[1,1536], index: 3, kind: input, shape index: {}]
  %s4 = inlined_call_operand.hbm [shape: bf16[512,256], index: 4, kind: input, shape index: {}]
  %s5 = inlined_call_operand.hbm [shape: bf16[2,256,256], index: 5, kind: input, shape index: {}]
  %s6 = inlined_call_operand.vmem [shape: f32[8,256], index: 6, kind: input, shape index: {}]
  %s7 = inlined_call_operand.hbm [shape: f32[16,256], index: 7, kind: output, shape index: {}]
  %s8 = sld [smem:[#allocation0]]
  $region50: #{decode_layer_padded.1} parent=0
    _
  %s10 = ssub.s32 1, %s8
  %s11 = scalar_select 0, %s10, %s8
  $region1: #{decode_layer_padded.1} parent=0
    #allocation3 [shape = 'u8[786432]{0}', space=vmem, size = 0xc0000, scoped, tag = 'input window, operand 2, single buffered']
    #allocation4 [shape = 's32[1]{0}', space=sflag, size = 0x4, scoped, tag = 'scoped memory for decode_layer_padded.1']
    #allocation5 [shape = 's32[1]{0}', space=sflag, size = 0x4, scoped, tag = 'scoped memory for decode_layer_padded.1']
    #allocation6 [shape = 'u8[262144]{0}', space=vmem, size = 0x40000, scoped, tag = 'input window, operand 4, single buffered']
    #allocation7 [shape = 's32[1]{0}', space=sflag, size = 0x4, scoped, tag = 'scoped memory for decode_layer_padded.1']
    #allocation8 [shape = 'u8[262144]{0}', space=vmem, size = 0x40000, scoped, tag = 'input window, operand 5, single buffered']
    #allocation9 [shape = 'u8[16384]{0}', space=vmem, size = 0x4000, scoped, tag = 'output window, operand 0, single buffered']
    %12 = vsyncpa [#allocation4], 0
    %13 = vsyncpa [#allocation7], 0
    %14 = vsyncpa [#allocation5], 0
    // Predicated region
    $region2: #{decode_layer_padded.1} parent=1 // pred_check
      _
    $region3: #{decode_layer_padded.1} parent=1 // pred_check_branch
      %16 = sbr.rel (0) target = $region5
    $region4: #{decode_layer_padded.1} parent=1 // pred_region
      _
    $region5: #{decode_layer_padded.1} parent=1 // pred_fallthru
      _
    // Predicated region
    $region6: #{decode_layer_padded.1} parent=1 // pred_check
      _
    $region7: #{decode_layer_padded.1} parent=1 // pred_check_branch
      %18 = sbr.rel (0) target = $region9
    $region8: #{decode_layer_padded.1} parent=1 // pred_region
      _
    $region9: #{decode_layer_padded.1} parent=1 // pred_fallthru
      _
    // Predicated region
    $region10: #{decode_layer_padded.1} parent=1 // pred_check
      _
    $region11: #{decode_layer_padded.1} parent=1 // pred_check_branch
      %20 = sbr.rel (0) target = $region13
    $region12: #{decode_layer_padded.1} parent=1 // pred_region
      %s22 = ssub.s32 24576, 24576
      %23 = vsyncadd [#allocation4], %s22
      %s24 = sshll.u32 [#allocation3], 4
      %s25 = int_to_ptr.vmem [resolvable:$true] %s24
      %30 = dma.hbm_to_vmem [thread:$0]  %s2, 24576, %s25, [#allocation4], 768, 768, 48
    $region13: #{decode_layer_padded.1} parent=1 // pred_fallthru
      _
    // Predicated region
    $region14: #{decode_layer_padded.1} parent=1 // pred_check
      _
    $region15: #{decode_layer_padded.1} parent=1 // pred_check_branch
      %32 = sbr.rel (0) target = $region17
    $region16: #{decode_layer_padded.1} parent=1 // pred_region
      _
    $region17: #{decode_layer_padded.1} parent=1 // pred_fallthru
      _
    // Predicated region
    $region18: #{decode_layer_padded.1} parent=1 // pred_check
      _
    $region19: #{decode_layer_padded.1} parent=1 // pred_check_branch
      %34 = sbr.rel (0) target = $region21
    $region20: #{decode_layer_padded.1} parent=1 // pred_region
      %s36 = ssub.s32 8192, 8192
      %37 = vsyncadd [#allocation7], %s36
      %s38 = sshll.u32 [#allocation6], 4
      %s39 = int_to_ptr.vmem [resolvable:$true] %s38
      %44 = dma.hbm_to_vmem [thread:$0]  %s4, 8192, %s39, [#allocation7], 128, 128, 8
    $region21: #{decode_layer_padded.1} parent=1 // pred_fallthru
      _
    // Predicated region
    $region22: #{decode_layer_padded.1} parent=1 // pred_check
      _
    $region23: #{decode_layer_padded.1} parent=1 // pred_check_branch
      %46 = sbr.rel (0) target = $region25
    $region24: #{decode_layer_padded.1} parent=1 // pred_region
      %s48 = ssub.s32 8192, 8192
      %49 = vsyncadd [#allocation7], %s48
      %s50 = sshll.u32 [#allocation8], 4
      %s51 = int_to_ptr.vmem [resolvable:$true] %s50
      %56 = dma.hbm_to_vmem [thread:$0]  %s5, 8192, %s51, [#allocation7], 128, 128, 8
    $region25: #{decode_layer_padded.1} parent=1 // pred_fallthru
      _
    // Predicated region
    $region26: #{decode_layer_padded.1} parent=1 // pred_check
      _
    $region27: #{decode_layer_padded.1} parent=1 // pred_check_branch
      %58 = sbr.rel (0) target = $region29
    $region28: #{decode_layer_padded.1} parent=1 // pred_region
      _
    $region29: #{decode_layer_padded.1} parent=1 // pred_fallthru
      _
    // Predicated region
    $region30: #{decode_layer_padded.1} parent=1 // pred_check
      _
    $region31: #{decode_layer_padded.1} parent=1 // pred_check_branch
      %60 = sbr.rel (0) target = $region33
    $region32: #{decode_layer_padded.1} parent=1 // pred_region
      %61 = dma.done [#allocation4], 24576
    $region33: #{decode_layer_padded.1} parent=1 // pred_fallthru
      _
    // Predicated region
    $region34: #{decode_layer_padded.1} parent=1 // pred_check
      _
    $region35: #{decode_layer_padded.1} parent=1 // pred_check_branch
      %63 = sbr.rel (0) target = $region37
    $region36: #{decode_layer_padded.1} parent=1 // pred_region
      %64 = dma.done [#allocation7], 8192
    $region37: #{decode_layer_padded.1} parent=1 // pred_fallthru
      _
    // Predicated region
    $region38: #{decode_layer_padded.1} parent=1 // pred_check
      _
    $region39: #{decode_layer_padded.1} parent=1 // pred_check_branch
      %66 = sbr.rel (0) target = $region41
    $region40: #{decode_layer_padded.1} parent=1 // pred_region
      %67 = dma.done [#allocation7], 8192
    $region41: #{decode_layer_padded.1} parent=1 // pred_fallthru
      _
    %v69 = vld [vmem:[%s0] sm:$0xff]
    %v70 = vld [vmem:[%s0 + $0x8] sm:$0xff]
    %v71 = vld [vmem:[%s0 + $0x10] sm:$0xff]
    %v72 = vld [vmem:[%s0 + $0x18] sm:$0xff]
    %v73 = vld [vmem:[%s1] sm:$0xff]
    %v74 = vpack.c.bf16 %v71, %v69
    %v75 = vpack.c.bf16 %v72, %v70
    %v76 = vld [vmem:[#allocation3] sm:$0xff]
    %v77 = vld [vmem:[#allocation3 + $0x8] sm:$0xff]
    %v78 = vld [vmem:[#allocation3 + $0x10] sm:$0xff]
    %v79 = vld [vmem:[#allocation3 + $0x18] sm:$0xff]
    %v80 = vld [vmem:[#allocation3 + $0x20] sm:$0xff]
    %v81 = vld [vmem:[#allocation3 + $0x28] sm:$0xff]
    %v82 = vld [vmem:[#allocation3 + $0x30] sm:$0xff]
    %v83 = vld [vmem:[#allocation3 + $0x38] sm:$0xff]
    %v84 = vld [vmem:[#allocation3 + $0x40] sm:$0xff]
    %v85 = vld [vmem:[#allocation3 + $0x48] sm:$0xff]
    %v86 = vld [vmem:[#allocation3 + $0x50] sm:$0xff]
    %v87 = vld [vmem:[#allocation3 + $0x58] sm:$0xff]
    %v88 = vld [vmem:[#allocation3 + $0x60] sm:$0xff]
    %v89 = vld [vmem:[#allocation3 + $0x68] sm:$0xff]
    %v90 = vld [vmem:[#allocation3 + $0x70] sm:$0xff]
    %v91 = vld [vmem:[#allocation3 + $0x78] sm:$0xff]
    %v92 = vld [vmem:[#allocation3 + $0x80] sm:$0xff]
    %v93 = vld [vmem:[#allocation3 + $0x88] sm:$0xff]
    %v94 = vld [vmem:[#allocation3 + $0x90] sm:$0xff]
    %v95 = vld [vmem:[#allocation3 + $0x98] sm:$0xff]
    %v96 = vld [vmem:[#allocation3 + $0xa0] sm:$0xff]
    %v97 = vld [vmem:[#allocation3 + $0xa8] sm:$0xff]
    %v98 = vld [vmem:[#allocation3 + $0xb0] sm:$0xff]
    %v99 = vld [vmem:[#allocation3 + $0xb8] sm:$0xff]
    %v100 = vld [vmem:[#allocation3 + $0xc0] sm:$0xff]
    %v101 = vld [vmem:[#allocation3 + $0xc8] sm:$0xff]
    %v102 = vld [vmem:[#allocation3 + $0xd0] sm:$0xff]
    %v103 = vld [vmem:[#allocation3 + $0xd8] sm:$0xff]
    %v104 = vld [vmem:[#allocation3 + $0xe0] sm:$0xff]
    %v105 = vld [vmem:[#allocation3 + $0xe8] sm:$0xff]
    %v106 = vld [vmem:[#allocation3 + $0xf0] sm:$0xff]
    %v107 = vld [vmem:[#allocation3 + $0xf8] sm:$0xff]
    %v108 = vld [vmem:[#allocation3 + $0x100] sm:$0xff]
    %v109 = vld [vmem:[#allocation3 + $0x108] sm:$0xff]
    %v110 = vld [vmem:[#allocation3 + $0x110] sm:$0xff]
    %v111 = vld [vmem:[#allocation3 + $0x118] sm:$0xff]
    %v112 = vld [vmem:[#allocation3 + $0x120] sm:$0xff]
    %v113 = vld [vmem:[#allocation3 + $0x128] sm:$0xff]
    %v114 = vld [vmem:[#allocation3 + $0x130] sm:$0xff]
    %v115 = vld [vmem:[#allocation3 + $0x138] sm:$0xff]
    %v116 = vld [vmem:[#allocation3 + $0x140] sm:$0xff]
    %v117 = vld [vmem:[#allocation3 + $0x148] sm:$0xff]
    %v118 = vld [vmem:[#allocation3 + $0x150] sm:$0xff]
    %v119 = vld [vmem:[#allocation3 + $0x158] sm:$0xff]
    %v120 = vld [vmem:[#allocation3 + $0x160] sm:$0xff]
    %v121 = vld [vmem:[#allocation3 + $0x168] sm:$0xff]
    %v122 = vld [vmem:[#allocation3 + $0x170] sm:$0xff]
    %v123 = vld [vmem:[#allocation3 + $0x178] sm:$0xff]
    %v124 = vld [vmem:[#allocation3 + $0x180] sm:$0xff]
    %v125 = vld [vmem:[#allocation3 + $0x188] sm:$0xff]
    %v126 = vld [vmem:[#allocation3 + $0x190] sm:$0xff]
    %v127 = vld [vmem:[#allocation3 + $0x198] sm:$0xff]
    %v128 = vld [vmem:[#allocation3 + $0x1a0] sm:$0xff]
    %v129 = vld [vmem:[#allocation3 + $0x1a8] sm:$0xff]
    %v130 = vld [vmem:[#allocation3 + $0x1b0] sm:$0xff]
    %v131 = vld [vmem:[#allocation3 + $0x1b8] sm:$0xff]
    %v132 = vld [vmem:[#allocation3 + $0x1c0] sm:$0xff]
    %v133 = vld [vmem:[#allocation3 + $0x1c8] sm:$0xff]
    %v134 = vld [vmem:[#allocation3 + $0x1d0] sm:$0xff]
    %v135 = vld [vmem:[#allocation3 + $0x1d8] sm:$0xff]
    %v136 = vld [vmem:[#allocation3 + $0x1e0] sm:$0xff]
    %v137 = vld [vmem:[#allocation3 + $0x1e8] sm:$0xff]
    %v138 = vld [vmem:[#allocation3 + $0x1f0] sm:$0xff]
    %v139 = vld [vmem:[#allocation3 + $0x1f8] sm:$0xff]
    %v140 = vld [vmem:[#allocation3 + $0x200] sm:$0xff]
    %v141 = vld [vmem:[#allocation3 + $0x208] sm:$0xff]
    %v142 = vld [vmem:[#allocation3 + $0x210] sm:$0xff]
    %v143 = vld [vmem:[#allocation3 + $0x218] sm:$0xff]
    %v144 = vld [vmem:[#allocation3 + $0x220] sm:$0xff]
    %v145 = vld [vmem:[#allocation3 + $0x228] sm:$0xff]
    %v146 = vld [vmem:[#allocation3 + $0x230] sm:$0xff]
    %v147 = vld [vmem:[#allocation3 + $0x238] sm:$0xff]
    %v148 = vld [vmem:[#allocation3 + $0x240] sm:$0xff]
    %v149 = vld [vmem:[#allocation3 + $0x248] sm:$0xff]
    %v150 = vld [vmem:[#allocation3 + $0x250] sm:$0xff]
    %v151 = vld [vmem:[#allocation3 + $0x258] sm:$0xff]
    %v152 = vld [vmem:[#allocation3 + $0x260] sm:$0xff]
    %v153 = vld [vmem:[#allocation3 + $0x268] sm:$0xff]
    %v154 = vld [vmem:[#allocation3 + $0x270] sm:$0xff]
    %v155 = vld [vmem:[#allocation3 + $0x278] sm:$0xff]
    %v156 = vld [vmem:[#allocation3 + $0x280] sm:$0xff]
    %v157 = vld [vmem:[#allocation3 + $0x288] sm:$0xff]
    %v158 = vld [vmem:[#allocation3 + $0x290] sm:$0xff]
    %v159 = vld [vmem:[#allocation3 + $0x298] sm:$0xff]
    %v160 = vld [vmem:[#allocation3 + $0x2a0] sm:$0xff]
    %v161 = vld [vmem:[#allocation3 + $0x2a8] sm:$0xff]
    %v162 = vld [vmem:[#allocation3 + $0x2b0] sm:$0xff]
    %v163 = vld [vmem:[#allocation3 + $0x2b8] sm:$0xff]
    %v164 = vld [vmem:[#allocation3 + $0x2c0] sm:$0xff]
    %v165 = vld [vmem:[#allocation3 + $0x2c8] sm:$0xff]
    %v166 = vld [vmem:[#allocation3 + $0x2d0] sm:$0xff]
    %v167 = vld [vmem:[#allocation3 + $0x2d8] sm:$0xff]
    %v168 = vld [vmem:[#allocation3 + $0x2e0] sm:$0xff]
    %v169 = vld [vmem:[#allocation3 + $0x2e8] sm:$0xff]
    %v170 = vld [vmem:[#allocation3 + $0x2f0] sm:$0xff]
    %v171 = vld [vmem:[#allocation3 + $0x2f8] sm:$0xff]
    %v172 = vld [vmem:[#allocation3 + $0x300] sm:$0xff]
    %v173 = vld [vmem:[#allocation3 + $0x308] sm:$0xff]
    %v174 = vld [vmem:[#allocation3 + $0x310] sm:$0xff]
    %v175 = vld [vmem:[#allocation3 + $0x318] sm:$0xff]
    %v176 = vld [vmem:[#allocation3 + $0x320] sm:$0xff]
    %v177 = vld [vmem:[#allocation3 + $0x328] sm:$0xff]
    %v178 = vld [vmem:[#allocation3 + $0x330] sm:$0xff]
    %v179 = vld [vmem:[#allocation3 + $0x338] sm:$0xff]
    %v180 = vld [vmem:[#allocation3 + $0x340] sm:$0xff]
    %v181 = vld [vmem:[#allocation3 + $0x348] sm:$0xff]
    %v182 = vld [vmem:[#allocation3 + $0x350] sm:$0xff]
    %v183 = vld [vmem:[#allocation3 + $0x358] sm:$0xff]
    %v184 = vld [vmem:[#allocation3 + $0x360] sm:$0xff]
    %v185 = vld [vmem:[#allocation3 + $0x368] sm:$0xff]
    %v186 = vld [vmem:[#allocation3 + $0x370] sm:$0xff]
    %v187 = vld [vmem:[#allocation3 + $0x378] sm:$0xff]
    %v188 = vld [vmem:[#allocation3 + $0x380] sm:$0xff]
    %v189 = vld [vmem:[#allocation3 + $0x388] sm:$0xff]
    %v190 = vld [vmem:[#allocation3 + $0x390] sm:$0xff]
    %v191 = vld [vmem:[#allocation3 + $0x398] sm:$0xff]
    %v192 = vld [vmem:[#allocation3 + $0x3a0] sm:$0xff]
    %v193 = vld [vmem:[#allocation3 + $0x3a8] sm:$0xff]
    %v194 = vld [vmem:[#allocation3 + $0x3b0] sm:$0xff]
    %v195 = vld [vmem:[#allocation3 + $0x3b8] sm:$0xff]
    %v196 = vld [vmem:[#allocation3 + $0x3c0] sm:$0xff]
    %v197 = vld [vmem:[#allocation3 + $0x3c8] sm:$0xff]
    %v198 = vld [vmem:[#allocation3 + $0x3d0] sm:$0xff]
    %v199 = vld [vmem:[#allocation3 + $0x3d8] sm:$0xff]
    %v200 = vld [vmem:[#allocation3 + $0x3e0] sm:$0xff]
    %v201 = vld [vmem:[#allocation3 + $0x3e8] sm:$0xff]
    %v202 = vld [vmem:[#allocation3 + $0x3f0] sm:$0xff]
    %v203 = vld [vmem:[#allocation3 + $0x3f8] sm:$0xff]
    %v204 = vld [vmem:[#allocation3 + $0x400] sm:$0xff]
    %v205 = vld [vmem:[#allocation3 + $0x408] sm:$0xff]
    %v206 = vld [vmem:[#allocation3 + $0x410] sm:$0xff]
    %v207 = vld [vmem:[#allocation3 + $0x418] sm:$0xff]
    %v208 = vld [vmem:[#allocation3 + $0x420] sm:$0xff]
    %v209 = vld [vmem:[#allocation3 + $0x428] sm:$0xff]
    %v210 = vld [vmem:[#allocation3 + $0x430] sm:$0xff]
    %v211 = vld [vmem:[#allocation3 + $0x438] sm:$0xff]
    %v212 = vld [vmem:[#allocation3 + $0x440] sm:$0xff]
    %v213 = vld [vmem:[#allocation3 + $0x448] sm:$0xff]
    %v214 = vld [vmem:[#allocation3 + $0x450] sm:$0xff]
    %v215 = vld [vmem:[#allocation3 + $0x458] sm:$0xff]
    %v216 = vld [vmem:[#allocation3 + $0x460] sm:$0xff]
    %v217 = vld [vmem:[#allocation3 + $0x468] sm:$0xff]
    %v218 = vld [vmem:[#allocation3 + $0x470] sm:$0xff]
    %v219 = vld [vmem:[#allocation3 + $0x478] sm:$0xff]
    %v220 = vld [vmem:[#allocation3 + $0x480] sm:$0xff]
    %v221 = vld [vmem:[#allocation3 + $0x488] sm:$0xff]
    %v222 = vld [vmem:[#allocation3 + $0x490] sm:$0xff]
    %v223 = vld [vmem:[#allocation3 + $0x498] sm:$0xff]
    %v224 = vld [vmem:[#allocation3 + $0x4a0] sm:$0xff]
    %v225 = vld [vmem:[#allocation3 + $0x4a8] sm:$0xff]
    %v226 = vld [vmem:[#allocation3 + $0x4b0] sm:$0xff]
    %v227 = vld [vmem:[#allocation3 + $0x4b8] sm:$0xff]
    %v228 = vld [vmem:[#allocation3 + $0x4c0] sm:$0xff]
    %v229 = vld [vmem:[#allocation3 + $0x4c8] sm:$0xff]
    %v230 = vld [vmem:[#allocation3 + $0x4d0] sm:$0xff]
    %v231 = vld [vmem:[#allocation3 + $0x4d8] sm:$0xff]
    %v232 = vld [vmem:[#allocation3 + $0x4e0] sm:$0xff]
    %v233 = vld [vmem:[#allocation3 + $0x4e8] sm:$0xff]
    %v234 = vld [vmem:[#allocation3 + $0x4f0] sm:$0xff]
    %v235 = vld [vmem:[#allocation3 + $0x4f8] sm:$0xff]
    %v236 = vld [vmem:[#allocation3 + $0x500] sm:$0xff]
    %v237 = vld [vmem:[#allocation3 + $0x508] sm:$0xff]
    %v238 = vld [vmem:[#allocation3 + $0x510] sm:$0xff]
    %v239 = vld [vmem:[#allocation3 + $0x518] sm:$0xff]
    %v240 = vld [vmem:[#allocation3 + $0x520] sm:$0xff]
    %v241 = vld [vmem:[#allocation3 + $0x528] sm:$0xff]
    %v242 = vld [vmem:[#allocation3 + $0x530] sm:$0xff]
    %v243 = vld [vmem:[#allocation3 + $0x538] sm:$0xff]
    %v244 = vld [vmem:[#allocation3 + $0x540] sm:$0xff]
    %v245 = vld [vmem:[#allocation3 + $0x548] sm:$0xff]
    %v246 = vld [vmem:[#allocation3 + $0x550] sm:$0xff]
    %v247 = vld [vmem:[#allocation3 + $0x558] sm:$0xff]
    %v248 = vld [vmem:[#allocation3 + $0x560] sm:$0xff]
    %v249 = vld [vmem:[#allocation3 + $0x568] sm:$0xff]
    %v250 = vld [vmem:[#allocation3 + $0x570] sm:$0xff]
    %v251 = vld [vmem:[#allocation3 + $0x578] sm:$0xff]
    %v252 = vld [vmem:[#allocation3 + $0x580] sm:$0xff]
    %v253 = vld [vmem:[#allocation3 + $0x588] sm:$0xff]
    %v254 = vld [vmem:[#allocation3 + $0x590] sm:$0xff]
    %v255 = vld [vmem:[#allocation3 + $0x598] sm:$0xff]
    %v256 = vld [vmem:[#allocation3 + $0x5a0] sm:$0xff]
    %v257 = vld [vmem:[#allocation3 + $0x5a8] sm:$0xff]
    %v258 = vld [vmem:[#allocation3 + $0x5b0] sm:$0xff]
    %v259 = vld [vmem:[#allocation3 + $0x5b8] sm:$0xff]
    %v260 = vld [vmem:[#allocation3 + $0x5c0] sm:$0xff]
    %v261 = vld [vmem:[#allocation3 + $0x5c8] sm:$0xff]
    %v262 = vld [vmem:[#allocation3 + $0x5d0] sm:$0xff]
    %v263 = vld [vmem:[#allocation3 + $0x5d8] sm:$0xff]
    %v264 = vld [vmem:[#allocation3 + $0x5e0] sm:$0xff]
    %v265 = vld [vmem:[#allocation3 + $0x5e8] sm:$0xff]
    %v266 = vld [vmem:[#allocation3 + $0x5f0] sm:$0xff]
    %v267 = vld [vmem:[#allocation3 + $0x5f8] sm:$0xff]
    %v268 = vld [vmem:[%s3] sm:$0xff]
    %v269 = vld [vmem:[%s3 + $0x8] sm:$0xf]
    %v272 = vlaneseq
    %v273 = vshrl.u32 %v272, 7
    %v274 = vsub.s32 0, %v273
    %v275 = vrot.slane %v268, %v274
    %v276 = vlaneseq
    %v277 = vshrl.u32 %v276, 7
    %v278 = vsub.s32 1, %v277
    %v279 = vrot.slane %v268, %v278
    %v280 = vlaneseq
    %v281 = vshrl.u32 %v280, 7
    %v282 = vsub.s32 2, %v281
    %v283 = vrot.slane %v268, %v282
    %v284 = vlaneseq
    %v285 = vshrl.u32 %v284, 7
    %v286 = vsub.s32 3, %v285
    %v287 = vrot.slane %v268, %v286
    %v288 = vlaneseq
    %v289 = vshrl.u32 %v288, 7
    %v290 = vsub.s32 4, %v289
    %v291 = vrot.slane %v268, %v290
    %v292 = vlaneseq
    %v293 = vshrl.u32 %v292, 7
    %v294 = vsub.s32 5, %v293
    %v295 = vrot.slane %v268, %v294
    %v296 = vlaneseq
    %v297 = vshrl.u32 %v296, 7
    %v298 = vsub.s32 6, %v297
    %v299 = vrot.slane %v268, %v298
    %v300 = vlaneseq
    %v301 = vshrl.u32 %v300, 7
    %v302 = vsub.s32 7, %v301
    %v303 = vrot.slane %v268, %v302
    %v304 = vlaneseq
    %v305 = vshrl.u32 %v304, 7
    %v306 = vsub.s32 0, %v305
    %v307 = vrot.slane %v269, %v306
    %v308 = vlaneseq
    %v309 = vshrl.u32 %v308, 7
    %v310 = vsub.s32 1, %v309
    %v311 = vrot.slane %v269, %v310
    %v312 = vlaneseq
    %v313 = vshrl.u32 %v312, 7
    %v314 = vsub.s32 2, %v313
    %v315 = vrot.slane %v269, %v314
    %v316 = vlaneseq
    %v317 = vshrl.u32 %v316, 7
    %v318 = vsub.s32 3, %v317
    %v319 = vrot.slane %v269, %v318
    %v524 = vunpack.c.l.b16 %v76
    %v525 = vunpack.c.h.b16 %v76
    %v526 = vunpack.c.l.b16 %v77
    %v527 = vunpack.c.h.b16 %v77
    %v528 = vunpack.c.l.b16 %v78
    %v529 = vunpack.c.h.b16 %v78
    %v530 = vunpack.c.l.b16 %v79
    %v531 = vunpack.c.h.b16 %v79
    %v532 = vunpack.c.l.b16 %v80
    %v533 = vunpack.c.h.b16 %v80
    %v534 = vunpack.c.l.b16 %v81
    %v535 = vunpack.c.h.b16 %v81
    %v536 = vunpack.c.l.b16 %v82
    %v537 = vunpack.c.h.b16 %v82
    %v538 = vunpack.c.l.b16 %v83
    %v539 = vunpack.c.h.b16 %v83
    %v540 = vunpack.c.l.b16 %v84
    %v541 = vunpack.c.h.b16 %v84
    %v542 = vunpack.c.l.b16 %v85
    %v543 = vunpack.c.h.b16 %v85
    %v544 = vunpack.c.l.b16 %v86
    %v545 = vunpack.c.h.b16 %v86
    %v546 = vunpack.c.l.b16 %v87
    %v547 = vunpack.c.h.b16 %v87
    %v548 = vunpack.c.l.b16 %v88
    %v549 = vunpack.c.h.b16 %v88
    %v550 = vunpack.c.l.b16 %v89
    %v551 = vunpack.c.h.b16 %v89
    %v552 = vunpack.c.l.b16 %v90
    %v553 = vunpack.c.h.b16 %v90
    %v554 = vunpack.c.l.b16 %v91
    %v555 = vunpack.c.h.b16 %v91
    %v556 = vunpack.c.l.b16 %v92
    %v557 = vunpack.c.h.b16 %v92
    %v558 = vunpack.c.l.b16 %v93
    %v559 = vunpack.c.h.b16 %v93
    %v560 = vunpack.c.l.b16 %v94
    %v561 = vunpack.c.h.b16 %v94
    %v562 = vunpack.c.l.b16 %v95
    %v563 = vunpack.c.h.b16 %v95
    %v564 = vunpack.c.l.b16 %v96
    %v565 = vunpack.c.h.b16 %v96
    %v566 = vunpack.c.l.b16 %v97
    %v567 = vunpack.c.h.b16 %v97
    %v568 = vunpack.c.l.b16 %v98
    %v569 = vunpack.c.h.b16 %v98
    %v570 = vunpack.c.l.b16 %v99
    %v571 = vunpack.c.h.b16 %v99
    %v572 = vunpack.c.l.b16 %v100
    %v573 = vunpack.c.h.b16 %v100
    %v574 = vunpack.c.l.b16 %v101
    %v575 = vunpack.c.h.b16 %v101
    %v576 = vunpack.c.l.b16 %v102
    %v577 = vunpack.c.h.b16 %v102
    %v578 = vunpack.c.l.b16 %v103
    %v579 = vunpack.c.h.b16 %v103
    %v580 = vunpack.c.l.b16 %v104
    %v581 = vunpack.c.h.b16 %v104
    %v582 = vunpack.c.l.b16 %v105
    %v583 = vunpack.c.h.b16 %v105
    %v584 = vunpack.c.l.b16 %v106
    %v585 = vunpack.c.h.b16 %v106
    %v586 = vunpack.c.l.b16 %v107
    %v587 = vunpack.c.h.b16 %v107
    %v588 = vunpack.c.l.b16 %v108
    %v589 = vunpack.c.h.b16 %v108
    %v590 = vunpack.c.l.b16 %v109
    %v591 = vunpack.c.h.b16 %v109
    %v592 = vunpack.c.l.b16 %v110
    %v593 = vunpack.c.h.b16 %v110
    %v594 = vunpack.c.l.b16 %v111
    %v595 = vunpack.c.h.b16 %v111
    %v596 = vunpack.c.l.b16 %v112
    %v597 = vunpack.c.h.b16 %v112
    %v598 = vunpack.c.l.b16 %v113
    %v599 = vunpack.c.h.b16 %v113
    %v600 = vunpack.c.l.b16 %v114
    %v601 = vunpack.c.h.b16 %v114
    %v602 = vunpack.c.l.b16 %v115
    %v603 = vunpack.c.h.b16 %v115
    %v604 = vunpack.c.l.b16 %v116
    %v605 = vunpack.c.h.b16 %v116
    %v606 = vunpack.c.l.b16 %v117
    %v607 = vunpack.c.h.b16 %v117
    %v608 = vunpack.c.l.b16 %v118
    %v609 = vunpack.c.h.b16 %v118
    %v610 = vunpack.c.l.b16 %v119
    %v611 = vunpack.c.h.b16 %v119
    %v612 = vunpack.c.l.b16 %v120
    %v613 = vunpack.c.h.b16 %v120
    %v614 = vunpack.c.l.b16 %v121
    %v615 = vunpack.c.h.b16 %v121
    %v616 = vunpack.c.l.b16 %v122
    %v617 = vunpack.c.h.b16 %v122
    %v618 = vunpack.c.l.b16 %v123
    %v619 = vunpack.c.h.b16 %v123
    %v620 = vunpack.c.l.b16 %v124
    %v621 = vunpack.c.h.b16 %v124
    %v622 = vunpack.c.l.b16 %v125
    %v623 = vunpack.c.h.b16 %v125
    %v624 = vunpack.c.l.b16 %v126
    %v625 = vunpack.c.h.b16 %v126
    %v626 = vunpack.c.l.b16 %v127
    %v627 = vunpack.c.h.b16 %v127
    %v628 = vunpack.c.l.b16 %v128
    %v629 = vunpack.c.h.b16 %v128
    %v630 = vunpack.c.l.b16 %v129
    %v631 = vunpack.c.h.b16 %v129
    %v632 = vunpack.c.l.b16 %v130
    %v633 = vunpack.c.h.b16 %v130
    %v634 = vunpack.c.l.b16 %v131
    %v635 = vunpack.c.h.b16 %v131
    %v636 = vunpack.c.l.b16 %v132
    %v637 = vunpack.c.h.b16 %v132
    %v638 = vunpack.c.l.b16 %v133
    %v639 = vunpack.c.h.b16 %v133
    %v640 = vunpack.c.l.b16 %v134
    %v641 = vunpack.c.h.b16 %v134
    %v642 = vunpack.c.l.b16 %v135
    %v643 = vunpack.c.h.b16 %v135
    %v644 = vunpack.c.l.b16 %v136
    %v645 = vunpack.c.h.b16 %v136
    %v646 = vunpack.c.l.b16 %v137
    %v647 = vunpack.c.h.b16 %v137
    %v648 = vunpack.c.l.b16 %v138
    %v649 = vunpack.c.h.b16 %v138
    %v650 = vunpack.c.l.b16 %v139
    %v651 = vunpack.c.h.b16 %v139
    %v652 = vunpack.c.l.b16 %v140
    %v653 = vunpack.c.h.b16 %v140
    %v654 = vunpack.c.l.b16 %v141
    %v655 = vunpack.c.h.b16 %v141
    %v656 = vunpack.c.l.b16 %v142
    %v657 = vunpack.c.h.b16 %v142
    %v658 = vunpack.c.l.b16 %v143
    %v659 = vunpack.c.h.b16 %v143
    %v660 = vunpack.c.l.b16 %v144
    %v661 = vunpack.c.h.b16 %v144
    %v662 = vunpack.c.l.b16 %v145
    %v663 = vunpack.c.h.b16 %v145
    %v664 = vunpack.c.l.b16 %v146
    %v665 = vunpack.c.h.b16 %v146
    %v666 = vunpack.c.l.b16 %v147
    %v667 = vunpack.c.h.b16 %v147
    %v668 = vunpack.c.l.b16 %v148
    %v669 = vunpack.c.h.b16 %v148
    %v670 = vunpack.c.l.b16 %v149
    %v671 = vunpack.c.h.b16 %v149
    %v672 = vunpack.c.l.b16 %v150
    %v673 = vunpack.c.h.b16 %v150
    %v674 = vunpack.c.l.b16 %v151
    %v675 = vunpack.c.h.b16 %v151
    %v676 = vunpack.c.l.b16 %v152
    %v677 = vunpack.c.h.b16 %v152
    %v678 = vunpack.c.l.b16 %v153
    %v679 = vunpack.c.h.b16 %v153
    %v680 = vunpack.c.l.b16 %v154
    %v681 = vunpack.c.h.b16 %v154
    %v682 = vunpack.c.l.b16 %v155
    %v683 = vunpack.c.h.b16 %v155
    %v684 = vunpack.c.l.b16 %v156
    %v685 = vunpack.c.h.b16 %v156
    %v686 = vunpack.c.l.b16 %v157
    %v687 = vunpack.c.h.b16 %v157
    %v688 = vunpack.c.l.b16 %v158
    %v689 = vunpack.c.h.b16 %v158
    %v690 = vunpack.c.l.b16 %v159
    %v691 = vunpack.c.h.b16 %v159
    %v692 = vunpack.c.l.b16 %v160
    %v693 = vunpack.c.h.b16 %v160
    %v694 = vunpack.c.l.b16 %v161
    %v695 = vunpack.c.h.b16 %v161
    %v696 = vunpack.c.l.b16 %v162
    %v697 = vunpack.c.h.b16 %v162
    %v698 = vunpack.c.l.b16 %v163
    %v699 = vunpack.c.h.b16 %v163
    %v700 = vunpack.c.l.b16 %v164
    %v701 = vunpack.c.h.b16 %v164
    %v702 = vunpack.c.l.b16 %v165
    %v703 = vunpack.c.h.b16 %v165
    %v704 = vunpack.c.l.b16 %v166
    %v705 = vunpack.c.h.b16 %v166
    %v706 = vunpack.c.l.b16 %v167
    %v707 = vunpack.c.h.b16 %v167
    %v708 = vunpack.c.l.b16 %v168
    %v709 = vunpack.c.h.b16 %v168
    %v710 = vunpack.c.l.b16 %v169
    %v711 = vunpack.c.h.b16 %v169
    %v712 = vunpack.c.l.b16 %v170
    %v713 = vunpack.c.h.b16 %v170
    %v714 = vunpack.c.l.b16 %v171
    %v715 = vunpack.c.h.b16 %v171
    %v716 = vunpack.c.l.b16 %v172
    %v717 = vunpack.c.h.b16 %v172
    %v718 = vunpack.c.l.b16 %v173
    %v719 = vunpack.c.h.b16 %v173
    %v720 = vunpack.c.l.b16 %v174
    %v721 = vunpack.c.h.b16 %v174
    %v722 = vunpack.c.l.b16 %v175
    %v723 = vunpack.c.h.b16 %v175
    %v724 = vunpack.c.l.b16 %v176
    %v725 = vunpack.c.h.b16 %v176
    %v726 = vunpack.c.l.b16 %v177
    %v727 = vunpack.c.h.b16 %v177
    %v728 = vunpack.c.l.b16 %v178
    %v729 = vunpack.c.h.b16 %v178
    %v730 = vunpack.c.l.b16 %v179
    %v731 = vunpack.c.h.b16 %v179
    %v732 = vunpack.c.l.b16 %v180
    %v733 = vunpack.c.h.b16 %v180
    %v734 = vunpack.c.l.b16 %v181
    %v735 = vunpack.c.h.b16 %v181
    %v736 = vunpack.c.l.b16 %v182
    %v737 = vunpack.c.h.b16 %v182
    %v738 = vunpack.c.l.b16 %v183
    %v739 = vunpack.c.h.b16 %v183
    %v740 = vunpack.c.l.b16 %v184
    %v741 = vunpack.c.h.b16 %v184
    %v742 = vunpack.c.l.b16 %v185
    %v743 = vunpack.c.h.b16 %v185
    %v744 = vunpack.c.l.b16 %v186
    %v745 = vunpack.c.h.b16 %v186
    %v746 = vunpack.c.l.b16 %v187
    %v747 = vunpack.c.h.b16 %v187
    %v748 = vunpack.c.l.b16 %v188
    %v749 = vunpack.c.h.b16 %v188
    %v750 = vunpack.c.l.b16 %v189
    %v751 = vunpack.c.h.b16 %v189
    %v752 = vunpack.c.l.b16 %v190
    %v753 = vunpack.c.h.b16 %v190
    %v754 = vunpack.c.l.b16 %v191
    %v755 = vunpack.c.h.b16 %v191
    %v756 = vunpack.c.l.b16 %v192
    %v757 = vunpack.c.h.b16 %v192
    %v758 = vunpack.c.l.b16 %v193
    %v759 = vunpack.c.h.b16 %v193
    %v760 = vunpack.c.l.b16 %v194
    %v761 = vunpack.c.h.b16 %v194
    %v762 = vunpack.c.l.b16 %v195
    %v763 = vunpack.c.h.b16 %v195
    %v764 = vunpack.c.l.b16 %v196
    %v765 = vunpack.c.h.b16 %v196
    %v766 = vunpack.c.l.b16 %v197
    %v767 = vunpack.c.h.b16 %v197
    %v768 = vunpack.c.l.b16 %v198
    %v769 = vunpack.c.h.b16 %v198
    %v770 = vunpack.c.l.b16 %v199
    %v771 = vunpack.c.h.b16 %v199
    %v772 = vunpack.c.l.b16 %v200
    %v773 = vunpack.c.h.b16 %v200
    %v774 = vunpack.c.l.b16 %v201
    %v775 = vunpack.c.h.b16 %v201
    %v776 = vunpack.c.l.b16 %v202
    %v777 = vunpack.c.h.b16 %v202
    %v778 = vunpack.c.l.b16 %v203
    %v779 = vunpack.c.h.b16 %v203
    %v780 = vunpack.c.l.b16 %v204
    %v781 = vunpack.c.h.b16 %v204
    %v782 = vunpack.c.l.b16 %v205
    %v783 = vunpack.c.h.b16 %v205
    %v784 = vunpack.c.l.b16 %v206
    %v785 = vunpack.c.h.b16 %v206
    %v786 = vunpack.c.l.b16 %v207
    %v787 = vunpack.c.h.b16 %v207
    %v788 = vunpack.c.l.b16 %v208
    %v789 = vunpack.c.h.b16 %v208
    %v790 = vunpack.c.l.b16 %v209
    %v791 = vunpack.c.h.b16 %v209
    %v792 = vunpack.c.l.b16 %v210
    %v793 = vunpack.c.h.b16 %v210
    %v794 = vunpack.c.l.b16 %v211
    %v795 = vunpack.c.h.b16 %v211
    %v796 = vunpack.c.l.b16 %v212
    %v797 = vunpack.c.h.b16 %v212
    %v798 = vunpack.c.l.b16 %v213
    %v799 = vunpack.c.h.b16 %v213
    %v800 = vunpack.c.l.b16 %v214
    %v801 = vunpack.c.h.b16 %v214
    %v802 = vunpack.c.l.b16 %v215
    %v803 = vunpack.c.h.b16 %v215
    %v804 = vunpack.c.l.b16 %v216
    %v805 = vunpack.c.h.b16 %v216
    %v806 = vunpack.c.l.b16 %v217
    %v807 = vunpack.c.h.b16 %v217
    %v808 = vunpack.c.l.b16 %v218
    %v809 = vunpack.c.h.b16 %v218
    %v810 = vunpack.c.l.b16 %v219
    %v811 = vunpack.c.h.b16 %v219
    %v812 = vunpack.c.l.b16 %v220
    %v813 = vunpack.c.h.b16 %v220
    %v814 = vunpack.c.l.b16 %v221
    %v815 = vunpack.c.h.b16 %v221
    %v816 = vunpack.c.l.b16 %v222
    %v817 = vunpack.c.h.b16 %v222
    %v818 = vunpack.c.l.b16 %v223
    %v819 = vunpack.c.h.b16 %v223
    %v820 = vunpack.c.l.b16 %v224
    %v821 = vunpack.c.h.b16 %v224
    %v822 = vunpack.c.l.b16 %v225
    %v823 = vunpack.c.h.b16 %v225
    %v824 = vunpack.c.l.b16 %v226
    %v825 = vunpack.c.h.b16 %v226
    %v826 = vunpack.c.l.b16 %v227
    %v827 = vunpack.c.h.b16 %v227
    %v828 = vunpack.c.l.b16 %v228
    %v829 = vunpack.c.h.b16 %v228
    %v830 = vunpack.c.l.b16 %v229
    %v831 = vunpack.c.h.b16 %v229
    %v832 = vunpack.c.l.b16 %v230
    %v833 = vunpack.c.h.b16 %v230
    %v834 = vunpack.c.l.b16 %v231
    %v835 = vunpack.c.h.b16 %v231
    %v836 = vunpack.c.l.b16 %v232
    %v837 = vunpack.c.h.b16 %v232
    %v838 = vunpack.c.l.b16 %v233
    %v839 = vunpack.c.h.b16 %v233
    %v840 = vunpack.c.l.b16 %v234
    %v841 = vunpack.c.h.b16 %v234
    %v842 = vunpack.c.l.b16 %v235
    %v843 = vunpack.c.h.b16 %v235
    %v844 = vunpack.c.l.b16 %v236
    %v845 = vunpack.c.h.b16 %v236
    %v846 = vunpack.c.l.b16 %v237
    %v847 = vunpack.c.h.b16 %v237
    %v848 = vunpack.c.l.b16 %v238
    %v849 = vunpack.c.h.b16 %v238
    %v850 = vunpack.c.l.b16 %v239
    %v851 = vunpack.c.h.b16 %v239
    %v852 = vunpack.c.l.b16 %v240
    %v853 = vunpack.c.h.b16 %v240
    %v854 = vunpack.c.l.b16 %v241
    %v855 = vunpack.c.h.b16 %v241
    %v856 = vunpack.c.l.b16 %v242
    %v857 = vunpack.c.h.b16 %v242
    %v858 = vunpack.c.l.b16 %v243
    %v859 = vunpack.c.h.b16 %v243
    %v860 = vunpack.c.l.b16 %v244
    %v861 = vunpack.c.h.b16 %v244
    %v862 = vunpack.c.l.b16 %v245
    %v863 = vunpack.c.h.b16 %v245
    %v864 = vunpack.c.l.b16 %v246
    %v865 = vunpack.c.h.b16 %v246
    %v866 = vunpack.c.l.b16 %v247
    %v867 = vunpack.c.h.b16 %v247
    %v868 = vunpack.c.l.b16 %v248
    %v869 = vunpack.c.h.b16 %v248
    %v870 = vunpack.c.l.b16 %v249
    %v871 = vunpack.c.h.b16 %v249
    %v872 = vunpack.c.l.b16 %v250
    %v873 = vunpack.c.h.b16 %v250
    %v874 = vunpack.c.l.b16 %v251
    %v875 = vunpack.c.h.b16 %v251
    %v876 = vunpack.c.l.b16 %v252
    %v877 = vunpack.c.h.b16 %v252
    %v878 = vunpack.c.l.b16 %v253
    %v879 = vunpack.c.h.b16 %v253
    %v880 = vunpack.c.l.b16 %v254
    %v881 = vunpack.c.h.b16 %v254
    %v882 = vunpack.c.l.b16 %v255
    %v883 = vunpack.c.h.b16 %v255
    %v884 = vunpack.c.l.b16 %v256
    %v885 = vunpack.c.h.b16 %v256
    %v886 = vunpack.c.l.b16 %v257
    %v887 = vunpack.c.h.b16 %v257
    %v888 = vunpack.c.l.b16 %v258
    %v889 = vunpack.c.h.b16 %v258
    %v890 = vunpack.c.l.b16 %v259
    %v891 = vunpack.c.h.b16 %v259
    %v892 = vunpack.c.l.b16 %v260
    %v893 = vunpack.c.h.b16 %v260
    %v894 = vunpack.c.l.b16 %v261
    %v895 = vunpack.c.h.b16 %v261
    %v896 = vunpack.c.l.b16 %v262
    %v897 = vunpack.c.h.b16 %v262
    %v898 = vunpack.c.l.b16 %v263
    %v899 = vunpack.c.h.b16 %v263
    %v900 = vunpack.c.l.b16 %v264
    %v901 = vunpack.c.h.b16 %v264
    %v902 = vunpack.c.l.b16 %v265
    %v903 = vunpack.c.h.b16 %v265
    %v904 = vunpack.c.l.b16 %v266
    %v905 = vunpack.c.h.b16 %v266
    %v906 = vunpack.c.l.b16 %v267
    %v907 = vunpack.c.h.b16 %v267
    %v908 = vpack.c.b16 %v536, %v524
    %v909 = vpack.c.b16 %v537, %v525
    %v910 = vpack.c.b16 %v538, %v526
    %v911 = vpack.c.b16 %v539, %v527
    %v912 = vpack.c.b16 %v540, %v528
    %v913 = vpack.c.b16 %v541, %v529
    %v914 = vpack.c.b16 %v542, %v530
    %v915 = vpack.c.b16 %v543, %v531
    %v916 = vpack.c.b16 %v544, %v532
    %v917 = vpack.c.b16 %v545, %v533
    %v918 = vpack.c.b16 %v546, %v534
    %v919 = vpack.c.b16 %v547, %v535
    %v920 = vpack.c.b16 %v560, %v548
    %v921 = vpack.c.b16 %v561, %v549
    %v922 = vpack.c.b16 %v562, %v550
    %v923 = vpack.c.b16 %v563, %v551
    %v924 = vpack.c.b16 %v564, %v552
    %v925 = vpack.c.b16 %v565, %v553
    %v926 = vpack.c.b16 %v566, %v554
    %v927 = vpack.c.b16 %v567, %v555
    %v928 = vpack.c.b16 %v568, %v556
    %v929 = vpack.c.b16 %v569, %v557
    %v930 = vpack.c.b16 %v570, %v558
    %v931 = vpack.c.b16 %v571, %v559
    %v932 = vpack.c.b16 %v584, %v572
    %v933 = vpack.c.b16 %v585, %v573
    %v934 = vpack.c.b16 %v586, %v574
    %v935 = vpack.c.b16 %v587, %v575
    %v936 = vpack.c.b16 %v588, %v576
    %v937 = vpack.c.b16 %v589, %v577
    %v938 = vpack.c.b16 %v590, %v578
    %v939 = vpack.c.b16 %v591, %v579
    %v940 = vpack.c.b16 %v592, %v580
    %v941 = vpack.c.b16 %v593, %v581
    %v942 = vpack.c.b16 %v594, %v582
    %v943 = vpack.c.b16 %v595, %v583
    %v944 = vpack.c.b16 %v608, %v596
    %v945 = vpack.c.b16 %v609, %v597
    %v946 = vpack.c.b16 %v610, %v598
    %v947 = vpack.c.b16 %v611, %v599
    %v948 = vpack.c.b16 %v612, %v600
    %v949 = vpack.c.b16 %v613, %v601
    %v950 = vpack.c.b16 %v614, %v602
    %v951 = vpack.c.b16 %v615, %v603
    %v952 = vpack.c.b16 %v616, %v604
    %v953 = vpack.c.b16 %v617, %v605
    %v954 = vpack.c.b16 %v618, %v606
    %v955 = vpack.c.b16 %v619, %v607
    %v956 = vpack.c.b16 %v632, %v620
    %v957 = vpack.c.b16 %v633, %v621
    %v958 = vpack.c.b16 %v634, %v622
    %v959 = vpack.c.b16 %v635, %v623
    %v960 = vpack.c.b16 %v636, %v624
    %v961 = vpack.c.b16 %v637, %v625
    %v962 = vpack.c.b16 %v638, %v626
    %v963 = vpack.c.b16 %v639, %v627
    %v964 = vpack.c.b16 %v640, %v628
    %v965 = vpack.c.b16 %v641, %v629
    %v966 = vpack.c.b16 %v642, %v630
    %v967 = vpack.c.b16 %v643, %v631
    %v968 = vpack.c.b16 %v656, %v644
    %v969 = vpack.c.b16 %v657, %v645
    %v970 = vpack.c.b16 %v658, %v646
    %v971 = vpack.c.b16 %v659, %v647
    %v972 = vpack.c.b16 %v660, %v648
    %v973 = vpack.c.b16 %v661, %v649
    %v974 = vpack.c.b16 %v662, %v650
    %v975 = vpack.c.b16 %v663, %v651
    %v976 = vpack.c.b16 %v664, %v652
    %v977 = vpack.c.b16 %v665, %v653
    %v978 = vpack.c.b16 %v666, %v654
    %v979 = vpack.c.b16 %v667, %v655
    %v980 = vpack.c.b16 %v680, %v668
    %v981 = vpack.c.b16 %v681, %v669
    %v982 = vpack.c.b16 %v682, %v670
    %v983 = vpack.c.b16 %v683, %v671
    %v984 = vpack.c.b16 %v684, %v672
    %v985 = vpack.c.b16 %v685, %v673
    %v986 = vpack.c.b16 %v686, %v674
    %v987 = vpack.c.b16 %v687, %v675
    %v988 = vpack.c.b16 %v688, %v676
    %v989 = vpack.c.b16 %v689, %v677
    %v990 = vpack.c.b16 %v690, %v678
    %v991 = vpack.c.b16 %v691, %v679
    %v992 = vpack.c.b16 %v704, %v692
    %v993 = vpack.c.b16 %v705, %v693
    %v994 = vpack.c.b16 %v706, %v694
    %v995 = vpack.c.b16 %v707, %v695
    %v996 = vpack.c.b16 %v708, %v696
    %v997 = vpack.c.b16 %v709, %v697
    %v998 = vpack.c.b16 %v710, %v698
    %v999 = vpack.c.b16 %v711, %v699
    %v1000 = vpack.c.b16 %v712, %v700
    %v1001 = vpack.c.b16 %v713, %v701
    %v1002 = vpack.c.b16 %v714, %v702
    %v1003 = vpack.c.b16 %v715, %v703
    %v1004 = vpack.c.b16 %v728, %v716
    %v1005 = vpack.c.b16 %v729, %v717
    %v1006 = vpack.c.b16 %v730, %v718
    %v1007 = vpack.c.b16 %v731, %v719
    %v1008 = vpack.c.b16 %v732, %v720
    %v1009 = vpack.c.b16 %v733, %v721
    %v1010 = vpack.c.b16 %v734, %v722
    %v1011 = vpack.c.b16 %v735, %v723
    %v1012 = vpack.c.b16 %v736, %v724
    %v1013 = vpack.c.b16 %v737, %v725
    %v1014 = vpack.c.b16 %v738, %v726
    %v1015 = vpack.c.b16 %v739, %v727
    %v1016 = vpack.c.b16 %v752, %v740
    %v1017 = vpack.c.b16 %v753, %v741
    %v1018 = vpack.c.b16 %v754, %v742
    %v1019 = vpack.c.b16 %v755, %v743
    %v1020 = vpack.c.b16 %v756, %v744
    %v1021 = vpack.c.b16 %v757, %v745
    %v1022 = vpack.c.b16 %v758, %v746
    %v1023 = vpack.c.b16 %v759, %v747
    %v1024 = vpack.c.b16 %v760, %v748
    %v1025 = vpack.c.b16 %v761, %v749
    %v1026 = vpack.c.b16 %v762, %v750
    %v1027 = vpack.c.b16 %v763, %v751
    %v1028 = vpack.c.b16 %v776, %v764
    %v1029 = vpack.c.b16 %v777, %v765
    %v1030 = vpack.c.b16 %v778, %v766
    %v1031 = vpack.c.b16 %v779, %v767
    %v1032 = vpack.c.b16 %v780, %v768
    %v1033 = vpack.c.b16 %v781, %v769
    %v1034 = vpack.c.b16 %v782, %v770
    %v1035 = vpack.c.b16 %v783, %v771
    %v1036 = vpack.c.b16 %v784, %v772
    %v1037 = vpack.c.b16 %v785, %v773
    %v1038 = vpack.c.b16 %v786, %v774
    %v1039 = vpack.c.b16 %v787, %v775
    %v1040 = vpack.c.b16 %v800, %v788
    %v1041 = vpack.c.b16 %v801, %v789
    %v1042 = vpack.c.b16 %v802, %v790
    %v1043 = vpack.c.b16 %v803, %v791
    %v1044 = vpack.c.b16 %v804, %v792
    %v1045 = vpack.c.b16 %v805, %v793
    %v1046 = vpack.c.b16 %v806, %v794
    %v1047 = vpack.c.b16 %v807, %v795
    %v1048 = vpack.c.b16 %v808, %v796
    %v1049 = vpack.c.b16 %v809, %v797
    %v1050 = vpack.c.b16 %v810, %v798
    %v1051 = vpack.c.b16 %v811, %v799
    %v1052 = vpack.c.b16 %v824, %v812
    %v1053 = vpack.c.b16 %v825, %v813
    %v1054 = vpack.c.b16 %v826, %v814
    %v1055 = vpack.c.b16 %v827, %v815
    %v1056 = vpack.c.b16 %v828, %v816
    %v1057 = vpack.c.b16 %v829, %v817
    %v1058 = vpack.c.b16 %v830, %v818
    %v1059 = vpack.c.b16 %v831, %v819
    %v1060 = vpack.c.b16 %v832, %v820
    %v1061 = vpack.c.b16 %v833, %v821
    %v1062 = vpack.c.b16 %v834, %v822
    %v1063 = vpack.c.b16 %v835, %v823
    %v1064 = vpack.c.b16 %v848, %v836
    %v1065 = vpack.c.b16 %v849, %v837
    %v1066 = vpack.c.b16 %v850, %v838
    %v1067 = vpack.c.b16 %v851, %v839
    %v1068 = vpack.c.b16 %v852, %v840
    %v1069 = vpack.c.b16 %v853, %v841
    %v1070 = vpack.c.b16 %v854, %v842
    %v1071 = vpack.c.b16 %v855, %v843
    %v1072 = vpack.c.b16 %v856, %v844
    %v1073 = vpack.c.b16 %v857, %v845
    %v1074 = vpack.c.b16 %v858, %v846
    %v1075 = vpack.c.b16 %v859, %v847
    %v1076 = vpack.c.b16 %v872, %v860
    %v1077 = vpack.c.b16 %v873, %v861
    %v1078 = vpack.c.b16 %v874, %v862
    %v1079 = vpack.c.b16 %v875, %v863
    %v1080 = vpack.c.b16 %v876, %v864
    %v1081 = vpack.c.b16 %v877, %v865
    %v1082 = vpack.c.b16 %v878, %v866
    %v1083 = vpack.c.b16 %v879, %v867
    %v1084 = vpack.c.b16 %v880, %v868
    %v1085 = vpack.c.b16 %v881, %v869
    %v1086 = vpack.c.b16 %v882, %v870
    %v1087 = vpack.c.b16 %v883, %v871
    %v1088 = vpack.c.b16 %v896, %v884
    %v1089 = vpack.c.b16 %v897, %v885
    %v1090 = vpack.c.b16 %v898, %v886
    %v1091 = vpack.c.b16 %v899, %v887
    %v1092 = vpack.c.b16 %v900, %v888
    %v1093 = vpack.c.b16 %v901, %v889
    %v1094 = vpack.c.b16 %v902, %v890
    %v1095 = vpack.c.b16 %v903, %v891
    %v1096 = vpack.c.b16 %v904, %v892
    %v1097 = vpack.c.b16 %v905, %v893
    %v1098 = vpack.c.b16 %v906, %v894
    %v1099 = vpack.c.b16 %v907, %v895
    %1292 = vmatprep.subr.bf16.mxu0 %v909
    %1293 = vmatpush1.bf16.msra.mxu0 %v908
    %1294 = vmatprep.subr.bf16.mxu0 %v921
    %1295 = vmatpush1.bf16.msra.mxu0 %v920
    %1296 = vmatprep.subr.bf16.mxu0 %v933
    %1297 = vmatpush1.bf16.msra.mxu0 %v932
    %1298 = vmatprep.subr.bf16.mxu0 %v945
    %1299 = vmatpush1.bf16.msra.mxu0 %v944
    %1300 = vmatprep.subr.bf16.mxu0 %v957
    %1301 = vmatpush1.bf16.msra.mxu0 %v956
    %1302 = vmatprep.subr.bf16.mxu0 %v969
    %1303 = vmatpush1.bf16.msra.mxu0 %v968
    %1304 = vmatprep.subr.bf16.mxu0 %v981
    %1305 = vmatpush1.bf16.msra.mxu0 %v980
    %1306 = vmatprep.subr.bf16.mxu0 %v993
    %1307 = vmatpush1.bf16.msra.mxu0 %v992
    %1308 = vmatprep.subr.bf16.mxu0 %v1005
    %1309 = vmatpush1.bf16.msra.mxu0 %v1004
    %1310 = vmatprep.subr.bf16.mxu0 %v1017
    %1311 = vmatpush1.bf16.msra.mxu0 %v1016
    %1312 = vmatprep.subr.bf16.mxu0 %v1029
    %1313 = vmatpush1.bf16.msra.mxu0 %v1028
    %1314 = vmatprep.subr.bf16.mxu0 %v1041
    %1315 = vmatpush1.bf16.msra.mxu0 %v1040
    %1316 = vmatprep.subr.bf16.mxu0 %v1053
    %1317 = vmatpush1.bf16.msra.mxu0 %v1052
    %1318 = vmatprep.subr.bf16.mxu0 %v1065
    %1319 = vmatpush1.bf16.msra.mxu0 %v1064
    %1320 = vmatprep.subr.bf16.mxu0 %v1077
    %1321 = vmatpush1.bf16.msra.mxu0 %v1076
    %1322 = vmatprep.subr.bf16.mxu0 %v1089
    %1323 = vmatpush1.bf16.msra.mxu0 %v1088
    %1324 = vmatprep.mubr.bf16.mxu0 %v75
    %1325 = vmatmul.mubr.bf16.gmra.mrb[0].mxu0 %v74
    %v1326 = vpop.f32.mrb[0].mxu0
    %v1327 = vadd.f32 %v275, %v1326
    %v1328 = vpop.f32.mrb[0].mxu0
    %v1329 = vadd.f32 %v279, %v1328
    %v1330 = vpop.f32.mrb[0].mxu0
    %v1331 = vadd.f32 %v275, %v1330
    %v1332 = vpop.f32.mrb[0].mxu0
    %v1333 = vadd.f32 %v279, %v1332
    %1334 = vdwg.mxu0
    %1335 = vmatprep.subr.bf16.mxu0 %v911
    %1336 = vmatpush1.bf16.msra.mxu0 %v910
    %1337 = vmatprep.subr.bf16.mxu0 %v923
    %1338 = vmatpush1.bf16.msra.mxu0 %v922
    %1339 = vmatprep.subr.bf16.mxu0 %v935
    %1340 = vmatpush1.bf16.msra.mxu0 %v934
    %1341 = vmatprep.subr.bf16.mxu0 %v947
    %1342 = vmatpush1.bf16.msra.mxu0 %v946
    %1343 = vmatprep.subr.bf16.mxu0 %v959
    %1344 = vmatpush1.bf16.msra.mxu0 %v958
    %1345 = vmatprep.subr.bf16.mxu0 %v971
    %1346 = vmatpush1.bf16.msra.mxu0 %v970
    %1347 = vmatprep.subr.bf16.mxu0 %v983
    %1348 = vmatpush1.bf16.msra.mxu0 %v982
    %1349 = vmatprep.subr.bf16.mxu0 %v995
    %1350 = vmatpush1.bf16.msra.mxu0 %v994
    %1351 = vmatprep.subr.bf16.mxu0 %v1007
    %1352 = vmatpush1.bf16.msra.mxu0 %v1006
    %1353 = vmatprep.subr.bf16.mxu0 %v1019
    %1354 = vmatpush1.bf16.msra.mxu0 %v1018
    %1355 = vmatprep.subr.bf16.mxu0 %v1031
    %1356 = vmatpush1.bf16.msra.mxu0 %v1030
    %1357 = vmatprep.subr.bf16.mxu0 %v1043
    %1358 = vmatpush1.bf16.msra.mxu0 %v1042
    %1359 = vmatprep.subr.bf16.mxu0 %v1055
    %1360 = vmatpush1.bf16.msra.mxu0 %v1054
    %1361 = vmatprep.subr.bf16.mxu0 %v1067
    %1362 = vmatpush1.bf16.msra.mxu0 %v1066
    %1363 = vmatprep.subr.bf16.mxu0 %v1079
    %1364 = vmatpush1.bf16.msra.mxu0 %v1078
    %1365 = vmatprep.subr.bf16.mxu0 %v1091
    %1366 = vmatpush1.bf16.msra.mxu0 %v1090
    %1367 = vmatprep.mubr.bf16.mxu0 %v75
    %1368 = vmatmul.mubr.bf16.gmra.mrb[0].mxu0 %v74
    %v1369 = vpop.f32.mrb[0].mxu0
    %v1370 = vadd.f32 %v283, %v1369
    %v1371 = vpop.f32.mrb[0].mxu0
    %v1372 = vadd.f32 %v287, %v1371
    %v1373 = vpop.f32.mrb[0].mxu0
    %v1374 = vadd.f32 %v283, %v1373
    %v1375 = vpop.f32.mrb[0].mxu0
    %v1376 = vadd.f32 %v287, %v1375
    %1377 = vdwg.mxu0
    %1378 = vmatprep.subr.bf16.mxu0 %v913
    %1379 = vmatpush1.bf16.msra.mxu0 %v912
    %1380 = vmatprep.subr.bf16.mxu0 %v925
    %1381 = vmatpush1.bf16.msra.mxu0 %v924
    %1382 = vmatprep.subr.bf16.mxu0 %v937
    %1383 = vmatpush1.bf16.msra.mxu0 %v936
    %1384 = vmatprep.subr.bf16.mxu0 %v949
    %1385 = vmatpush1.bf16.msra.mxu0 %v948
    %1386 = vmatprep.subr.bf16.mxu0 %v961
    %1387 = vmatpush1.bf16.msra.mxu0 %v960
    %1388 = vmatprep.subr.bf16.mxu0 %v973
    %1389 = vmatpush1.bf16.msra.mxu0 %v972
    %1390 = vmatprep.subr.bf16.mxu0 %v985
    %1391 = vmatpush1.bf16.msra.mxu0 %v984
    %1392 = vmatprep.subr.bf16.mxu0 %v997
    %1393 = vmatpush1.bf16.msra.mxu0 %v996
    %1394 = vmatprep.subr.bf16.mxu0 %v1009
    %1395 = vmatpush1.bf16.msra.mxu0 %v1008
    %1396 = vmatprep.subr.bf16.mxu0 %v1021
    %1397 = vmatpush1.bf16.msra.mxu0 %v1020
    %1398 = vmatprep.subr.bf16.mxu0 %v1033
    %1399 = vmatpush1.bf16.msra.mxu0 %v1032
    %1400 = vmatprep.subr.bf16.mxu0 %v1045
    %1401 = vmatpush1.bf16.msra.mxu0 %v1044
    %1402 = vmatprep.subr.bf16.mxu0 %v1057
    %1403 = vmatpush1.bf16.msra.mxu0 %v1056
    %1404 = vmatprep.subr.bf16.mxu0 %v1069
    %1405 = vmatpush1.bf16.msra.mxu0 %v1068
    %1406 = vmatprep.subr.bf16.mxu0 %v1081
    %1407 = vmatpush1.bf16.msra.mxu0 %v1080
    %1408 = vmatprep.subr.bf16.mxu0 %v1093
    %1409 = vmatpush1.bf16.msra.mxu0 %v1092
    %1410 = vmatprep.mubr.bf16.mxu0 %v75
    %1411 = vmatmul.mubr.bf16.gmra.mrb[0].mxu0 %v74
    %v1412 = vpop.f32.mrb[0].mxu0
    %v1413 = vadd.f32 %v291, %v1412
    %v1414 = vpop.f32.mrb[0].mxu0
    %v1415 = vadd.f32 %v295, %v1414
    %v1416 = vpop.f32.mrb[0].mxu0
    %v1417 = vadd.f32 %v291, %v1416
    %v1418 = vpop.f32.mrb[0].mxu0
    %v1419 = vadd.f32 %v295, %v1418
    %1420 = vdwg.mxu0
    %1421 = vmatprep.subr.bf16.mxu0 %v915
    %1422 = vmatpush1.bf16.msra.mxu0 %v914
    %1423 = vmatprep.subr.bf16.mxu0 %v927
    %1424 = vmatpush1.bf16.msra.mxu0 %v926
    %1425 = vmatprep.subr.bf16.mxu0 %v939
    %1426 = vmatpush1.bf16.msra.mxu0 %v938
    %1427 = vmatprep.subr.bf16.mxu0 %v951
    %1428 = vmatpush1.bf16.msra.mxu0 %v950
    %1429 = vmatprep.subr.bf16.mxu0 %v963
    %1430 = vmatpush1.bf16.msra.mxu0 %v962
    %1431 = vmatprep.subr.bf16.mxu0 %v975
    %1432 = vmatpush1.bf16.msra.mxu0 %v974
    %1433 = vmatprep.subr.bf16.mxu0 %v987
    %1434 = vmatpush1.bf16.msra.mxu0 %v986
    %1435 = vmatprep.subr.bf16.mxu0 %v999
    %1436 = vmatpush1.bf16.msra.mxu0 %v998
    %1437 = vmatprep.subr.bf16.mxu0 %v1011
    %1438 = vmatpush1.bf16.msra.mxu0 %v1010
    %1439 = vmatprep.subr.bf16.mxu0 %v1023
    %1440 = vmatpush1.bf16.msra.mxu0 %v1022
    %1441 = vmatprep.subr.bf16.mxu0 %v1035
    %1442 = vmatpush1.bf16.msra.mxu0 %v1034
    %1443 = vmatprep.subr.bf16.mxu0 %v1047
    %1444 = vmatpush1.bf16.msra.mxu0 %v1046
    %1445 = vmatprep.subr.bf16.mxu0 %v1059
    %1446 = vmatpush1.bf16.msra.mxu0 %v1058
    %1447 = vmatprep.subr.bf16.mxu0 %v1071
    %1448 = vmatpush1.bf16.msra.mxu0 %v1070
    %1449 = vmatprep.subr.bf16.mxu0 %v1083
    %1450 = vmatpush1.bf16.msra.mxu0 %v1082
    %1451 = vmatprep.subr.bf16.mxu0 %v1095
    %1452 = vmatpush1.bf16.msra.mxu0 %v1094
    %1453 = vmatprep.mubr.bf16.mxu0 %v75
    %1454 = vmatmul.mubr.bf16.gmra.mrb[0].mxu0 %v74
    %v1455 = vpop.f32.mrb[0].mxu0
    %v1456 = vadd.f32 %v299, %v1455
    %v1457 = vpop.f32.mrb[0].mxu0
    %v1458 = vadd.f32 %v303, %v1457
    %v1459 = vpop.f32.mrb[0].mxu0
    %v1460 = vadd.f32 %v299, %v1459
    %v1461 = vpop.f32.mrb[0].mxu0
    %v1462 = vadd.f32 %v303, %v1461
    %1463 = vdwg.mxu0
    %1464 = vmatprep.subr.bf16.mxu0 %v917
    %1465 = vmatpush1.bf16.msra.mxu0 %v916
    %1466 = vmatprep.subr.bf16.mxu0 %v929
    %1467 = vmatpush1.bf16.msra.mxu0 %v928
    %1468 = vmatprep.subr.bf16.mxu0 %v941
    %1469 = vmatpush1.bf16.msra.mxu0 %v940
    %1470 = vmatprep.subr.bf16.mxu0 %v953
    %1471 = vmatpush1.bf16.msra.mxu0 %v952
    %1472 = vmatprep.subr.bf16.mxu0 %v965
    %1473 = vmatpush1.bf16.msra.mxu0 %v964
    %1474 = vmatprep.subr.bf16.mxu0 %v977
    %1475 = vmatpush1.bf16.msra.mxu0 %v976
    %1476 = vmatprep.subr.bf16.mxu0 %v989
    %1477 = vmatpush1.bf16.msra.mxu0 %v988
    %1478 = vmatprep.subr.bf16.mxu0 %v1001
    %1479 = vmatpush1.bf16.msra.mxu0 %v1000
    %1480 = vmatprep.subr.bf16.mxu0 %v1013
    %1481 = vmatpush1.bf16.msra.mxu0 %v1012
    %1482 = vmatprep.subr.bf16.mxu0 %v1025
    %1483 = vmatpush1.bf16.msra.mxu0 %v1024
    %1484 = vmatprep.subr.bf16.mxu0 %v1037
    %1485 = vmatpush1.bf16.msra.mxu0 %v1036
    %1486 = vmatprep.subr.bf16.mxu0 %v1049
    %1487 = vmatpush1.bf16.msra.mxu0 %v1048
    %1488 = vmatprep.subr.bf16.mxu0 %v1061
    %1489 = vmatpush1.bf16.msra.mxu0 %v1060
    %1490 = vmatprep.subr.bf16.mxu0 %v1073
    %1491 = vmatpush1.bf16.msra.mxu0 %v1072
    %1492 = vmatprep.subr.bf16.mxu0 %v1085
    %1493 = vmatpush1.bf16.msra.mxu0 %v1084
    %1494 = vmatprep.subr.bf16.mxu0 %v1097
    %1495 = vmatpush1.bf16.msra.mxu0 %v1096
    %1496 = vmatprep.mubr.bf16.mxu0 %v75
    %1497 = vmatmul.mubr.bf16.gmra.mrb[0].mxu0 %v74
    %v1498 = vpop.f32.mrb[0].mxu0
    %v1499 = vadd.f32 %v307, %v1498
    %v1500 = vpop.f32.mrb[0].mxu0
    %v1501 = vadd.f32 %v311, %v1500
    %v1502 = vpop.f32.mrb[0].mxu0
    %v1503 = vadd.f32 %v307, %v1502
    %v1504 = vpop.f32.mrb[0].mxu0
    %v1505 = vadd.f32 %v311, %v1504
    %1506 = vdwg.mxu0
    %1507 = vmatprep.subr.bf16.mxu0 %v919
    %1508 = vmatpush1.bf16.msra.mxu0 %v918
    %1509 = vmatprep.subr.bf16.mxu0 %v931
    %1510 = vmatpush1.bf16.msra.mxu0 %v930
    %1511 = vmatprep.subr.bf16.mxu0 %v943
    %1512 = vmatpush1.bf16.msra.mxu0 %v942
    %1513 = vmatprep.subr.bf16.mxu0 %v955
    %1514 = vmatpush1.bf16.msra.mxu0 %v954
    %1515 = vmatprep.subr.bf16.mxu0 %v967
    %1516 = vmatpush1.bf16.msra.mxu0 %v966
    %1517 = vmatprep.subr.bf16.mxu0 %v979
    %1518 = vmatpush1.bf16.msra.mxu0 %v978
    %1519 = vmatprep.subr.bf16.mxu0 %v991
    %1520 = vmatpush1.bf16.msra.mxu0 %v990
    %1521 = vmatprep.subr.bf16.mxu0 %v1003
    %1522 = vmatpush1.bf16.msra.mxu0 %v1002
    %1523 = vmatprep.subr.bf16.mxu0 %v1015
    %1524 = vmatpush1.bf16.msra.mxu0 %v1014
    %1525 = vmatprep.subr.bf16.mxu0 %v1027
    %1526 = vmatpush1.bf16.msra.mxu0 %v1026
    %1527 = vmatprep.subr.bf16.mxu0 %v1039
    %1528 = vmatpush1.bf16.msra.mxu0 %v1038
    %1529 = vmatprep.subr.bf16.mxu0 %v1051
    %1530 = vmatpush1.bf16.msra.mxu0 %v1050
    %1531 = vmatprep.subr.bf16.mxu0 %v1063
    %1532 = vmatpush1.bf16.msra.mxu0 %v1062
    %1533 = vmatprep.subr.bf16.mxu0 %v1075
    %1534 = vmatpush1.bf16.msra.mxu0 %v1074
    %1535 = vmatprep.subr.bf16.mxu0 %v1087
    %1536 = vmatpush1.bf16.msra.mxu0 %v1086
    %1537 = vmatprep.subr.bf16.mxu0 %v1099
    %1538 = vmatpush1.bf16.msra.mxu0 %v1098
    %1539 = vmatprep.mubr.bf16.mxu0 %v75
    %1540 = vmatmul.mubr.bf16.gmra.mrb[0].mxu0 %v74
    %v1541 = vpop.f32.mrb[0].mxu0
    %v1542 = vadd.f32 %v315, %v1541
    %v1543 = vpop.f32.mrb[0].mxu0
    %v1544 = vadd.f32 %v319, %v1543
    %v1545 = vpop.f32.mrb[0].mxu0
    %v1546 = vadd.f32 %v315, %v1545
    %v1547 = vpop.f32.mrb[0].mxu0
    %v1548 = vadd.f32 %v319, %v1547
    %1549 = vdwg.mxu0
    %v1550 = vpack.c.bf16 %v1327, %v1327
    %v1551 = vpack.c.bf16 %v1329, %v1329
    %v1552 = vpack.c.bf16 %v1413, %v1413
    %v1553 = vpack.c.bf16 %v1415, %v1415
    %v1554 = vpack.c.bf16 %v1499, %v1499
    %v1555 = vpack.c.bf16 %v1501, %v1501
    %1556 = vmatprep.subr.bf16.mxu0 %v1553
    %1557 = vmatpush1.bf16.xpose.msra.mxu0 %v1552
    %1558 = vmatprep.subr.bf16.mxu0 0
    %1559 = vmatpush1.bf16.xpose.msra.mxu0 0
    %1560 = vmatprep.subr.bf16.mxu0 0
    %1561 = vmatpush1.bf16.xpose.msra.mxu0 0
    %1562 = vmatprep.subr.bf16.mxu0 0
    %1563 = vmatpush1.bf16.xpose.msra.mxu0 0
    %1564 = vmatprep.subr.bf16.mxu0 0
    %1565 = vmatpush1.bf16.xpose.msra.mxu0 0
    %1566 = vmatprep.subr.bf16.mxu0 0
    %1567 = vmatpush1.bf16.xpose.msra.mxu0 0
    %1568 = vmatprep.subr.bf16.mxu0 0
    %1569 = vmatpush1.bf16.xpose.msra.mxu0 0
    %1570 = vmatprep.subr.bf16.mxu0 0
    %1571 = vmatpush1.bf16.xpose.msra.mxu0 0
    %1572 = vmatprep.subr.bf16.mxu0 0
    %1573 = vmatpush1.bf16.xpose.msra.mxu0 0
    %1574 = vmatprep.subr.bf16.mxu0 0
    %1575 = vmatpush1.bf16.xpose.msra.mxu0 0
    %1576 = vmatprep.subr.bf16.mxu0 0
    %1577 = vmatpush1.bf16.xpose.msra.mxu0 0
    %1578 = vmatprep.subr.bf16.mxu0 0
    %1579 = vmatpush1.bf16.xpose.msra.mxu0 0
    %1580 = vmatprep.subr.bf16.mxu0 0
    %1581 = vmatpush1.bf16.xpose.msra.mxu0 0
    %1582 = vmatprep.subr.bf16.mxu0 0
    %1583 = vmatpush1.bf16.xpose.msra.mxu0 0
    %1584 = vmatprep.subr.bf16.mxu0 0
    %1585 = vmatpush1.bf16.xpose.msra.mxu0 0
    %1586 = vmatprep.subr.bf16.mxu0 0
    %1587 = vmatpush1.bf16.xpose.msra.mxu0 0
    %1588 = vmatprep.mubr.bf16.mxu0 %v1551
    %1589 = vmatmul.mubr.bf16.gmra.mrb[0].mxu0 %v1550
    %v1590 = vpop.f32.mrb[0].mxu0
    %v1591 = vadd.f32 0.0, %v1590
    %v1592 = vpop.f32.mrb[0].mxu0
    %v1593 = vpop.f32.mrb[0].mxu0
    %v1594 = vpop.f32.mrb[0].mxu0
    %1595 = vdwg.mxu0
    %v1596 = vmul.f32 %v1591, 0.07071068
    %v1597 = vadd.f32 %v1596, %v73
    %vm1598 = vcmask 64512
    %v1599 = vsel %vm1598, %v1597, -inf
    %1600 = vmax.xlane.f32.xlu0 %v1599
    %v1601 = vpop.xlane.xlu0 %1600
    %v1602 = vsub.f32 %v1597, %v1601
    %v1603 = vmul.f32 %v1602, 1.442695
    %v1604 = vpow.pop %v1603
    %v1605 = vsel %vm1598, %v1604, 0.0
    %1606 = vadd.xlane.f32.xlu0 %v1605
    %v1607 = vpop.xlane.xlu0 %1606
    %v1608 = vrcp.pop %v1607
    %v1609 = vmul.f32 %v1604, %v1608
    %v1610 = vpack.c.bf16 %v1609, %v1609
    %v1612 = vsel %vm1598, %v1610, 0
    %vm1614 = vcmask 1043456
    %v1616 = vsel %vm1614, %v1554, 0
    %v1619 = vsel %vm1614, %v1555, 0
    %1621 = vmatprep.subr.bf16.mxu0 %v1619
    %1622 = vmatpush1.bf16.msra.mxu0 %v1616
    %1623 = vmatprep.subr.bf16.mxu0 0
    %1624 = vmatpush1.bf16.msra.mxu0 0
    %1625 = vmatprep.subr.bf16.mxu0 0
    %1626 = vmatpush1.bf16.msra.mxu0 0
    %1627 = vmatprep.subr.bf16.mxu0 0
    %1628 = vmatpush1.bf16.msra.mxu0 0
    %1629 = vmatprep.subr.bf16.mxu0 0
    %1630 = vmatpush1.bf16.msra.mxu0 0
    %1631 = vmatprep.subr.bf16.mxu0 0
    %1632 = vmatpush1.bf16.msra.mxu0 0
    %1633 = vmatprep.subr.bf16.mxu0 0
    %1634 = vmatpush1.bf16.msra.mxu0 0
    %1635 = vmatprep.subr.bf16.mxu0 0
    %1636 = vmatpush1.bf16.msra.mxu0 0
    %1637 = vmatprep.subr.bf16.mxu0 0
    %1638 = vmatpush1.bf16.msra.mxu0 0
    %1639 = vmatprep.subr.bf16.mxu0 0
    %1640 = vmatpush1.bf16.msra.mxu0 0
    %1641 = vmatprep.subr.bf16.mxu0 0
    %1642 = vmatpush1.bf16.msra.mxu0 0
    %1643 = vmatprep.subr.bf16.mxu0 0
    %1644 = vmatpush1.bf16.msra.mxu0 0
    %1645 = vmatprep.subr.bf16.mxu0 0
    %1646 = vmatpush1.bf16.msra.mxu0 0
    %1647 = vmatprep.subr.bf16.mxu0 0
    %1648 = vmatpush1.bf16.msra.mxu0 0
    %1649 = vmatprep.subr.bf16.mxu0 0
    %1650 = vmatpush1.bf16.msra.mxu0 0
    %1651 = vmatprep.subr.bf16.mxu0 0
    %1652 = vmatpush1.bf16.msra.mxu0 0
    %1653 = vmatprep.mubr.bf16.mxu0 0
    %1654 = vmatmul.mubr.bf16.gmra.mrb[0].mxu0 %v1612
    %v1655 = vpop.f32.mrb[0].mxu0
    %v1656 = vadd.f32 0.0, %v1655
    %v1657 = vpop.f32.mrb[0].mxu0
    %v1658 = vadd.f32 0.0, %v1657
    %v1659 = vpop.f32.mrb[0].mxu0
    %v1660 = vpop.f32.mrb[0].mxu0
    %1661 = vdwg.mxu0
    %v1662 = vpack.c.bf16 %v1656, %v1656
    %v1663 = vpack.c.bf16 %v1658, %v1658
    %v1664 = vld [vmem:[#allocation6] sm:$0xff]
    %v1665 = vld [vmem:[#allocation6 + $0x8] sm:$0xff]
    %v1666 = vld [vmem:[#allocation6 + $0x10] sm:$0xff]
    %v1667 = vld [vmem:[#allocation6 + $0x18] sm:$0xff]
    %v1668 = vld [vmem:[#allocation6 + $0x20] sm:$0xff]
    %v1669 = vld [vmem:[#allocation6 + $0x28] sm:$0xff]
    %v1670 = vld [vmem:[#allocation6 + $0x30] sm:$0xff]
    %v1671 = vld [vmem:[#allocation6 + $0x38] sm:$0xff]
    %v1672 = vld [vmem:[#allocation6 + $0x40] sm:$0xff]
    %v1673 = vld [vmem:[#allocation6 + $0x48] sm:$0xff]
    %v1674 = vld [vmem:[#allocation6 + $0x50] sm:$0xff]
    %v1675 = vld [vmem:[#allocation6 + $0x58] sm:$0xff]
    %v1676 = vld [vmem:[#allocation6 + $0x60] sm:$0xff]
    %v1677 = vld [vmem:[#allocation6 + $0x68] sm:$0xff]
    %v1678 = vld [vmem:[#allocation6 + $0x70] sm:$0xff]
    %v1679 = vld [vmem:[#allocation6 + $0x78] sm:$0xff]
    %v1680 = vld [vmem:[#allocation6 + $0x80] sm:$0xff]
    %v1681 = vld [vmem:[#allocation6 + $0x88] sm:$0xff]
    %v1682 = vld [vmem:[#allocation6 + $0x90] sm:$0xff]
    %v1683 = vld [vmem:[#allocation6 + $0x98] sm:$0xff]
    %v1684 = vld [vmem:[#allocation6 + $0xa0] sm:$0xff]
    %v1685 = vld [vmem:[#allocation6 + $0xa8] sm:$0xff]
    %v1686 = vld [vmem:[#allocation6 + $0xb0] sm:$0xff]
    %v1687 = vld [vmem:[#allocation6 + $0xb8] sm:$0xff]
    %v1688 = vld [vmem:[#allocation6 + $0xc0] sm:$0xff]
    %v1689 = vld [vmem:[#allocation6 + $0xc8] sm:$0xff]
    %v1690 = vld [vmem:[#allocation6 + $0xd0] sm:$0xff]
    %v1691 = vld [vmem:[#allocation6 + $0xd8] sm:$0xff]
    %v1692 = vld [vmem:[#allocation6 + $0xe0] sm:$0xff]
    %v1693 = vld [vmem:[#allocation6 + $0xe8] sm:$0xff]
    %v1694 = vld [vmem:[#allocation6 + $0xf0] sm:$0xff]
    %v1695 = vld [vmem:[#allocation6 + $0xf8] sm:$0xff]
    %v1696 = vpack.c.bf16 %v1370, %v1370
    %v1697 = vpack.c.bf16 %v1372, %v1372
    %v1698 = vpack.c.bf16 %v1456, %v1456
    %v1699 = vpack.c.bf16 %v1458, %v1458
    %v1700 = vpack.c.bf16 %v1542, %v1542
    %v1701 = vpack.c.bf16 %v1544, %v1544
    %1702 = vmatprep.subr.bf16.mxu0 %v1699
    %1703 = vmatpush1.bf16.xpose.msra.mxu0 %v1698
    %1704 = vmatprep.subr.bf16.mxu0 0
    %1705 = vmatpush1.bf16.xpose.msra.mxu0 0
    %1706 = vmatprep.subr.bf16.mxu0 0
    %1707 = vmatpush1.bf16.xpose.msra.mxu0 0
    %1708 = vmatprep.subr.bf16.mxu0 0
    %1709 = vmatpush1.bf16.xpose.msra.mxu0 0
    %1710 = vmatprep.subr.bf16.mxu0 0
    %1711 = vmatpush1.bf16.xpose.msra.mxu0 0
    %1712 = vmatprep.subr.bf16.mxu0 0
    %1713 = vmatpush1.bf16.xpose.msra.mxu0 0
    %1714 = vmatprep.subr.bf16.mxu0 0
    %1715 = vmatpush1.bf16.xpose.msra.mxu0 0
    %1716 = vmatprep.subr.bf16.mxu0 0
    %1717 = vmatpush1.bf16.xpose.msra.mxu0 0
    %1718 = vmatprep.subr.bf16.mxu0 0
    %1719 = vmatpush1.bf16.xpose.msra.mxu0 0
    %1720 = vmatprep.subr.bf16.mxu0 0
    %1721 = vmatpush1.bf16.xpose.msra.mxu0 0
    %1722 = vmatprep.subr.bf16.mxu0 0
    %1723 = vmatpush1.bf16.xpose.msra.mxu0 0
    %1724 = vmatprep.subr.bf16.mxu0 0
    %1725 = vmatpush1.bf16.xpose.msra.mxu0 0
    %1726 = vmatprep.subr.bf16.mxu0 0
    %1727 = vmatpush1.bf16.xpose.msra.mxu0 0
    %1728 = vmatprep.subr.bf16.mxu0 0
    %1729 = vmatpush1.bf16.xpose.msra.mxu0 0
    %1730 = vmatprep.subr.bf16.mxu0 0
    %1731 = vmatpush1.bf16.xpose.msra.mxu0 0
    %1732 = vmatprep.subr.bf16.mxu0 0
    %1733 = vmatpush1.bf16.xpose.msra.mxu0 0
    %1734 = vmatprep.mubr.bf16.mxu0 %v1697
    %1735 = vmatmul.mubr.bf16.gmra.mrb[0].mxu0 %v1696
    %v1736 = vpop.f32.mrb[0].mxu0
    %v1737 = vadd.f32 0.0, %v1736
    %v1738 = vpop.f32.mrb[0].mxu0
    %v1739 = vpop.f32.mrb[0].mxu0
    %v1740 = vpop.f32.mrb[0].mxu0
    %1741 = vdwg.mxu0
    %v1742 = vmul.f32 %v1737, 0.07071068
    %v1743 = vadd.f32 %v1742, %v73
    %v1744 = vsel %vm1598, %v1743, -inf
    %1745 = vmax.xlane.f32.xlu0 %v1744
    %v1746 = vpop.xlane.xlu0 %1745
    %v1747 = vsub.f32 %v1743, %v1746
    %v1748 = vmul.f32 %v1747, 1.442695
    %v1749 = vpow.pop %v1748
    %v1750 = vsel %vm1598, %v1749, 0.0
    %1751 = vadd.xlane.f32.xlu0 %v1750
    %v1752 = vpop.xlane.xlu0 %1751
    %v1753 = vrcp.pop %v1752
    %v1754 = vmul.f32 %v1749, %v1753
    %v1755 = vpack.c.bf16 %v1754, %v1754
    %v1757 = vsel %vm1598, %v1755, 0
    %v1760 = vsel %vm1614, %v1700, 0
    %v1763 = vsel %vm1614, %v1701, 0
    %1765 = vmatprep.subr.bf16.mxu0 %v1763
    %1766 = vmatpush1.bf16.msra.mxu0 %v1760
    %1767 = vmatprep.subr.bf16.mxu0 0
    %1768 = vmatpush1.bf16.msra.mxu0 0
    %1769 = vmatprep.subr.bf16.mxu0 0
    %1770 = vmatpush1.bf16.msra.mxu0 0
    %1771 = vmatprep.subr.bf16.mxu0 0
    %1772 = vmatpush1.bf16.msra.mxu0 0
    %1773 = vmatprep.subr.bf16.mxu0 0
    %1774 = vmatpush1.bf16.msra.mxu0 0
    %1775 = vmatprep.subr.bf16.mxu0 0
    %1776 = vmatpush1.bf16.msra.mxu0 0
    %1777 = vmatprep.subr.bf16.mxu0 0
    %1778 = vmatpush1.bf16.msra.mxu0 0
    %1779 = vmatprep.subr.bf16.mxu0 0
    %1780 = vmatpush1.bf16.msra.mxu0 0
    %1781 = vmatprep.subr.bf16.mxu0 0
    %1782 = vmatpush1.bf16.msra.mxu0 0
    %1783 = vmatprep.subr.bf16.mxu0 0
    %1784 = vmatpush1.bf16.msra.mxu0 0
    %1785 = vmatprep.subr.bf16.mxu0 0
    %1786 = vmatpush1.bf16.msra.mxu0 0
    %1787 = vmatprep.subr.bf16.mxu0 0
    %1788 = vmatpush1.bf16.msra.mxu0 0
    %1789 = vmatprep.subr.bf16.mxu0 0
    %1790 = vmatpush1.bf16.msra.mxu0 0
    %1791 = vmatprep.subr.bf16.mxu0 0
    %1792 = vmatpush1.bf16.msra.mxu0 0
    %1793 = vmatprep.subr.bf16.mxu0 0
    %1794 = vmatpush1.bf16.msra.mxu0 0
    %1795 = vmatprep.subr.bf16.mxu0 0
    %1796 = vmatpush1.bf16.msra.mxu0 0
    %1797 = vmatprep.mubr.bf16.mxu0 0
    %1798 = vmatmul.mubr.bf16.gmra.mrb[0].mxu0 %v1757
    %v1799 = vpop.f32.mrb[0].mxu0
    %v1800 = vadd.f32 0.0, %v1799
    %v1801 = vpop.f32.mrb[0].mxu0
    %v1802 = vadd.f32 0.0, %v1801
    %v1803 = vpop.f32.mrb[0].mxu0
    %v1804 = vpop.f32.mrb[0].mxu0
    %1805 = vdwg.mxu0
    %v1806 = vpack.c.bf16 %v1800, %v1800
    %v1807 = vpack.c.bf16 %v1802, %v1802
    %v1808 = vld [vmem:[#allocation6 + $0x100] sm:$0xff]
    %v1809 = vld [vmem:[#allocation6 + $0x108] sm:$0xff]
    %v1810 = vld [vmem:[#allocation6 + $0x110] sm:$0xff]
    %v1811 = vld [vmem:[#allocation6 + $0x118] sm:$0xff]
    %v1812 = vld [vmem:[#allocation6 + $0x120] sm:$0xff]
    %v1813 = vld [vmem:[#allocation6 + $0x128] sm:$0xff]
    %v1814 = vld [vmem:[#allocation6 + $0x130] sm:$0xff]
    %v1815 = vld [vmem:[#allocation6 + $0x138] sm:$0xff]
    %v1816 = vld [vmem:[#allocation6 + $0x140] sm:$0xff]
    %v1817 = vld [vmem:[#allocation6 + $0x148] sm:$0xff]
    %v1818 = vld [vmem:[#allocation6 + $0x150] sm:$0xff]
    %v1819 = vld [vmem:[#allocation6 + $0x158] sm:$0xff]
    %v1820 = vld [vmem:[#allocation6 + $0x160] sm:$0xff]
    %v1821 = vld [vmem:[#allocation6 + $0x168] sm:$0xff]
    %v1822 = vld [vmem:[#allocation6 + $0x170] sm:$0xff]
    %v1823 = vld [vmem:[#allocation6 + $0x178] sm:$0xff]
    %v1824 = vld [vmem:[#allocation6 + $0x180] sm:$0xff]
    %v1825 = vld [vmem:[#allocation6 + $0x188] sm:$0xff]
    %v1826 = vld [vmem:[#allocation6 + $0x190] sm:$0xff]
    %v1827 = vld [vmem:[#allocation6 + $0x198] sm:$0xff]
    %v1828 = vld [vmem:[#allocation6 + $0x1a0] sm:$0xff]
    %v1829 = vld [vmem:[#allocation6 + $0x1a8] sm:$0xff]
    %v1830 = vld [vmem:[#allocation6 + $0x1b0] sm:$0xff]
    %v1831 = vld [vmem:[#allocation6 + $0x1b8] sm:$0xff]
    %v1832 = vld [vmem:[#allocation6 + $0x1c0] sm:$0xff]
    %v1833 = vld [vmem:[#allocation6 + $0x1c8] sm:$0xff]
    %v1834 = vld [vmem:[#allocation6 + $0x1d0] sm:$0xff]
    %v1835 = vld [vmem:[#allocation6 + $0x1d8] sm:$0xff]
    %v1836 = vld [vmem:[#allocation6 + $0x1e0] sm:$0xff]
    %v1837 = vld [vmem:[#allocation6 + $0x1e8] sm:$0xff]
    %v1838 = vld [vmem:[#allocation6 + $0x1f0] sm:$0xff]
    %v1839 = vld [vmem:[#allocation6 + $0x1f8] sm:$0xff]
    %v1872 = vunpack.c.l.b16 %v1808
    %v1873 = vunpack.c.h.b16 %v1808
    %v1874 = vunpack.c.l.b16 %v1809
    %v1875 = vunpack.c.h.b16 %v1809
    %v1876 = vunpack.c.l.b16 %v1810
    %v1877 = vunpack.c.h.b16 %v1810
    %v1878 = vunpack.c.l.b16 %v1811
    %v1879 = vunpack.c.h.b16 %v1811
    %v1880 = vunpack.c.l.b16 %v1812
    %v1881 = vunpack.c.h.b16 %v1812
    %v1882 = vunpack.c.l.b16 %v1813
    %v1883 = vunpack.c.h.b16 %v1813
    %v1884 = vunpack.c.l.b16 %v1814
    %v1885 = vunpack.c.h.b16 %v1814
    %v1886 = vunpack.c.l.b16 %v1815
    %v1887 = vunpack.c.h.b16 %v1815
    %v1888 = vunpack.c.l.b16 %v1816
    %v1889 = vunpack.c.h.b16 %v1816
    %v1890 = vunpack.c.l.b16 %v1817
    %v1891 = vunpack.c.h.b16 %v1817
    %v1892 = vunpack.c.l.b16 %v1818
    %v1893 = vunpack.c.h.b16 %v1818
    %v1894 = vunpack.c.l.b16 %v1819
    %v1895 = vunpack.c.h.b16 %v1819
    %v1896 = vunpack.c.l.b16 %v1820
    %v1897 = vunpack.c.h.b16 %v1820
    %v1898 = vunpack.c.l.b16 %v1821
    %v1899 = vunpack.c.h.b16 %v1821
    %v1900 = vunpack.c.l.b16 %v1822
    %v1901 = vunpack.c.h.b16 %v1822
    %v1902 = vunpack.c.l.b16 %v1823
    %v1903 = vunpack.c.h.b16 %v1823
    %v1904 = vunpack.c.l.b16 %v1824
    %v1905 = vunpack.c.h.b16 %v1824
    %v1906 = vunpack.c.l.b16 %v1825
    %v1907 = vunpack.c.h.b16 %v1825
    %v1908 = vunpack.c.l.b16 %v1826
    %v1909 = vunpack.c.h.b16 %v1826
    %v1910 = vunpack.c.l.b16 %v1827
    %v1911 = vunpack.c.h.b16 %v1827
    %v1912 = vunpack.c.l.b16 %v1828
    %v1913 = vunpack.c.h.b16 %v1828
    %v1914 = vunpack.c.l.b16 %v1829
    %v1915 = vunpack.c.h.b16 %v1829
    %v1916 = vunpack.c.l.b16 %v1830
    %v1917 = vunpack.c.h.b16 %v1830
    %v1918 = vunpack.c.l.b16 %v1831
    %v1919 = vunpack.c.h.b16 %v1831
    %v1920 = vunpack.c.l.b16 %v1832
    %v1921 = vunpack.c.h.b16 %v1832
    %v1922 = vunpack.c.l.b16 %v1833
    %v1923 = vunpack.c.h.b16 %v1833
    %v1924 = vunpack.c.l.b16 %v1834
    %v1925 = vunpack.c.h.b16 %v1834
    %v1926 = vunpack.c.l.b16 %v1835
    %v1927 = vunpack.c.h.b16 %v1835
    %v1928 = vunpack.c.l.b16 %v1836
    %v1929 = vunpack.c.h.b16 %v1836
    %v1930 = vunpack.c.l.b16 %v1837
    %v1931 = vunpack.c.h.b16 %v1837
    %v1932 = vunpack.c.l.b16 %v1838
    %v1933 = vunpack.c.h.b16 %v1838
    %v1934 = vunpack.c.l.b16 %v1839
    %v1935 = vunpack.c.h.b16 %v1839
    %v1936 = vpack.c.b16 %v1874, %v1872
    %v1937 = vpack.c.b16 %v1875, %v1873
    %v1938 = vpack.c.b16 %v1878, %v1876
    %v1939 = vpack.c.b16 %v1879, %v1877
    %v1940 = vpack.c.b16 %v1882, %v1880
    %v1941 = vpack.c.b16 %v1883, %v1881
    %v1942 = vpack.c.b16 %v1886, %v1884
    %v1943 = vpack.c.b16 %v1887, %v1885
    %v1944 = vpack.c.b16 %v1890, %v1888
    %v1945 = vpack.c.b16 %v1891, %v1889
    %v1946 = vpack.c.b16 %v1894, %v1892
    %v1947 = vpack.c.b16 %v1895, %v1893
    %v1948 = vpack.c.b16 %v1898, %v1896
    %v1949 = vpack.c.b16 %v1899, %v1897
    %v1950 = vpack.c.b16 %v1902, %v1900
    %v1951 = vpack.c.b16 %v1903, %v1901
    %v1952 = vpack.c.b16 %v1906, %v1904
    %v1953 = vpack.c.b16 %v1907, %v1905
    %v1954 = vpack.c.b16 %v1910, %v1908
    %v1955 = vpack.c.b16 %v1911, %v1909
    %v1956 = vpack.c.b16 %v1914, %v1912
    %v1957 = vpack.c.b16 %v1915, %v1913
    %v1958 = vpack.c.b16 %v1918, %v1916
    %v1959 = vpack.c.b16 %v1919, %v1917
    %v1960 = vpack.c.b16 %v1922, %v1920
    %v1961 = vpack.c.b16 %v1923, %v1921
    %v1962 = vpack.c.b16 %v1926, %v1924
    %v1963 = vpack.c.b16 %v1927, %v1925
    %v1964 = vpack.c.b16 %v1930, %v1928
    %v1965 = vpack.c.b16 %v1931, %v1929
    %v1966 = vpack.c.b16 %v1934, %v1932
    %v1967 = vpack.c.b16 %v1935, %v1933
    %2000 = vmatprep.subr.bf16.mxu0 %v1937
    %2001 = vmatpush1.bf16.msra.mxu0 %v1936
    %2002 = vmatprep.subr.bf16.mxu0 %v1939
    %2003 = vmatpush1.bf16.msra.mxu0 %v1938
    %2004 = vmatprep.subr.bf16.mxu0 %v1941
    %2005 = vmatpush1.bf16.msra.mxu0 %v1940
    %2006 = vmatprep.subr.bf16.mxu0 %v1943
    %2007 = vmatpush1.bf16.msra.mxu0 %v1942
    %2008 = vmatprep.subr.bf16.mxu0 %v1945
    %2009 = vmatpush1.bf16.msra.mxu0 %v1944
    %2010 = vmatprep.subr.bf16.mxu0 %v1947
    %2011 = vmatpush1.bf16.msra.mxu0 %v1946
    %2012 = vmatprep.subr.bf16.mxu0 %v1949
    %2013 = vmatpush1.bf16.msra.mxu0 %v1948
    %2014 = vmatprep.subr.bf16.mxu0 %v1951
    %2015 = vmatpush1.bf16.msra.mxu0 %v1950
    %2016 = vmatprep.subr.bf16.mxu0 %v1953
    %2017 = vmatpush1.bf16.msra.mxu0 %v1952
    %2018 = vmatprep.subr.bf16.mxu0 %v1955
    %2019 = vmatpush1.bf16.msra.mxu0 %v1954
    %2020 = vmatprep.subr.bf16.mxu0 %v1957
    %2021 = vmatpush1.bf16.msra.mxu0 %v1956
    %2022 = vmatprep.subr.bf16.mxu0 %v1959
    %2023 = vmatpush1.bf16.msra.mxu0 %v1958
    %2024 = vmatprep.subr.bf16.mxu0 %v1961
    %2025 = vmatpush1.bf16.msra.mxu0 %v1960
    %2026 = vmatprep.subr.bf16.mxu0 %v1963
    %2027 = vmatpush1.bf16.msra.mxu0 %v1962
    %2028 = vmatprep.subr.bf16.mxu0 %v1965
    %2029 = vmatpush1.bf16.msra.mxu0 %v1964
    %2030 = vmatprep.subr.bf16.mxu0 %v1967
    %2031 = vmatpush1.bf16.msra.mxu0 %v1966
    %2032 = vmatprep.mubr.bf16.mxu0 %v1807
    %2033 = vmatmul.mubr.bf16.gmra.mrb[0].mxu0 %v1806
    %v2034 = vpop.f32.mrb[0].mxu0
    %v2035 = vadd.f32 0.0, %v2034
    %v2036 = vpop.f32.mrb[0].mxu0
    %v2037 = vadd.f32 0.0, %v2036
    %v2038 = vpop.f32.mrb[0].mxu0
    %v2039 = vpop.f32.mrb[0].mxu0
    %2040 = vdwg.mxu0
    %v2073 = vunpack.c.l.b16 %v1664
    %v2074 = vunpack.c.h.b16 %v1664
    %v2075 = vunpack.c.l.b16 %v1665
    %v2076 = vunpack.c.h.b16 %v1665
    %v2077 = vunpack.c.l.b16 %v1666
    %v2078 = vunpack.c.h.b16 %v1666
    %v2079 = vunpack.c.l.b16 %v1667
    %v2080 = vunpack.c.h.b16 %v1667
    %v2081 = vunpack.c.l.b16 %v1668
    %v2082 = vunpack.c.h.b16 %v1668
    %v2083 = vunpack.c.l.b16 %v1669
    %v2084 = vunpack.c.h.b16 %v1669
    %v2085 = vunpack.c.l.b16 %v1670
    %v2086 = vunpack.c.h.b16 %v1670
    %v2087 = vunpack.c.l.b16 %v1671
    %v2088 = vunpack.c.h.b16 %v1671
    %v2089 = vunpack.c.l.b16 %v1672
    %v2090 = vunpack.c.h.b16 %v1672
    %v2091 = vunpack.c.l.b16 %v1673
    %v2092 = vunpack.c.h.b16 %v1673
    %v2093 = vunpack.c.l.b16 %v1674
    %v2094 = vunpack.c.h.b16 %v1674
    %v2095 = vunpack.c.l.b16 %v1675
    %v2096 = vunpack.c.h.b16 %v1675
    %v2097 = vunpack.c.l.b16 %v1676
    %v2098 = vunpack.c.h.b16 %v1676
    %v2099 = vunpack.c.l.b16 %v1677
    %v2100 = vunpack.c.h.b16 %v1677
    %v2101 = vunpack.c.l.b16 %v1678
    %v2102 = vunpack.c.h.b16 %v1678
    %v2103 = vunpack.c.l.b16 %v1679
    %v2104 = vunpack.c.h.b16 %v1679
    %v2105 = vunpack.c.l.b16 %v1680
    %v2106 = vunpack.c.h.b16 %v1680
    %v2107 = vunpack.c.l.b16 %v1681
    %v2108 = vunpack.c.h.b16 %v1681
    %v2109 = vunpack.c.l.b16 %v1682
    %v2110 = vunpack.c.h.b16 %v1682
    %v2111 = vunpack.c.l.b16 %v1683
    %v2112 = vunpack.c.h.b16 %v1683
    %v2113 = vunpack.c.l.b16 %v1684
    %v2114 = vunpack.c.h.b16 %v1684
    %v2115 = vunpack.c.l.b16 %v1685
    %v2116 = vunpack.c.h.b16 %v1685
    %v2117 = vunpack.c.l.b16 %v1686
    %v2118 = vunpack.c.h.b16 %v1686
    %v2119 = vunpack.c.l.b16 %v1687
    %v2120 = vunpack.c.h.b16 %v1687
    %v2121 = vunpack.c.l.b16 %v1688
    %v2122 = vunpack.c.h.b16 %v1688
    %v2123 = vunpack.c.l.b16 %v1689
    %v2124 = vunpack.c.h.b16 %v1689
    %v2125 = vunpack.c.l.b16 %v1690
    %v2126 = vunpack.c.h.b16 %v1690
    %v2127 = vunpack.c.l.b16 %v1691
    %v2128 = vunpack.c.h.b16 %v1691
    %v2129 = vunpack.c.l.b16 %v1692
    %v2130 = vunpack.c.h.b16 %v1692
    %v2131 = vunpack.c.l.b16 %v1693
    %v2132 = vunpack.c.h.b16 %v1693
    %v2133 = vunpack.c.l.b16 %v1694
    %v2134 = vunpack.c.h.b16 %v1694
    %v2135 = vunpack.c.l.b16 %v1695
    %v2136 = vunpack.c.h.b16 %v1695
    %v2137 = vpack.c.b16 %v2075, %v2073
    %v2138 = vpack.c.b16 %v2076, %v2074
    %v2139 = vpack.c.b16 %v2079, %v2077
    %v2140 = vpack.c.b16 %v2080, %v2078
    %v2141 = vpack.c.b16 %v2083, %v2081
    %v2142 = vpack.c.b16 %v2084, %v2082
    %v2143 = vpack.c.b16 %v2087, %v2085
    %v2144 = vpack.c.b16 %v2088, %v2086
    %v2145 = vpack.c.b16 %v2091, %v2089
    %v2146 = vpack.c.b16 %v2092, %v2090
    %v2147 = vpack.c.b16 %v2095, %v2093
    %v2148 = vpack.c.b16 %v2096, %v2094
    %v2149 = vpack.c.b16 %v2099, %v2097
    %v2150 = vpack.c.b16 %v2100, %v2098
    %v2151 = vpack.c.b16 %v2103, %v2101
    %v2152 = vpack.c.b16 %v2104, %v2102
    %v2153 = vpack.c.b16 %v2107, %v2105
    %v2154 = vpack.c.b16 %v2108, %v2106
    %v2155 = vpack.c.b16 %v2111, %v2109
    %v2156 = vpack.c.b16 %v2112, %v2110
    %v2157 = vpack.c.b16 %v2115, %v2113
    %v2158 = vpack.c.b16 %v2116, %v2114
    %v2159 = vpack.c.b16 %v2119, %v2117
    %v2160 = vpack.c.b16 %v2120, %v2118
    %v2161 = vpack.c.b16 %v2123, %v2121
    %v2162 = vpack.c.b16 %v2124, %v2122
    %v2163 = vpack.c.b16 %v2127, %v2125
    %v2164 = vpack.c.b16 %v2128, %v2126
    %v2165 = vpack.c.b16 %v2131, %v2129
    %v2166 = vpack.c.b16 %v2132, %v2130
    %v2167 = vpack.c.b16 %v2135, %v2133
    %v2168 = vpack.c.b16 %v2136, %v2134
    %2201 = vmatprep.subr.bf16.mxu0 %v2138
    %2202 = vmatpush1.bf16.msra.mxu0 %v2137
    %2203 = vmatprep.subr.bf16.mxu0 %v2140
    %2204 = vmatpush1.bf16.msra.mxu0 %v2139
    %2205 = vmatprep.subr.bf16.mxu0 %v2142
    %2206 = vmatpush1.bf16.msra.mxu0 %v2141
    %2207 = vmatprep.subr.bf16.mxu0 %v2144
    %2208 = vmatpush1.bf16.msra.mxu0 %v2143
    %2209 = vmatprep.subr.bf16.mxu0 %v2146
    %2210 = vmatpush1.bf16.msra.mxu0 %v2145
    %2211 = vmatprep.subr.bf16.mxu0 %v2148
    %2212 = vmatpush1.bf16.msra.mxu0 %v2147
    %2213 = vmatprep.subr.bf16.mxu0 %v2150
    %2214 = vmatpush1.bf16.msra.mxu0 %v2149
    %2215 = vmatprep.subr.bf16.mxu0 %v2152
    %2216 = vmatpush1.bf16.msra.mxu0 %v2151
    %2217 = vmatprep.subr.bf16.mxu0 %v2154
    %2218 = vmatpush1.bf16.msra.mxu0 %v2153
    %2219 = vmatprep.subr.bf16.mxu0 %v2156
    %2220 = vmatpush1.bf16.msra.mxu0 %v2155
    %2221 = vmatprep.subr.bf16.mxu0 %v2158
    %2222 = vmatpush1.bf16.msra.mxu0 %v2157
    %2223 = vmatprep.subr.bf16.mxu0 %v2160
    %2224 = vmatpush1.bf16.msra.mxu0 %v2159
    %2225 = vmatprep.subr.bf16.mxu0 %v2162
    %2226 = vmatpush1.bf16.msra.mxu0 %v2161
    %2227 = vmatprep.subr.bf16.mxu0 %v2164
    %2228 = vmatpush1.bf16.msra.mxu0 %v2163
    %2229 = vmatprep.subr.bf16.mxu0 %v2166
    %2230 = vmatpush1.bf16.msra.mxu0 %v2165
    %2231 = vmatprep.subr.bf16.mxu0 %v2168
    %2232 = vmatpush1.bf16.msra.mxu0 %v2167
    %2233 = vmatprep.mubr.bf16.mxu0 %v1663
    %2234 = vmatmul.mubr.bf16.gmra.mrb[0].mxu0 %v1662
    %v2235 = vpop.f32.mrb[0].mxu0
    %v2236 = vadd.f32 %v2035, %v2235
    %v2237 = vpop.f32.mrb[0].mxu0
    %v2238 = vadd.f32 %v2037, %v2237
    %v2239 = vpop.f32.mrb[0].mxu0
    %v2240 = vpop.f32.mrb[0].mxu0
    %2241 = vdwg.mxu0
    %2242 = vst [vmem:[#allocation2] sm:$0xff] %v2236
    %2243 = vst [vmem:[#allocation2 + $0x8] sm:$0xff] %v2238
    %v2244 = vpack.c.bf16 %v1331, %v1331
    %v2245 = vpack.c.bf16 %v1333, %v1333
    %v2246 = vpack.c.bf16 %v1417, %v1417
    %v2247 = vpack.c.bf16 %v1419, %v1419
    %v2248 = vpack.c.bf16 %v1503, %v1503
    %v2249 = vpack.c.bf16 %v1505, %v1505
    %2250 = vmatprep.subr.bf16.mxu0 %v2247
    %2251 = vmatpush1.bf16.xpose.msra.mxu0 %v2246
    %2252 = vmatprep.subr.bf16.mxu0 0
    %2253 = vmatpush1.bf16.xpose.msra.mxu0 0
    %2254 = vmatprep.subr.bf16.mxu0 0
    %2255 = vmatpush1.bf16.xpose.msra.mxu0 0
    %2256 = vmatprep.subr.bf16.mxu0 0
    %2257 = vmatpush1.bf16.xpose.msra.mxu0 0
    %2258 = vmatprep.subr.bf16.mxu0 0
    %2259 = vmatpush1.bf16.xpose.msra.mxu0 0
    %2260 = vmatprep.subr.bf16.mxu0 0
    %2261 = vmatpush1.bf16.xpose.msra.mxu0 0
    %2262 = vmatprep.subr.bf16.mxu0 0
    %2263 = vmatpush1.bf16.xpose.msra.mxu0 0
    %2264 = vmatprep.subr.bf16.mxu0 0
    %2265 = vmatpush1.bf16.xpose.msra.mxu0 0
    %2266 = vmatprep.subr.bf16.mxu0 0
    %2267 = vmatpush1.bf16.xpose.msra.mxu0 0
    %2268 = vmatprep.subr.bf16.mxu0 0
    %2269 = vmatpush1.bf16.xpose.msra.mxu0 0
    %2270 = vmatprep.subr.bf16.mxu0 0
    %2271 = vmatpush1.bf16.xpose.msra.mxu0 0
    %2272 = vmatprep.subr.bf16.mxu0 0
    %2273 = vmatpush1.bf16.xpose.msra.mxu0 0
    %2274 = vmatprep.subr.bf16.mxu0 0
    %2275 = vmatpush1.bf16.xpose.msra.mxu0 0
    %2276 = vmatprep.subr.bf16.mxu0 0
    %2277 = vmatpush1.bf16.xpose.msra.mxu0 0
    %2278 = vmatprep.subr.bf16.mxu0 0
    %2279 = vmatpush1.bf16.xpose.msra.mxu0 0
    %2280 = vmatprep.subr.bf16.mxu0 0
    %2281 = vmatpush1.bf16.xpose.msra.mxu0 0
    %2282 = vmatprep.mubr.bf16.mxu0 %v2245
    %2283 = vmatmul.mubr.bf16.gmra.mrb[0].mxu0 %v2244
    %v2284 = vpop.f32.mrb[0].mxu0
    %v2285 = vadd.f32 0.0, %v2284
    %v2286 = vpop.f32.mrb[0].mxu0
    %v2287 = vpop.f32.mrb[0].mxu0
    %v2288 = vpop.f32.mrb[0].mxu0
    %2289 = vdwg.mxu0
    %v2290 = vmul.f32 %v2285, 0.07071068
    %v2291 = vadd.f32 %v2290, %v73
    %v2292 = vsel %vm1598, %v2291, -inf
    %2293 = vmax.xlane.f32.xlu0 %v2292
    %v2294 = vpop.xlane.xlu0 %2293
    %v2295 = vsub.f32 %v2291, %v2294
    %v2296 = vmul.f32 %v2295, 1.442695
    %v2297 = vpow.pop %v2296
    %v2298 = vsel %vm1598, %v2297, 0.0
    %2299 = vadd.xlane.f32.xlu0 %v2298
    %v2300 = vpop.xlane.xlu0 %2299
    %v2301 = vrcp.pop %v2300
    %v2302 = vmul.f32 %v2297, %v2301
    %v2303 = vpack.c.bf16 %v2302, %v2302
    %v2305 = vsel %vm1598, %v2303, 0
    %v2308 = vsel %vm1614, %v2248, 0
    %v2311 = vsel %vm1614, %v2249, 0
    %2313 = vmatprep.subr.bf16.mxu0 %v2311
    %2314 = vmatpush1.bf16.msra.mxu0 %v2308
    %2315 = vmatprep.subr.bf16.mxu0 0
    %2316 = vmatpush1.bf16.msra.mxu0 0
    %2317 = vmatprep.subr.bf16.mxu0 0
    %2318 = vmatpush1.bf16.msra.mxu0 0
    %2319 = vmatprep.subr.bf16.mxu0 0
    %2320 = vmatpush1.bf16.msra.mxu0 0
    %2321 = vmatprep.subr.bf16.mxu0 0
    %2322 = vmatpush1.bf16.msra.mxu0 0
    %2323 = vmatprep.subr.bf16.mxu0 0
    %2324 = vmatpush1.bf16.msra.mxu0 0
    %2325 = vmatprep.subr.bf16.mxu0 0
    %2326 = vmatpush1.bf16.msra.mxu0 0
    %2327 = vmatprep.subr.bf16.mxu0 0
    %2328 = vmatpush1.bf16.msra.mxu0 0
    %2329 = vmatprep.subr.bf16.mxu0 0
    %2330 = vmatpush1.bf16.msra.mxu0 0
    %2331 = vmatprep.subr.bf16.mxu0 0
    %2332 = vmatpush1.bf16.msra.mxu0 0
    %2333 = vmatprep.subr.bf16.mxu0 0
    %2334 = vmatpush1.bf16.msra.mxu0 0
    %2335 = vmatprep.subr.bf16.mxu0 0
    %2336 = vmatpush1.bf16.msra.mxu0 0
    %2337 = vmatprep.subr.bf16.mxu0 0
    %2338 = vmatpush1.bf16.msra.mxu0 0
    %2339 = vmatprep.subr.bf16.mxu0 0
    %2340 = vmatpush1.bf16.msra.mxu0 0
    %2341 = vmatprep.subr.bf16.mxu0 0
    %2342 = vmatpush1.bf16.msra.mxu0 0
    %2343 = vmatprep.subr.bf16.mxu0 0
    %2344 = vmatpush1.bf16.msra.mxu0 0
    %2345 = vmatprep.mubr.bf16.mxu0 0
    %2346 = vmatmul.mubr.bf16.gmra.mrb[0].mxu0 %v2305
    %v2347 = vpop.f32.mrb[0].mxu0
    %v2348 = vadd.f32 0.0, %v2347
    %v2349 = vpop.f32.mrb[0].mxu0
    %v2350 = vadd.f32 0.0, %v2349
    %v2351 = vpop.f32.mrb[0].mxu0
    %v2352 = vpop.f32.mrb[0].mxu0
    %2353 = vdwg.mxu0
    %v2354 = vpack.c.bf16 %v2348, %v2348
    %v2355 = vpack.c.bf16 %v2350, %v2350
    %v2356 = vld [vmem:[#allocation6] sm:$0xff]
    %v2357 = vld [vmem:[#allocation6 + $0x8] sm:$0xff]
    %v2358 = vld [vmem:[#allocation6 + $0x10] sm:$0xff]
    %v2359 = vld [vmem:[#allocation6 + $0x18] sm:$0xff]
    %v2360 = vld [vmem:[#allocation6 + $0x20] sm:$0xff]
    %v2361 = vld [vmem:[#allocation6 + $0x28] sm:$0xff]
    %v2362 = vld [vmem:[#allocation6 + $0x30] sm:$0xff]
    %v2363 = vld [vmem:[#allocation6 + $0x38] sm:$0xff]
    %v2364 = vld [vmem:[#allocation6 + $0x40] sm:$0xff]
    %v2365 = vld [vmem:[#allocation6 + $0x48] sm:$0xff]
    %v2366 = vld [vmem:[#allocation6 + $0x50] sm:$0xff]
    %v2367 = vld [vmem:[#allocation6 + $0x58] sm:$0xff]
    %v2368 = vld [vmem:[#allocation6 + $0x60] sm:$0xff]
    %v2369 = vld [vmem:[#allocation6 + $0x68] sm:$0xff]
    %v2370 = vld [vmem:[#allocation6 + $0x70] sm:$0xff]
    %v2371 = vld [vmem:[#allocation6 + $0x78] sm:$0xff]
    %v2372 = vld [vmem:[#allocation6 + $0x80] sm:$0xff]
    %v2373 = vld [vmem:[#allocation6 + $0x88] sm:$0xff]
    %v2374 = vld [vmem:[#allocation6 + $0x90] sm:$0xff]
    %v2375 = vld [vmem:[#allocation6 + $0x98] sm:$0xff]
    %v2376 = vld [vmem:[#allocation6 + $0xa0] sm:$0xff]
    %v2377 = vld [vmem:[#allocation6 + $0xa8] sm:$0xff]
    %v2378 = vld [vmem:[#allocation6 + $0xb0] sm:$0xff]
    %v2379 = vld [vmem:[#allocation6 + $0xb8] sm:$0xff]
    %v2380 = vld [vmem:[#allocation6 + $0xc0] sm:$0xff]
    %v2381 = vld [vmem:[#allocation6 + $0xc8] sm:$0xff]
    %v2382 = vld [vmem:[#allocation6 + $0xd0] sm:$0xff]
    %v2383 = vld [vmem:[#allocation6 + $0xd8] sm:$0xff]
    %v2384 = vld [vmem:[#allocation6 + $0xe0] sm:$0xff]
    %v2385 = vld [vmem:[#allocation6 + $0xe8] sm:$0xff]
    %v2386 = vld [vmem:[#allocation6 + $0xf0] sm:$0xff]
    %v2387 = vld [vmem:[#allocation6 + $0xf8] sm:$0xff]
    %v2388 = vpack.c.bf16 %v1374, %v1374
    %v2389 = vpack.c.bf16 %v1376, %v1376
    %v2390 = vpack.c.bf16 %v1460, %v1460
    %v2391 = vpack.c.bf16 %v1462, %v1462
    %v2392 = vpack.c.bf16 %v1546, %v1546
    %v2393 = vpack.c.bf16 %v1548, %v1548
    %2394 = vmatprep.subr.bf16.mxu0 %v2391
    %2395 = vmatpush1.bf16.xpose.msra.mxu0 %v2390
    %2396 = vmatprep.subr.bf16.mxu0 0
    %2397 = vmatpush1.bf16.xpose.msra.mxu0 0
    %2398 = vmatprep.subr.bf16.mxu0 0
    %2399 = vmatpush1.bf16.xpose.msra.mxu0 0
    %2400 = vmatprep.subr.bf16.mxu0 0
    %2401 = vmatpush1.bf16.xpose.msra.mxu0 0
    %2402 = vmatprep.subr.bf16.mxu0 0
    %2403 = vmatpush1.bf16.xpose.msra.mxu0 0
    %2404 = vmatprep.subr.bf16.mxu0 0
    %2405 = vmatpush1.bf16.xpose.msra.mxu0 0
    %2406 = vmatprep.subr.bf16.mxu0 0
    %2407 = vmatpush1.bf16.xpose.msra.mxu0 0
    %2408 = vmatprep.subr.bf16.mxu0 0
    %2409 = vmatpush1.bf16.xpose.msra.mxu0 0
    %2410 = vmatprep.subr.bf16.mxu0 0
    %2411 = vmatpush1.bf16.xpose.msra.mxu0 0
    %2412 = vmatprep.subr.bf16.mxu0 0
    %2413 = vmatpush1.bf16.xpose.msra.mxu0 0
    %2414 = vmatprep.subr.bf16.mxu0 0
    %2415 = vmatpush1.bf16.xpose.msra.mxu0 0
    %2416 = vmatprep.subr.bf16.mxu0 0
    %2417 = vmatpush1.bf16.xpose.msra.mxu0 0
    %2418 = vmatprep.subr.bf16.mxu0 0
    %2419 = vmatpush1.bf16.xpose.msra.mxu0 0
    %2420 = vmatprep.subr.bf16.mxu0 0
    %2421 = vmatpush1.bf16.xpose.msra.mxu0 0
    %2422 = vmatprep.subr.bf16.mxu0 0
    %2423 = vmatpush1.bf16.xpose.msra.mxu0 0
    %2424 = vmatprep.subr.bf16.mxu0 0
    %2425 = vmatpush1.bf16.xpose.msra.mxu0 0
    %2426 = vmatprep.mubr.bf16.mxu0 %v2389
    %2427 = vmatmul.mubr.bf16.gmra.mrb[0].mxu0 %v2388
    %v2428 = vpop.f32.mrb[0].mxu0
    %v2429 = vadd.f32 0.0, %v2428
    %v2430 = vpop.f32.mrb[0].mxu0
    %v2431 = vpop.f32.mrb[0].mxu0
    %v2432 = vpop.f32.mrb[0].mxu0
    %2433 = vdwg.mxu0
    %v2434 = vmul.f32 %v2429, 0.07071068
    %v2435 = vadd.f32 %v2434, %v73
    %v2436 = vsel %vm1598, %v2435, -inf
    %2437 = vmax.xlane.f32.xlu0 %v2436
    %v2438 = vpop.xlane.xlu0 %2437
    %v2439 = vsub.f32 %v2435, %v2438
    %v2440 = vmul.f32 %v2439, 1.442695
    %v2441 = vpow.pop %v2440
    %v2442 = vsel %vm1598, %v2441, 0.0
    %2443 = vadd.xlane.f32.xlu0 %v2442
    %v2444 = vpop.xlane.xlu0 %2443
    %v2445 = vrcp.pop %v2444
    %v2446 = vmul.f32 %v2441, %v2445
    %v2447 = vpack.c.bf16 %v2446, %v2446
    %v2449 = vsel %vm1598, %v2447, 0
    %v2452 = vsel %vm1614, %v2392, 0
    %v2455 = vsel %vm1614, %v2393, 0
    %2457 = vmatprep.subr.bf16.mxu0 %v2455
    %2458 = vmatpush1.bf16.msra.mxu0 %v2452
    %2459 = vmatprep.subr.bf16.mxu0 0
    %2460 = vmatpush1.bf16.msra.mxu0 0
    %2461 = vmatprep.subr.bf16.mxu0 0
    %2462 = vmatpush1.bf16.msra.mxu0 0
    %2463 = vmatprep.subr.bf16.mxu0 0
    %2464 = vmatpush1.bf16.msra.mxu0 0
    %2465 = vmatprep.subr.bf16.mxu0 0
    %2466 = vmatpush1.bf16.msra.mxu0 0
    %2467 = vmatprep.subr.bf16.mxu0 0
    %2468 = vmatpush1.bf16.msra.mxu0 0
    %2469 = vmatprep.subr.bf16.mxu0 0
    %2470 = vmatpush1.bf16.msra.mxu0 0
    %2471 = vmatprep.subr.bf16.mxu0 0
    %2472 = vmatpush1.bf16.msra.mxu0 0
    %2473 = vmatprep.subr.bf16.mxu0 0
    %2474 = vmatpush1.bf16.msra.mxu0 0
    %2475 = vmatprep.subr.bf16.mxu0 0
    %2476 = vmatpush1.bf16.msra.mxu0 0
    %2477 = vmatprep.subr.bf16.mxu0 0
    %2478 = vmatpush1.bf16.msra.mxu0 0
    %2479 = vmatprep.subr.bf16.mxu0 0
    %2480 = vmatpush1.bf16.msra.mxu0 0
    %2481 = vmatprep.subr.bf16.mxu0 0
    %2482 = vmatpush1.bf16.msra.mxu0 0
    %2483 = vmatprep.subr.bf16.mxu0 0
    %2484 = vmatpush1.bf16.msra.mxu0 0
    %2485 = vmatprep.subr.bf16.mxu0 0
    %2486 = vmatpush1.bf16.msra.mxu0 0
    %2487 = vmatprep.subr.bf16.mxu0 0
    %2488 = vmatpush1.bf16.msra.mxu0 0
    %2489 = vmatprep.mubr.bf16.mxu0 0
    %2490 = vmatmul.mubr.bf16.gmra.mrb[0].mxu0 %v2449
    %v2491 = vpop.f32.mrb[0].mxu0
    %v2492 = vadd.f32 0.0, %v2491
    %v2493 = vpop.f32.mrb[0].mxu0
    %v2494 = vadd.f32 0.0, %v2493
    %v2495 = vpop.f32.mrb[0].mxu0
    %v2496 = vpop.f32.mrb[0].mxu0
    %2497 = vdwg.mxu0
    %v2498 = vpack.c.bf16 %v2492, %v2492
    %v2499 = vpack.c.bf16 %v2494, %v2494
    %v2500 = vld [vmem:[#allocation6 + $0x100] sm:$0xff]
    %v2501 = vld [vmem:[#allocation6 + $0x108] sm:$0xff]
    %v2502 = vld [vmem:[#allocation6 + $0x110] sm:$0xff]
    %v2503 = vld [vmem:[#allocation6 + $0x118] sm:$0xff]
    %v2504 = vld [vmem:[#allocation6 + $0x120] sm:$0xff]
    %v2505 = vld [vmem:[#allocation6 + $0x128] sm:$0xff]
    %v2506 = vld [vmem:[#allocation6 + $0x130] sm:$0xff]
    %v2507 = vld [vmem:[#allocation6 + $0x138] sm:$0xff]
    %v2508 = vld [vmem:[#allocation6 + $0x140] sm:$0xff]
    %v2509 = vld [vmem:[#allocation6 + $0x148] sm:$0xff]
    %v2510 = vld [vmem:[#allocation6 + $0x150] sm:$0xff]
    %v2511 = vld [vmem:[#allocation6 + $0x158] sm:$0xff]
    %v2512 = vld [vmem:[#allocation6 + $0x160] sm:$0xff]
    %v2513 = vld [vmem:[#allocation6 + $0x168] sm:$0xff]
    %v2514 = vld [vmem:[#allocation6 + $0x170] sm:$0xff]
    %v2515 = vld [vmem:[#allocation6 + $0x178] sm:$0xff]
    %v2516 = vld [vmem:[#allocation6 + $0x180] sm:$0xff]
    %v2517 = vld [vmem:[#allocation6 + $0x188] sm:$0xff]
    %v2518 = vld [vmem:[#allocation6 + $0x190] sm:$0xff]
    %v2519 = vld [vmem:[#allocation6 + $0x198] sm:$0xff]
    %v2520 = vld [vmem:[#allocation6 + $0x1a0] sm:$0xff]
    %v2521 = vld [vmem:[#allocation6 + $0x1a8] sm:$0xff]
    %v2522 = vld [vmem:[#allocation6 + $0x1b0] sm:$0xff]
    %v2523 = vld [vmem:[#allocation6 + $0x1b8] sm:$0xff]
    %v2524 = vld [vmem:[#allocation6 + $0x1c0] sm:$0xff]
    %v2525 = vld [vmem:[#allocation6 + $0x1c8] sm:$0xff]
    %v2526 = vld [vmem:[#allocation6 + $0x1d0] sm:$0xff]
    %v2527 = vld [vmem:[#allocation6 + $0x1d8] sm:$0xff]
    %v2528 = vld [vmem:[#allocation6 + $0x1e0] sm:$0xff]
    %v2529 = vld [vmem:[#allocation6 + $0x1e8] sm:$0xff]
    %v2530 = vld [vmem:[#allocation6 + $0x1f0] sm:$0xff]
    %v2531 = vld [vmem:[#allocation6 + $0x1f8] sm:$0xff]
    %v2564 = vunpack.c.l.b16 %v2500
    %v2565 = vunpack.c.h.b16 %v2500
    %v2566 = vunpack.c.l.b16 %v2501
    %v2567 = vunpack.c.h.b16 %v2501
    %v2568 = vunpack.c.l.b16 %v2502
    %v2569 = vunpack.c.h.b16 %v2502
    %v2570 = vunpack.c.l.b16 %v2503
    %v2571 = vunpack.c.h.b16 %v2503
    %v2572 = vunpack.c.l.b16 %v2504
    %v2573 = vunpack.c.h.b16 %v2504
    %v2574 = vunpack.c.l.b16 %v2505
    %v2575 = vunpack.c.h.b16 %v2505
    %v2576 = vunpack.c.l.b16 %v2506
    %v2577 = vunpack.c.h.b16 %v2506
    %v2578 = vunpack.c.l.b16 %v2507
    %v2579 = vunpack.c.h.b16 %v2507
    %v2580 = vunpack.c.l.b16 %v2508
    %v2581 = vunpack.c.h.b16 %v2508
    %v2582 = vunpack.c.l.b16 %v2509
    %v2583 = vunpack.c.h.b16 %v2509
    %v2584 = vunpack.c.l.b16 %v2510
    %v2585 = vunpack.c.h.b16 %v2510
    %v2586 = vunpack.c.l.b16 %v2511
    %v2587 = vunpack.c.h.b16 %v2511
    %v2588 = vunpack.c.l.b16 %v2512
    %v2589 = vunpack.c.h.b16 %v2512
    %v2590 = vunpack.c.l.b16 %v2513
    %v2591 = vunpack.c.h.b16 %v2513
    %v2592 = vunpack.c.l.b16 %v2514
    %v2593 = vunpack.c.h.b16 %v2514
    %v2594 = vunpack.c.l.b16 %v2515
    %v2595 = vunpack.c.h.b16 %v2515
    %v2596 = vunpack.c.l.b16 %v2516
    %v2597 = vunpack.c.h.b16 %v2516
    %v2598 = vunpack.c.l.b16 %v2517
    %v2599 = vunpack.c.h.b16 %v2517
    %v2600 = vunpack.c.l.b16 %v2518
    %v2601 = vunpack.c.h.b16 %v2518
    %v2602 = vunpack.c.l.b16 %v2519
    %v2603 = vunpack.c.h.b16 %v2519
    %v2604 = vunpack.c.l.b16 %v2520
    %v2605 = vunpack.c.h.b16 %v2520
    %v2606 = vunpack.c.l.b16 %v2521
    %v2607 = vunpack.c.h.b16 %v2521
    %v2608 = vunpack.c.l.b16 %v2522
    %v2609 = vunpack.c.h.b16 %v2522
    %v2610 = vunpack.c.l.b16 %v2523
    %v2611 = vunpack.c.h.b16 %v2523
    %v2612 = vunpack.c.l.b16 %v2524
    %v2613 = vunpack.c.h.b16 %v2524
    %v2614 = vunpack.c.l.b16 %v2525
    %v2615 = vunpack.c.h.b16 %v2525
    %v2616 = vunpack.c.l.b16 %v2526
    %v2617 = vunpack.c.h.b16 %v2526
    %v2618 = vunpack.c.l.b16 %v2527
    %v2619 = vunpack.c.h.b16 %v2527
    %v2620 = vunpack.c.l.b16 %v2528
    %v2621 = vunpack.c.h.b16 %v2528
    %v2622 = vunpack.c.l.b16 %v2529
    %v2623 = vunpack.c.h.b16 %v2529
    %v2624 = vunpack.c.l.b16 %v2530
    %v2625 = vunpack.c.h.b16 %v2530
    %v2626 = vunpack.c.l.b16 %v2531
    %v2627 = vunpack.c.h.b16 %v2531
    %v2628 = vpack.c.b16 %v2566, %v2564
    %v2629 = vpack.c.b16 %v2567, %v2565
    %v2630 = vpack.c.b16 %v2570, %v2568
    %v2631 = vpack.c.b16 %v2571, %v2569
    %v2632 = vpack.c.b16 %v2574, %v2572
    %v2633 = vpack.c.b16 %v2575, %v2573
    %v2634 = vpack.c.b16 %v2578, %v2576
    %v2635 = vpack.c.b16 %v2579, %v2577
    %v2636 = vpack.c.b16 %v2582, %v2580
    %v2637 = vpack.c.b16 %v2583, %v2581
    %v2638 = vpack.c.b16 %v2586, %v2584
    %v2639 = vpack.c.b16 %v2587, %v2585
    %v2640 = vpack.c.b16 %v2590, %v2588
    %v2641 = vpack.c.b16 %v2591, %v2589
    %v2642 = vpack.c.b16 %v2594, %v2592
    %v2643 = vpack.c.b16 %v2595, %v2593
    %v2644 = vpack.c.b16 %v2598, %v2596
    %v2645 = vpack.c.b16 %v2599, %v2597
    %v2646 = vpack.c.b16 %v2602, %v2600
    %v2647 = vpack.c.b16 %v2603, %v2601
    %v2648 = vpack.c.b16 %v2606, %v2604
    %v2649 = vpack.c.b16 %v2607, %v2605
    %v2650 = vpack.c.b16 %v2610, %v2608
    %v2651 = vpack.c.b16 %v2611, %v2609
    %v2652 = vpack.c.b16 %v2614, %v2612
    %v2653 = vpack.c.b16 %v2615, %v2613
    %v2654 = vpack.c.b16 %v2618, %v2616
    %v2655 = vpack.c.b16 %v2619, %v2617
    %v2656 = vpack.c.b16 %v2622, %v2620
    %v2657 = vpack.c.b16 %v2623, %v2621
    %v2658 = vpack.c.b16 %v2626, %v2624
    %v2659 = vpack.c.b16 %v2627, %v2625
    %2692 = vmatprep.subr.bf16.mxu0 %v2629
    %2693 = vmatpush1.bf16.msra.mxu0 %v2628
    %2694 = vmatprep.subr.bf16.mxu0 %v2631
    %2695 = vmatpush1.bf16.msra.mxu0 %v2630
    %2696 = vmatprep.subr.bf16.mxu0 %v2633
    %2697 = vmatpush1.bf16.msra.mxu0 %v2632
    %2698 = vmatprep.subr.bf16.mxu0 %v2635
    %2699 = vmatpush1.bf16.msra.mxu0 %v2634
    %2700 = vmatprep.subr.bf16.mxu0 %v2637
    %2701 = vmatpush1.bf16.msra.mxu0 %v2636
    %2702 = vmatprep.subr.bf16.mxu0 %v2639
    %2703 = vmatpush1.bf16.msra.mxu0 %v2638
    %2704 = vmatprep.subr.bf16.mxu0 %v2641
    %2705 = vmatpush1.bf16.msra.mxu0 %v2640
    %2706 = vmatprep.subr.bf16.mxu0 %v2643
    %2707 = vmatpush1.bf16.msra.mxu0 %v2642
    %2708 = vmatprep.subr.bf16.mxu0 %v2645
    %2709 = vmatpush1.bf16.msra.mxu0 %v2644
    %2710 = vmatprep.subr.bf16.mxu0 %v2647
    %2711 = vmatpush1.bf16.msra.mxu0 %v2646
    %2712 = vmatprep.subr.bf16.mxu0 %v2649
    %2713 = vmatpush1.bf16.msra.mxu0 %v2648
    %2714 = vmatprep.subr.bf16.mxu0 %v2651
    %2715 = vmatpush1.bf16.msra.mxu0 %v2650
    %2716 = vmatprep.subr.bf16.mxu0 %v2653
    %2717 = vmatpush1.bf16.msra.mxu0 %v2652
    %2718 = vmatprep.subr.bf16.mxu0 %v2655
    %2719 = vmatpush1.bf16.msra.mxu0 %v2654
    %2720 = vmatprep.subr.bf16.mxu0 %v2657
    %2721 = vmatpush1.bf16.msra.mxu0 %v2656
    %2722 = vmatprep.subr.bf16.mxu0 %v2659
    %2723 = vmatpush1.bf16.msra.mxu0 %v2658
    %2724 = vmatprep.mubr.bf16.mxu0 %v2499
    %2725 = vmatmul.mubr.bf16.gmra.mrb[0].mxu0 %v2498
    %v2726 = vpop.f32.mrb[0].mxu0
    %v2727 = vadd.f32 0.0, %v2726
    %v2728 = vpop.f32.mrb[0].mxu0
    %v2729 = vadd.f32 0.0, %v2728
    %v2730 = vpop.f32.mrb[0].mxu0
    %v2731 = vpop.f32.mrb[0].mxu0
    %2732 = vdwg.mxu0
    %v2765 = vunpack.c.l.b16 %v2356
    %v2766 = vunpack.c.h.b16 %v2356
    %v2767 = vunpack.c.l.b16 %v2357
    %v2768 = vunpack.c.h.b16 %v2357
    %v2769 = vunpack.c.l.b16 %v2358
    %v2770 = vunpack.c.h.b16 %v2358
    %v2771 = vunpack.c.l.b16 %v2359
    %v2772 = vunpack.c.h.b16 %v2359
    %v2773 = vunpack.c.l.b16 %v2360
    %v2774 = vunpack.c.h.b16 %v2360
    %v2775 = vunpack.c.l.b16 %v2361
    %v2776 = vunpack.c.h.b16 %v2361
    %v2777 = vunpack.c.l.b16 %v2362
    %v2778 = vunpack.c.h.b16 %v2362
    %v2779 = vunpack.c.l.b16 %v2363
    %v2780 = vunpack.c.h.b16 %v2363
    %v2781 = vunpack.c.l.b16 %v2364
    %v2782 = vunpack.c.h.b16 %v2364
    %v2783 = vunpack.c.l.b16 %v2365
    %v2784 = vunpack.c.h.b16 %v2365
    %v2785 = vunpack.c.l.b16 %v2366
    %v2786 = vunpack.c.h.b16 %v2366
    %v2787 = vunpack.c.l.b16 %v2367
    %v2788 = vunpack.c.h.b16 %v2367
    %v2789 = vunpack.c.l.b16 %v2368
    %v2790 = vunpack.c.h.b16 %v2368
    %v2791 = vunpack.c.l.b16 %v2369
    %v2792 = vunpack.c.h.b16 %v2369
    %v2793 = vunpack.c.l.b16 %v2370
    %v2794 = vunpack.c.h.b16 %v2370
    %v2795 = vunpack.c.l.b16 %v2371
    %v2796 = vunpack.c.h.b16 %v2371
    %v2797 = vunpack.c.l.b16 %v2372
    %v2798 = vunpack.c.h.b16 %v2372
    %v2799 = vunpack.c.l.b16 %v2373
    %v2800 = vunpack.c.h.b16 %v2373
    %v2801 = vunpack.c.l.b16 %v2374
    %v2802 = vunpack.c.h.b16 %v2374
    %v2803 = vunpack.c.l.b16 %v2375
    %v2804 = vunpack.c.h.b16 %v2375
    %v2805 = vunpack.c.l.b16 %v2376
    %v2806 = vunpack.c.h.b16 %v2376
    %v2807 = vunpack.c.l.b16 %v2377
    %v2808 = vunpack.c.h.b16 %v2377
    %v2809 = vunpack.c.l.b16 %v2378
    %v2810 = vunpack.c.h.b16 %v2378
    %v2811 = vunpack.c.l.b16 %v2379
    %v2812 = vunpack.c.h.b16 %v2379
    %v2813 = vunpack.c.l.b16 %v2380
    %v2814 = vunpack.c.h.b16 %v2380
    %v2815 = vunpack.c.l.b16 %v2381
    %v2816 = vunpack.c.h.b16 %v2381
    %v2817 = vunpack.c.l.b16 %v2382
    %v2818 = vunpack.c.h.b16 %v2382
    %v2819 = vunpack.c.l.b16 %v2383
    %v2820 = vunpack.c.h.b16 %v2383
    %v2821 = vunpack.c.l.b16 %v2384
    %v2822 = vunpack.c.h.b16 %v2384
    %v2823 = vunpack.c.l.b16 %v2385
    %v2824 = vunpack.c.h.b16 %v2385
    %v2825 = vunpack.c.l.b16 %v2386
    %v2826 = vunpack.c.h.b16 %v2386
    %v2827 = vunpack.c.l.b16 %v2387
    %v2828 = vunpack.c.h.b16 %v2387
    %v2829 = vpack.c.b16 %v2767, %v2765
    %v2830 = vpack.c.b16 %v2768, %v2766
    %v2831 = vpack.c.b16 %v2771, %v2769
    %v2832 = vpack.c.b16 %v2772, %v2770
    %v2833 = vpack.c.b16 %v2775, %v2773
    %v2834 = vpack.c.b16 %v2776, %v2774
    %v2835 = vpack.c.b16 %v2779, %v2777
    %v2836 = vpack.c.b16 %v2780, %v2778
    %v2837 = vpack.c.b16 %v2783, %v2781
    %v2838 = vpack.c.b16 %v2784, %v2782
    %v2839 = vpack.c.b16 %v2787, %v2785
    %v2840 = vpack.c.b16 %v2788, %v2786
    %v2841 = vpack.c.b16 %v2791, %v2789
    %v2842 = vpack.c.b16 %v2792, %v2790
    %v2843 = vpack.c.b16 %v2795, %v2793
    %v2844 = vpack.c.b16 %v2796, %v2794
    %v2845 = vpack.c.b16 %v2799, %v2797
    %v2846 = vpack.c.b16 %v2800, %v2798
    %v2847 = vpack.c.b16 %v2803, %v2801
    %v2848 = vpack.c.b16 %v2804, %v2802
    %v2849 = vpack.c.b16 %v2807, %v2805
    %v2850 = vpack.c.b16 %v2808, %v2806
    %v2851 = vpack.c.b16 %v2811, %v2809
    %v2852 = vpack.c.b16 %v2812, %v2810
    %v2853 = vpack.c.b16 %v2815, %v2813
    %v2854 = vpack.c.b16 %v2816, %v2814
    %v2855 = vpack.c.b16 %v2819, %v2817
    %v2856 = vpack.c.b16 %v2820, %v2818
    %v2857 = vpack.c.b16 %v2823, %v2821
    %v2858 = vpack.c.b16 %v2824, %v2822
    %v2859 = vpack.c.b16 %v2827, %v2825
    %v2860 = vpack.c.b16 %v2828, %v2826
    %2893 = vmatprep.subr.bf16.mxu0 %v2830
    %2894 = vmatpush1.bf16.msra.mxu0 %v2829
    %2895 = vmatprep.subr.bf16.mxu0 %v2832
    %2896 = vmatpush1.bf16.msra.mxu0 %v2831
    %2897 = vmatprep.subr.bf16.mxu0 %v2834
    %2898 = vmatpush1.bf16.msra.mxu0 %v2833
    %2899 = vmatprep.subr.bf16.mxu0 %v2836
    %2900 = vmatpush1.bf16.msra.mxu0 %v2835
    %2901 = vmatprep.subr.bf16.mxu0 %v2838
    %2902 = vmatpush1.bf16.msra.mxu0 %v2837
    %2903 = vmatprep.subr.bf16.mxu0 %v2840
    %2904 = vmatpush1.bf16.msra.mxu0 %v2839
    %2905 = vmatprep.subr.bf16.mxu0 %v2842
    %2906 = vmatpush1.bf16.msra.mxu0 %v2841
    %2907 = vmatprep.subr.bf16.mxu0 %v2844
    %2908 = vmatpush1.bf16.msra.mxu0 %v2843
    %2909 = vmatprep.subr.bf16.mxu0 %v2846
    %2910 = vmatpush1.bf16.msra.mxu0 %v2845
    %2911 = vmatprep.subr.bf16.mxu0 %v2848
    %2912 = vmatpush1.bf16.msra.mxu0 %v2847
    %2913 = vmatprep.subr.bf16.mxu0 %v2850
    %2914 = vmatpush1.bf16.msra.mxu0 %v2849
    %2915 = vmatprep.subr.bf16.mxu0 %v2852
    %2916 = vmatpush1.bf16.msra.mxu0 %v2851
    %2917 = vmatprep.subr.bf16.mxu0 %v2854
    %2918 = vmatpush1.bf16.msra.mxu0 %v2853
    %2919 = vmatprep.subr.bf16.mxu0 %v2856
    %2920 = vmatpush1.bf16.msra.mxu0 %v2855
    %2921 = vmatprep.subr.bf16.mxu0 %v2858
    %2922 = vmatpush1.bf16.msra.mxu0 %v2857
    %2923 = vmatprep.subr.bf16.mxu0 %v2860
    %2924 = vmatpush1.bf16.msra.mxu0 %v2859
    %2925 = vmatprep.mubr.bf16.mxu0 %v2355
    %2926 = vmatmul.mubr.bf16.gmra.mrb[0].mxu0 %v2354
    %v2927 = vpop.f32.mrb[0].mxu0
    %v2928 = vadd.f32 %v2727, %v2927
    %v2929 = vpop.f32.mrb[0].mxu0
    %v2930 = vadd.f32 %v2729, %v2929
    %v2931 = vpop.f32.mrb[0].mxu0
    %v2932 = vpop.f32.mrb[0].mxu0
    %2933 = vdwg.mxu0
    %2934 = vst [vmem:[#allocation2 + $0x10] sm:$0xff] %v2928
    %2935 = vst [vmem:[#allocation2 + $0x18] sm:$0xff] %v2930
    %v2936 = vld [vmem:[#allocation2] sm:$0xff]
    %v2937 = vld [vmem:[#allocation2 + $0x8] sm:$0xff]
    %v2938 = vld [vmem:[#allocation2 + $0x10] sm:$0xff]
    %v2939 = vld [vmem:[#allocation2 + $0x18] sm:$0xff]
    %v2940 = vld [vmem:[%s6] ss:$8 sm:$0x3]
    %v2942 = vlaneseq
    %v2943 = vshrl.u32 %v2942, 7
    %v2944 = vsub.s32 0, %v2943
    %v2945 = vrot.slane %v2940, %v2944
    %v2946 = vlaneseq
    %v2947 = vshrl.u32 %v2946, 7
    %v2948 = vsub.s32 1, %v2947
    %v2949 = vrot.slane %v2940, %v2948
    %v2952 = vadd.f32 %v2936, %v2945
    %v2953 = vadd.f32 %v2937, %v2949
    %v2954 = vadd.f32 %v2938, %v2945
    %v2955 = vadd.f32 %v2939, %v2949
    %v2956 = vlaneseq
    %v2957 = vand.u32 %v2956, 127
    %v2958 = vadd.s32 %v2957, 128
    %vm2959 = vcmp.lt.s32.totalorder %v2957, 200
    %vm2960 = vcmp.lt.s32.totalorder %v2958, 200
    %v2961 = vsel %vm2959, 1, 0
    %v2962 = vsel %vm2960, 1, 0
    %v2963 = vcvt.s32.f32 %v2961
    %v2964 = vcvt.s32.f32 %v2962
    %v2965 = vadd.f32 %v2952, %v69
    %v2966 = vadd.f32 %v2953, %v70
    %v2967 = vadd.f32 %v2954, %v71
    %v2968 = vadd.f32 %v2955, %v72
    %s2969 = scalar_lea.vmem %s6, 3
    %v2970 = vld [vmem:[%s2969] ss:$8 sm:$0x3]
    %s2971 = scalar_lea.vmem %s6, 4
    %v2972 = vld [vmem:[%s2971] ss:$8 sm:$0x3]
    %v2973 = vadd.f32 %v2965, %v2966
    %2974 = vadd.xlane.f32.xlu0 %v2973
    %v2975 = vpop.xlane.xlu0 %2974
    %v2976 = vadd.f32 %v2967, %v2968
    %2977 = vadd.xlane.f32.xlu0 %v2976
    %v2978 = vpop.xlane.xlu0 %2977
    %v2979 = vmul.f32 %v2975, 0.005
    %v2980 = vmul.f32 %v2978, 0.005
    %v2981 = vsub.f32 %v2965, %v2979
    %v2982 = vsub.f32 %v2966, %v2979
    %v2983 = vsub.f32 %v2967, %v2980
    %v2984 = vsub.f32 %v2968, %v2980
    %v2985 = vmul.f32 %v2981, %v2963
    %v2986 = vmul.f32 %v2982, %v2964
    %v2987 = vmul.f32 %v2983, %v2963
    %v2988 = vmul.f32 %v2984, %v2964
    %v2989 = vmul.f32 %v2985, %v2985
    %v2990 = vmul.f32 %v2986, %v2986
    %v2991 = vmul.f32 %v2987, %v2987
    %v2992 = vmul.f32 %v2988, %v2988
    %v2993 = vadd.f32 %v2989, %v2990
    %2994 = vadd.xlane.f32.xlu0 %v2993
    %v2995 = vpop.xlane.xlu0 %2994
    %v2996 = vadd.f32 %v2991, %v2992
    %2997 = vadd.xlane.f32.xlu0 %v2996
    %v2998 = vpop.xlane.xlu0 %2997
    %v2999 = vmul.f32 %v2995, 0.005
    %v3000 = vmul.f32 %v2998, 0.005
    %v3001 = vadd.f32 %v2999, 1e-05
    %v3002 = vadd.f32 %v3000, 1e-05
    %v3003 = vrsqrt.pop %v3001
    %v3004 = vrsqrt.pop %v3002
    %v3005 = vmul.f32 %v2985, %v3003
    %v3006 = vmul.f32 %v2986, %v3003
    %v3007 = vmul.f32 %v2987, %v3004
    %v3008 = vmul.f32 %v2988, %v3004
    %v3010 = vlaneseq
    %v3011 = vshrl.u32 %v3010, 7
    %v3012 = vsub.s32 0, %v3011
    %v3013 = vrot.slane %v2970, %v3012
    %v3014 = vlaneseq
    %v3015 = vshrl.u32 %v3014, 7
    %v3016 = vsub.s32 1, %v3015
    %v3017 = vrot.slane %v2970, %v3016
    %v3020 = vmul.f32 %v3005, %v3013
    %v3021 = vmul.f32 %v3006, %v3017
    %v3022 = vmul.f32 %v3007, %v3013
    %v3023 = vmul.f32 %v3008, %v3017
    %v3025 = vlaneseq
    %v3026 = vshrl.u32 %v3025, 7
    %v3027 = vsub.s32 0, %v3026
    %v3028 = vrot.slane %v2972, %v3027
    %v3029 = vlaneseq
    %v3030 = vshrl.u32 %v3029, 7
    %v3031 = vsub.s32 1, %v3030
    %v3032 = vrot.slane %v2972, %v3031
    %v3035 = vadd.f32 %v3020, %v3028
    %v3036 = vadd.f32 %v3021, %v3032
    %v3037 = vadd.f32 %v3022, %v3028
    %v3038 = vadd.f32 %v3023, %v3032
    %v3039 = vpack.c.bf16 %v3037, %v3035
    %v3040 = vpack.c.bf16 %v3038, %v3036
    %v3041 = vld [vmem:[#allocation8] sm:$0xff]
    %v3042 = vld [vmem:[#allocation8 + $0x8] sm:$0xff]
    %v3043 = vld [vmem:[#allocation8 + $0x10] sm:$0xff]
    %v3044 = vld [vmem:[#allocation8 + $0x18] sm:$0xff]
    %v3045 = vld [vmem:[#allocation8 + $0x20] sm:$0xff]
    %v3046 = vld [vmem:[#allocation8 + $0x28] sm:$0xff]
    %v3047 = vld [vmem:[#allocation8 + $0x30] sm:$0xff]
    %v3048 = vld [vmem:[#allocation8 + $0x38] sm:$0xff]
    %v3049 = vld [vmem:[#allocation8 + $0x40] sm:$0xff]
    %v3050 = vld [vmem:[#allocation8 + $0x48] sm:$0xff]
    %v3051 = vld [vmem:[#allocation8 + $0x50] sm:$0xff]
    %v3052 = vld [vmem:[#allocation8 + $0x58] sm:$0xff]
    %v3053 = vld [vmem:[#allocation8 + $0x60] sm:$0xff]
    %v3054 = vld [vmem:[#allocation8 + $0x68] sm:$0xff]
    %v3055 = vld [vmem:[#allocation8 + $0x70] sm:$0xff]
    %v3056 = vld [vmem:[#allocation8 + $0x78] sm:$0xff]
    %v3057 = vld [vmem:[#allocation8 + $0x80] sm:$0xff]
    %v3058 = vld [vmem:[#allocation8 + $0x88] sm:$0xff]
    %v3059 = vld [vmem:[#allocation8 + $0x90] sm:$0xff]
    %v3060 = vld [vmem:[#allocation8 + $0x98] sm:$0xff]
    %v3061 = vld [vmem:[#allocation8 + $0xa0] sm:$0xff]
    %v3062 = vld [vmem:[#allocation8 + $0xa8] sm:$0xff]
    %v3063 = vld [vmem:[#allocation8 + $0xb0] sm:$0xff]
    %v3064 = vld [vmem:[#allocation8 + $0xb8] sm:$0xff]
    %v3065 = vld [vmem:[#allocation8 + $0xc0] sm:$0xff]
    %v3066 = vld [vmem:[#allocation8 + $0xc8] sm:$0xff]
    %v3067 = vld [vmem:[#allocation8 + $0xd0] sm:$0xff]
    %v3068 = vld [vmem:[#allocation8 + $0xd8] sm:$0xff]
    %v3069 = vld [vmem:[#allocation8 + $0xe0] sm:$0xff]
    %v3070 = vld [vmem:[#allocation8 + $0xe8] sm:$0xff]
    %v3071 = vld [vmem:[#allocation8 + $0xf0] sm:$0xff]
    %v3072 = vld [vmem:[#allocation8 + $0xf8] sm:$0xff]
    %s3073 = scalar_lea.vmem %s6, 1
    %v3074 = vld [vmem:[%s3073] ss:$8 sm:$0x3]
    %v3076 = vlaneseq
    %v3077 = vshrl.u32 %v3076, 7
    %v3078 = vsub.s32 0, %v3077
    %v3079 = vrot.slane %v3074, %v3078
    %v3080 = vlaneseq
    %v3081 = vshrl.u32 %v3080, 7
    %v3082 = vsub.s32 1, %v3081
    %v3083 = vrot.slane %v3074, %v3082
    %v3118 = vunpack.c.l.b16 %v3041
    %v3119 = vunpack.c.h.b16 %v3041
    %v3120 = vunpack.c.l.b16 %v3042
    %v3121 = vunpack.c.h.b16 %v3042
    %v3122 = vunpack.c.l.b16 %v3043
    %v3123 = vunpack.c.h.b16 %v3043
    %v3124 = vunpack.c.l.b16 %v3044
    %v3125 = vunpack.c.h.b16 %v3044
    %v3126 = vunpack.c.l.b16 %v3045
    %v3127 = vunpack.c.h.b16 %v3045
    %v3128 = vunpack.c.l.b16 %v3046
    %v3129 = vunpack.c.h.b16 %v3046
    %v3130 = vunpack.c.l.b16 %v3047
    %v3131 = vunpack.c.h.b16 %v3047
    %v3132 = vunpack.c.l.b16 %v3048
    %v3133 = vunpack.c.h.b16 %v3048
    %v3134 = vunpack.c.l.b16 %v3049
    %v3135 = vunpack.c.h.b16 %v3049
    %v3136 = vunpack.c.l.b16 %v3050
    %v3137 = vunpack.c.h.b16 %v3050
    %v3138 = vunpack.c.l.b16 %v3051
    %v3139 = vunpack.c.h.b16 %v3051
    %v3140 = vunpack.c.l.b16 %v3052
    %v3141 = vunpack.c.h.b16 %v3052
    %v3142 = vunpack.c.l.b16 %v3053
    %v3143 = vunpack.c.h.b16 %v3053
    %v3144 = vunpack.c.l.b16 %v3054
    %v3145 = vunpack.c.h.b16 %v3054
    %v3146 = vunpack.c.l.b16 %v3055
    %v3147 = vunpack.c.h.b16 %v3055
    %v3148 = vunpack.c.l.b16 %v3056
    %v3149 = vunpack.c.h.b16 %v3056
    %v3150 = vunpack.c.l.b16 %v3057
    %v3151 = vunpack.c.h.b16 %v3057
    %v3152 = vunpack.c.l.b16 %v3058
    %v3153 = vunpack.c.h.b16 %v3058
    %v3154 = vunpack.c.l.b16 %v3059
    %v3155 = vunpack.c.h.b16 %v3059
    %v3156 = vunpack.c.l.b16 %v3060
    %v3157 = vunpack.c.h.b16 %v3060
    %v3158 = vunpack.c.l.b16 %v3061
    %v3159 = vunpack.c.h.b16 %v3061
    %v3160 = vunpack.c.l.b16 %v3062
    %v3161 = vunpack.c.h.b16 %v3062
    %v3162 = vunpack.c.l.b16 %v3063
    %v3163 = vunpack.c.h.b16 %v3063
    %v3164 = vunpack.c.l.b16 %v3064
    %v3165 = vunpack.c.h.b16 %v3064
    %v3166 = vunpack.c.l.b16 %v3065
    %v3167 = vunpack.c.h.b16 %v3065
    %v3168 = vunpack.c.l.b16 %v3066
    %v3169 = vunpack.c.h.b16 %v3066
    %v3170 = vunpack.c.l.b16 %v3067
    %v3171 = vunpack.c.h.b16 %v3067
    %v3172 = vunpack.c.l.b16 %v3068
    %v3173 = vunpack.c.h.b16 %v3068
    %v3174 = vunpack.c.l.b16 %v3069
    %v3175 = vunpack.c.h.b16 %v3069
    %v3176 = vunpack.c.l.b16 %v3070
    %v3177 = vunpack.c.h.b16 %v3070
    %v3178 = vunpack.c.l.b16 %v3071
    %v3179 = vunpack.c.h.b16 %v3071
    %v3180 = vunpack.c.l.b16 %v3072
    %v3181 = vunpack.c.h.b16 %v3072
    %v3182 = vpack.c.b16 %v3120, %v3118
    %v3183 = vpack.c.b16 %v3121, %v3119
    %v3184 = vpack.c.b16 %v3124, %v3122
    %v3185 = vpack.c.b16 %v3125, %v3123
    %v3186 = vpack.c.b16 %v3128, %v3126
    %v3187 = vpack.c.b16 %v3129, %v3127
    %v3188 = vpack.c.b16 %v3132, %v3130
    %v3189 = vpack.c.b16 %v3133, %v3131
    %v3190 = vpack.c.b16 %v3136, %v3134
    %v3191 = vpack.c.b16 %v3137, %v3135
    %v3192 = vpack.c.b16 %v3140, %v3138
    %v3193 = vpack.c.b16 %v3141, %v3139
    %v3194 = vpack.c.b16 %v3144, %v3142
    %v3195 = vpack.c.b16 %v3145, %v3143
    %v3196 = vpack.c.b16 %v3148, %v3146
    %v3197 = vpack.c.b16 %v3149, %v3147
    %v3198 = vpack.c.b16 %v3152, %v3150
    %v3199 = vpack.c.b16 %v3153, %v3151
    %v3200 = vpack.c.b16 %v3156, %v3154
    %v3201 = vpack.c.b16 %v3157, %v3155
    %v3202 = vpack.c.b16 %v3160, %v3158
    %v3203 = vpack.c.b16 %v3161, %v3159
    %v3204 = vpack.c.b16 %v3164, %v3162
    %v3205 = vpack.c.b16 %v3165, %v3163
    %v3206 = vpack.c.b16 %v3168, %v3166
    %v3207 = vpack.c.b16 %v3169, %v3167
    %v3208 = vpack.c.b16 %v3172, %v3170
    %v3209 = vpack.c.b16 %v3173, %v3171
    %v3210 = vpack.c.b16 %v3176, %v3174
    %v3211 = vpack.c.b16 %v3177, %v3175
    %v3212 = vpack.c.b16 %v3180, %v3178
    %v3213 = vpack.c.b16 %v3181, %v3179
    %3246 = vmatprep.subr.bf16.mxu0 %v3183
    %3247 = vmatpush1.bf16.msra.mxu0 %v3182
    %3248 = vmatprep.subr.bf16.mxu0 %v3185
    %3249 = vmatpush1.bf16.msra.mxu0 %v3184
    %3250 = vmatprep.subr.bf16.mxu0 %v3187
    %3251 = vmatpush1.bf16.msra.mxu0 %v3186
    %3252 = vmatprep.subr.bf16.mxu0 %v3189
    %3253 = vmatpush1.bf16.msra.mxu0 %v3188
    %3254 = vmatprep.subr.bf16.mxu0 %v3191
    %3255 = vmatpush1.bf16.msra.mxu0 %v3190
    %3256 = vmatprep.subr.bf16.mxu0 %v3193
    %3257 = vmatpush1.bf16.msra.mxu0 %v3192
    %3258 = vmatprep.subr.bf16.mxu0 %v3195
    %3259 = vmatpush1.bf16.msra.mxu0 %v3194
    %3260 = vmatprep.subr.bf16.mxu0 %v3197
    %3261 = vmatpush1.bf16.msra.mxu0 %v3196
    %3262 = vmatprep.subr.bf16.mxu0 %v3199
    %3263 = vmatpush1.bf16.msra.mxu0 %v3198
    %3264 = vmatprep.subr.bf16.mxu0 %v3201
    %3265 = vmatpush1.bf16.msra.mxu0 %v3200
    %3266 = vmatprep.subr.bf16.mxu0 %v3203
    %3267 = vmatpush1.bf16.msra.mxu0 %v3202
    %3268 = vmatprep.subr.bf16.mxu0 %v3205
    %3269 = vmatpush1.bf16.msra.mxu0 %v3204
    %3270 = vmatprep.subr.bf16.mxu0 %v3207
    %3271 = vmatpush1.bf16.msra.mxu0 %v3206
    %3272 = vmatprep.subr.bf16.mxu0 %v3209
    %3273 = vmatpush1.bf16.msra.mxu0 %v3208
    %3274 = vmatprep.subr.bf16.mxu0 %v3211
    %3275 = vmatpush1.bf16.msra.mxu0 %v3210
    %3276 = vmatprep.subr.bf16.mxu0 %v3213
    %3277 = vmatpush1.bf16.msra.mxu0 %v3212
    %3278 = vmatprep.mubr.bf16.mxu0 %v3040
    %3279 = vmatmul.mubr.bf16.gmra.mrb[0].mxu0 %v3039
    %v3280 = vpop.f32.mrb[0].mxu0
    %v3281 = vadd.f32 %v3079, %v3280
    %v3282 = vpop.f32.mrb[0].mxu0
    %v3283 = vadd.f32 %v3083, %v3282
    %v3284 = vpop.f32.mrb[0].mxu0
    %v3285 = vadd.f32 %v3079, %v3284
    %v3286 = vpop.f32.mrb[0].mxu0
    %v3287 = vadd.f32 %v3083, %v3286
    %3288 = vdwg.mxu0
    %v3289 = vmax.f32 %v3281, 0.0
    %v3290 = vmax.f32 %v3283, 0.0
    %v3291 = vmax.f32 %v3285, 0.0
    %v3292 = vmax.f32 %v3287, 0.0
    %v3293 = vpack.c.bf16 %v3291, %v3289
    %v3294 = vpack.c.bf16 %v3292, %v3290
    %s3295 = scalar_lea.vmem [#allocation8], 256
    %v3296 = vld [vmem:[%s3295] sm:$0xff]
    %v3297 = vld [vmem:[%s3295 + $0x8] sm:$0xff]
    %v3298 = vld [vmem:[%s3295 + $0x10] sm:$0xff]
    %v3299 = vld [vmem:[%s3295 + $0x18] sm:$0xff]
    %v3300 = vld [vmem:[%s3295 + $0x20] sm:$0xff]
    %v3301 = vld [vmem:[%s3295 + $0x28] sm:$0xff]
    %v3302 = vld [vmem:[%s3295 + $0x30] sm:$0xff]
    %v3303 = vld [vmem:[%s3295 + $0x38] sm:$0xff]
    %v3304 = vld [vmem:[%s3295 + $0x40] sm:$0xff]
    %v3305 = vld [vmem:[%s3295 + $0x48] sm:$0xff]
    %v3306 = vld [vmem:[%s3295 + $0x50] sm:$0xff]
    %v3307 = vld [vmem:[%s3295 + $0x58] sm:$0xff]
    %v3308 = vld [vmem:[%s3295 + $0x60] sm:$0xff]
    %v3309 = vld [vmem:[%s3295 + $0x68] sm:$0xff]
    %v3310 = vld [vmem:[%s3295 + $0x70] sm:$0xff]
    %v3311 = vld [vmem:[%s3295 + $0x78] sm:$0xff]
    %v3312 = vld [vmem:[%s3295 + $0x80] sm:$0xff]
    %v3313 = vld [vmem:[%s3295 + $0x88] sm:$0xff]
    %v3314 = vld [vmem:[%s3295 + $0x90] sm:$0xff]
    %v3315 = vld [vmem:[%s3295 + $0x98] sm:$0xff]
    %v3316 = vld [vmem:[%s3295 + $0xa0] sm:$0xff]
    %v3317 = vld [vmem:[%s3295 + $0xa8] sm:$0xff]
    %v3318 = vld [vmem:[%s3295 + $0xb0] sm:$0xff]
    %v3319 = vld [vmem:[%s3295 + $0xb8] sm:$0xff]
    %v3320 = vld [vmem:[%s3295 + $0xc0] sm:$0xff]
    %v3321 = vld [vmem:[%s3295 + $0xc8] sm:$0xff]
    %v3322 = vld [vmem:[%s3295 + $0xd0] sm:$0xff]
    %v3323 = vld [vmem:[%s3295 + $0xd8] sm:$0xff]
    %v3324 = vld [vmem:[%s3295 + $0xe0] sm:$0xff]
    %v3325 = vld [vmem:[%s3295 + $0xe8] sm:$0xff]
    %v3326 = vld [vmem:[%s3295 + $0xf0] sm:$0xff]
    %v3327 = vld [vmem:[%s3295 + $0xf8] sm:$0xff]
    %s3328 = scalar_lea.vmem %s6, 2
    %v3329 = vld [vmem:[%s3328] ss:$8 sm:$0x3]
    %v3331 = vlaneseq
    %v3332 = vshrl.u32 %v3331, 7
    %v3333 = vsub.s32 0, %v3332
    %v3334 = vrot.slane %v3329, %v3333
    %v3335 = vlaneseq
    %v3336 = vshrl.u32 %v3335, 7
    %v3337 = vsub.s32 1, %v3336
    %v3338 = vrot.slane %v3329, %v3337
    %v3373 = vunpack.c.l.b16 %v3296
    %v3374 = vunpack.c.h.b16 %v3296
    %v3375 = vunpack.c.l.b16 %v3297
    %v3376 = vunpack.c.h.b16 %v3297
    %v3377 = vunpack.c.l.b16 %v3298
    %v3378 = vunpack.c.h.b16 %v3298
    %v3379 = vunpack.c.l.b16 %v3299
    %v3380 = vunpack.c.h.b16 %v3299
    %v3381 = vunpack.c.l.b16 %v3300
    %v3382 = vunpack.c.h.b16 %v3300
    %v3383 = vunpack.c.l.b16 %v3301
    %v3384 = vunpack.c.h.b16 %v3301
    %v3385 = vunpack.c.l.b16 %v3302
    %v3386 = vunpack.c.h.b16 %v3302
    %v3387 = vunpack.c.l.b16 %v3303
    %v3388 = vunpack.c.h.b16 %v3303
    %v3389 = vunpack.c.l.b16 %v3304
    %v3390 = vunpack.c.h.b16 %v3304
    %v3391 = vunpack.c.l.b16 %v3305
    %v3392 = vunpack.c.h.b16 %v3305
    %v3393 = vunpack.c.l.b16 %v3306
    %v3394 = vunpack.c.h.b16 %v3306
    %v3395 = vunpack.c.l.b16 %v3307
    %v3396 = vunpack.c.h.b16 %v3307
    %v3397 = vunpack.c.l.b16 %v3308
    %v3398 = vunpack.c.h.b16 %v3308
    %v3399 = vunpack.c.l.b16 %v3309
    %v3400 = vunpack.c.h.b16 %v3309
    %v3401 = vunpack.c.l.b16 %v3310
    %v3402 = vunpack.c.h.b16 %v3310
    %v3403 = vunpack.c.l.b16 %v3311
    %v3404 = vunpack.c.h.b16 %v3311
    %v3405 = vunpack.c.l.b16 %v3312
    %v3406 = vunpack.c.h.b16 %v3312
    %v3407 = vunpack.c.l.b16 %v3313
    %v3408 = vunpack.c.h.b16 %v3313
    %v3409 = vunpack.c.l.b16 %v3314
    %v3410 = vunpack.c.h.b16 %v3314
    %v3411 = vunpack.c.l.b16 %v3315
    %v3412 = vunpack.c.h.b16 %v3315
    %v3413 = vunpack.c.l.b16 %v3316
    %v3414 = vunpack.c.h.b16 %v3316
    %v3415 = vunpack.c.l.b16 %v3317
    %v3416 = vunpack.c.h.b16 %v3317
    %v3417 = vunpack.c.l.b16 %v3318
    %v3418 = vunpack.c.h.b16 %v3318
    %v3419 = vunpack.c.l.b16 %v3319
    %v3420 = vunpack.c.h.b16 %v3319
    %v3421 = vunpack.c.l.b16 %v3320
    %v3422 = vunpack.c.h.b16 %v3320
    %v3423 = vunpack.c.l.b16 %v3321
    %v3424 = vunpack.c.h.b16 %v3321
    %v3425 = vunpack.c.l.b16 %v3322
    %v3426 = vunpack.c.h.b16 %v3322
    %v3427 = vunpack.c.l.b16 %v3323
    %v3428 = vunpack.c.h.b16 %v3323
    %v3429 = vunpack.c.l.b16 %v3324
    %v3430 = vunpack.c.h.b16 %v3324
    %v3431 = vunpack.c.l.b16 %v3325
    %v3432 = vunpack.c.h.b16 %v3325
    %v3433 = vunpack.c.l.b16 %v3326
    %v3434 = vunpack.c.h.b16 %v3326
    %v3435 = vunpack.c.l.b16 %v3327
    %v3436 = vunpack.c.h.b16 %v3327
    %v3437 = vpack.c.b16 %v3375, %v3373
    %v3438 = vpack.c.b16 %v3376, %v3374
    %v3439 = vpack.c.b16 %v3379, %v3377
    %v3440 = vpack.c.b16 %v3380, %v3378
    %v3441 = vpack.c.b16 %v3383, %v3381
    %v3442 = vpack.c.b16 %v3384, %v3382
    %v3443 = vpack.c.b16 %v3387, %v3385
    %v3444 = vpack.c.b16 %v3388, %v3386
    %v3445 = vpack.c.b16 %v3391, %v3389
    %v3446 = vpack.c.b16 %v3392, %v3390
    %v3447 = vpack.c.b16 %v3395, %v3393
    %v3448 = vpack.c.b16 %v3396, %v3394
    %v3449 = vpack.c.b16 %v3399, %v3397
    %v3450 = vpack.c.b16 %v3400, %v3398
    %v3451 = vpack.c.b16 %v3403, %v3401
    %v3452 = vpack.c.b16 %v3404, %v3402
    %v3453 = vpack.c.b16 %v3407, %v3405
    %v3454 = vpack.c.b16 %v3408, %v3406
    %v3455 = vpack.c.b16 %v3411, %v3409
    %v3456 = vpack.c.b16 %v3412, %v3410
    %v3457 = vpack.c.b16 %v3415, %v3413
    %v3458 = vpack.c.b16 %v3416, %v3414
    %v3459 = vpack.c.b16 %v3419, %v3417
    %v3460 = vpack.c.b16 %v3420, %v3418
    %v3461 = vpack.c.b16 %v3423, %v3421
    %v3462 = vpack.c.b16 %v3424, %v3422
    %v3463 = vpack.c.b16 %v3427, %v3425
    %v3464 = vpack.c.b16 %v3428, %v3426
    %v3465 = vpack.c.b16 %v3431, %v3429
    %v3466 = vpack.c.b16 %v3432, %v3430
    %v3467 = vpack.c.b16 %v3435, %v3433
    %v3468 = vpack.c.b16 %v3436, %v3434
    %3501 = vmatprep.subr.bf16.mxu0 %v3438
    %3502 = vmatpush1.bf16.msra.mxu0 %v3437
    %3503 = vmatprep.subr.bf16.mxu0 %v3440
    %3504 = vmatpush1.bf16.msra.mxu0 %v3439
    %3505 = vmatprep.subr.bf16.mxu0 %v3442
    %3506 = vmatpush1.bf16.msra.mxu0 %v3441
    %3507 = vmatprep.subr.bf16.mxu0 %v3444
    %3508 = vmatpush1.bf16.msra.mxu0 %v3443
    %3509 = vmatprep.subr.bf16.mxu0 %v3446
    %3510 = vmatpush1.bf16.msra.mxu0 %v3445
    %3511 = vmatprep.subr.bf16.mxu0 %v3448
    %3512 = vmatpush1.bf16.msra.mxu0 %v3447
    %3513 = vmatprep.subr.bf16.mxu0 %v3450
    %3514 = vmatpush1.bf16.msra.mxu0 %v3449
    %3515 = vmatprep.subr.bf16.mxu0 %v3452
    %3516 = vmatpush1.bf16.msra.mxu0 %v3451
    %3517 = vmatprep.subr.bf16.mxu0 %v3454
    %3518 = vmatpush1.bf16.msra.mxu0 %v3453
    %3519 = vmatprep.subr.bf16.mxu0 %v3456
    %3520 = vmatpush1.bf16.msra.mxu0 %v3455
    %3521 = vmatprep.subr.bf16.mxu0 %v3458
    %3522 = vmatpush1.bf16.msra.mxu0 %v3457
    %3523 = vmatprep.subr.bf16.mxu0 %v3460
    %3524 = vmatpush1.bf16.msra.mxu0 %v3459
    %3525 = vmatprep.subr.bf16.mxu0 %v3462
    %3526 = vmatpush1.bf16.msra.mxu0 %v3461
    %3527 = vmatprep.subr.bf16.mxu0 %v3464
    %3528 = vmatpush1.bf16.msra.mxu0 %v3463
    %3529 = vmatprep.subr.bf16.mxu0 %v3466
    %3530 = vmatpush1.bf16.msra.mxu0 %v3465
    %3531 = vmatprep.subr.bf16.mxu0 %v3468
    %3532 = vmatpush1.bf16.msra.mxu0 %v3467
    %3533 = vmatprep.mubr.bf16.mxu0 %v3294
    %3534 = vmatmul.mubr.bf16.gmra.mrb[0].mxu0 %v3293
    %v3535 = vpop.f32.mrb[0].mxu0
    %v3536 = vadd.f32 %v3334, %v3535
    %v3537 = vpop.f32.mrb[0].mxu0
    %v3538 = vadd.f32 %v3338, %v3537
    %v3539 = vpop.f32.mrb[0].mxu0
    %v3540 = vadd.f32 %v3334, %v3539
    %v3541 = vpop.f32.mrb[0].mxu0
    %v3542 = vadd.f32 %v3338, %v3541
    %3543 = vdwg.mxu0
    %v3544 = vadd.f32 %v3536, %v3035
    %v3545 = vadd.f32 %v3538, %v3036
    %v3546 = vadd.f32 %v3540, %v3037
    %v3547 = vadd.f32 %v3542, %v3038
    %s3548 = scalar_lea.vmem %s6, 5
    %v3549 = vld [vmem:[%s3548] ss:$8 sm:$0x3]
    %s3550 = scalar_lea.vmem %s6, 6
    %v3551 = vld [vmem:[%s3550] ss:$8 sm:$0x3]
    %v3552 = vadd.f32 %v3544, %v3545
    %3553 = vadd.xlane.f32.xlu0 %v3552
    %v3554 = vpop.xlane.xlu0 %3553
    %v3555 = vadd.f32 %v3546, %v3547
    %3556 = vadd.xlane.f32.xlu0 %v3555
    %v3557 = vpop.xlane.xlu0 %3556
    %v3558 = vmul.f32 %v3554, 0.005
    %v3559 = vmul.f32 %v3557, 0.005
    %v3560 = vsub.f32 %v3544, %v3558
    %v3561 = vsub.f32 %v3545, %v3558
    %v3562 = vsub.f32 %v3546, %v3559
    %v3563 = vsub.f32 %v3547, %v3559
    %v3564 = vmul.f32 %v3560, %v2963
    %v3565 = vmul.f32 %v3561, %v2964
    %v3566 = vmul.f32 %v3562, %v2963
    %v3567 = vmul.f32 %v3563, %v2964
    %v3568 = vmul.f32 %v3564, %v3564
    %v3569 = vmul.f32 %v3565, %v3565
    %v3570 = vmul.f32 %v3566, %v3566
    %v3571 = vmul.f32 %v3567, %v3567
    %v3572 = vadd.f32 %v3568, %v3569
    %3573 = vadd.xlane.f32.xlu0 %v3572
    %v3574 = vpop.xlane.xlu0 %3573
    %v3575 = vadd.f32 %v3570, %v3571
    %3576 = vadd.xlane.f32.xlu0 %v3575
    %v3577 = vpop.xlane.xlu0 %3576
    %v3578 = vmul.f32 %v3574, 0.005
    %v3579 = vmul.f32 %v3577, 0.005
    %v3580 = vadd.f32 %v3578, 1e-05
    %v3581 = vadd.f32 %v3579, 1e-05
    %v3582 = vrsqrt.pop %v3580
    %v3583 = vrsqrt.pop %v3581
    %v3584 = vmul.f32 %v3564, %v3582
    %v3585 = vmul.f32 %v3565, %v3582
    %v3586 = vmul.f32 %v3566, %v3583
    %v3587 = vmul.f32 %v3567, %v3583
    %v3589 = vlaneseq
    %v3590 = vshrl.u32 %v3589, 7
    %v3591 = vsub.s32 0, %v3590
    %v3592 = vrot.slane %v3549, %v3591
    %v3593 = vlaneseq
    %v3594 = vshrl.u32 %v3593, 7
    %v3595 = vsub.s32 1, %v3594
    %v3596 = vrot.slane %v3549, %v3595
    %v3599 = vmul.f32 %v3584, %v3592
    %v3600 = vmul.f32 %v3585, %v3596
    %v3601 = vmul.f32 %v3586, %v3592
    %v3602 = vmul.f32 %v3587, %v3596
    %v3604 = vlaneseq
    %v3605 = vshrl.u32 %v3604, 7
    %v3606 = vsub.s32 0, %v3605
    %v3607 = vrot.slane %v3551, %v3606
    %v3608 = vlaneseq
    %v3609 = vshrl.u32 %v3608, 7
    %v3610 = vsub.s32 1, %v3609
    %v3611 = vrot.slane %v3551, %v3610
    %v3614 = vadd.f32 %v3599, %v3607
    %v3615 = vadd.f32 %v3600, %v3611
    %v3616 = vadd.f32 %v3601, %v3607
    %v3617 = vadd.f32 %v3602, %v3611
    %3618 = vst [vmem:[#allocation9] sm:$0xff] %v3614
    %3619 = vst [vmem:[#allocation9 + $0x8] sm:$0xff] %v3615
    %3620 = vst [vmem:[#allocation9 + $0x10] sm:$0xff] %v3616
    %3621 = vst [vmem:[#allocation9 + $0x18] sm:$0xff] %v3617
    // Predicated region
    $region42: #{decode_layer_padded.1} parent=1 // pred_check
      _
    $region43: #{decode_layer_padded.1} parent=1 // pred_check_branch
      %3623 = sbr.rel (0) target = $region45
    $region44: #{decode_layer_padded.1} parent=1 // pred_region
      %s3625 = ssub.s32 512, 512
      %3626 = vsyncadd [#allocation5], %s3625
      %s3627 = sshll.u32 [#allocation9], 4
      %s3628 = int_to_ptr.vmem [resolvable:$true] %s3627
      %3633 = dma.vmem_to_hbm [thread:$0]  %s3628, 512, %s7, [#allocation5], 256, 256, 16
    $region45: #{decode_layer_padded.1} parent=1 // pred_fallthru
      _
    // Predicated region
    $region46: #{decode_layer_padded.1} parent=1 // pred_check
      _
    $region47: #{decode_layer_padded.1} parent=1 // pred_check_branch
      %3635 = sbr.rel (0) target = $region49
    $region48: #{decode_layer_padded.1} parent=1 // pred_region
      %3636 = dma.done [#allocation5], 512
    $region49: #{decode_layer_padded.1} parent=1 // pred_fallthru
      _
    %3637 = vsyncpa [#allocation4], 1
    %3638 = vsyncpa [#allocation7], 1
    %3639 = vsyncpa [#allocation5], 1

</llo_original>
